<compile_context>
chip_gen: v7x
topology: tpu7x:2x2x1
jax: 0.10.0
libtpu: 0.0.40
codegen_flags: <defaults>
</compile_context>

<pallas_src>
import math

import jax
import jax.numpy as jnp
from jax import lax
from jax.experimental import pallas as pl
from jax.experimental.pallas import tpu as pltpu


def _round_up(n, m):
    return ((n + m - 1) // m) * m


def _positional_encoding(length, odim):
    """espnet PositionalEncoding table (eval mode, no dropout)."""
    pos = jnp.arange(length, dtype=jnp.float32)[:, None]
    div = jnp.exp(jnp.arange(0, odim, 2, dtype=jnp.float32)
                  * (-math.log(10000.0) / odim))
    pe = jnp.zeros((length, odim), jnp.float32)
    pe = pe.at[:, 0::2].set(jnp.sin(pos * div))
    pe = pe.at[:, 1::2].set(jnp.cos(pos * div))
    return pe


# ---------------------------------------------------------------------------
# Kernel
# ---------------------------------------------------------------------------
def _make_kernel(C, Tb, T2t, F1, F2, scale):
    """One (batch, time-tile) grid step.

    Layouts (time on sublanes, padded channels C on lanes):
      xs_ref : (F1*Tb, 9)   f32  conv1 im2col, row = f*Tb + t1, col = kt*3 + kf
      h1_ref : (F1*Tb+8, C) bf16 conv1 output, frequency-major row blocks
      h2_ref : (F2*Tb, C)   f32  conv2 accumulator, frequency-major row blocks
      o_ref  : (T2t, C)     f32  output tile
    """
    M1 = F1 * Tb
    M2 = F2 * Tb

    def kernel(xs_ref, w1_ref, b1_ref, w2_ref, b2_ref, w3_ref, b3_ref,
               pe_ref, o_ref, h1_ref, h2_ref):
        # ---- conv1 (1 -> C channels, 3x3, stride 2): one MXU dot ------------
        h1 = jnp.dot(xs_ref[...], w1_ref[...],
                     preferred_element_type=jnp.float32)
        h1 = jnp.maximum(h1 + b1_ref[...], 0.0)
        h1_ref[pl.ds(0, M1), :] = h1.astype(jnp.bfloat16)
        # guard rows only feed output rows that are sliced off afterwards
        h1_ref[pl.ds(M1, 8), :] = jnp.zeros((8, C), jnp.bfloat16)

        # ---- conv2 (C->C, 3x3, stride 1): 9 dots with M = F2*Tb -------------
        # bias folded into the accumulator init
        h2_ref[...] = jnp.broadcast_to(b2_ref[...], (M2, C))
        for kt in range(3):
            for kf in range(3):
                lhs = h1_ref[pl.ds(kf * Tb + kt, M2), :]      # lane-aligned slab
                h2_ref[...] += jnp.dot(lhs, w2_ref[kt * 3 + kf],
                                       preferred_element_type=jnp.float32)

        # ---- Linear over output frequencies, accumulated into o_ref ---------
        o_ref[...] = jnp.broadcast_to(b3_ref[...], (T2t, C))

        def fo_body(fo, carry):
            off = pl.multiple_of(fo * Tb, 8)
            lhs = jnp.maximum(h2_ref[pl.ds(off, T2t), :], 0.0)
            lhs = lhs.astype(jnp.bfloat16)
            o_ref[...] += jnp.dot(lhs, w3_ref[fo],
                                  preferred_element_type=jnp.float32)
            return carry

        # TODO(synk): add unroll=2..4 once verified on the target jax version.
        lax.fori_loop(0, F2, fo_body, 0)

        # ---- scale + positional encoding (dropout = identity in eval) -------
        t_off = pl.multiple_of(pl.program_id(1) * T2t, 8)
        o_ref[...] = o_ref[...] * scale + pe_ref[pl.ds(t_off, T2t), :]

    return kernel


# ---------------------------------------------------------------------------
# pallas_call builder
# ---------------------------------------------------------------------------
def _vmem_limit_bytes(F1, F2, Tb, T2t, C, NT2, single_buffer):
    M1, M2 = F1 * Tb, F2 * Tb
    wbuf = 1 if single_buffer else 2
    need = 0
    need += 2 * (M1 * 9 * 4)                      # xs (double-buffered)
    need += 2 * (T2t * C * 4)                     # output tile (double-buffered)
    need += wbuf * (9 * C * 4 + 3 * C * 4)        # conv1 weights + biases
    need += wbuf * (9 * C * C * 2)                # conv2 weights (bf16)
    need += wbuf * (F2 * C * C * 2)               # linear weights (bf16)
    need += wbuf * (NT2 * C * 4)                  # positional encoding
    need += (M1 + 8) * C * 2 + M2 * C * 4         # scratches
    need += (M1 + M2) * C * 4                     # transient f32 dot results
    limit = int(need * 1.3) + (2 << 20)
    try:                                          # cap per generation (v7x: 64 MiB)
        cap = int(0.9 * pltpu.get_tpu_info().vmem_capacity_bytes)
    except Exception:
        cap = 64 * 2 ** 20
    return max(16 * 2 ** 20, min(limit, cap))


def _build_call(B, nt, F1, F2, Tb, T2t, C, NT2, scale, single_buffer):
    kernel = _make_kernel(C, Tb, T2t, F1, F2, scale)
    M1, M2 = F1 * Tb, F2 * Tb

    def inv_spec(shape):
        nd = len(shape)
        idx = lambda b, t, _nd=nd: (0,) * _nd
        if single_buffer:
            # grid-invariant operand -> no pipelining / no buffer duplication
            return pl.BlockSpec(shape, idx, pipeline_mode=pl.Buffered(1))
        return pl.BlockSpec(shape, idx)

    return pl.pallas_call(
        kernel,
        out_shape=jax.ShapeDtypeStruct((B, NT2, C), jnp.float32),
        grid=(B, nt),
        in_specs=[
            pl.BlockSpec((None, None, M1, 9), lambda b, t: (b, t, 0, 0)),  # xs
            inv_spec((9, C)),                                              # w1
            inv_spec((1, C)),                                              # b1
            inv_spec((9, C, C)),                                           # w2
            inv_spec((1, C)),                                              # b2
            inv_spec((F2, C, C)),                                          # w3
            inv_spec((1, C)),                                              # b3
            inv_spec((NT2, C)),                                            # pe
        ],
        out_specs=pl.BlockSpec((None, T2t, C), lambda b, t: (b, t, 0)),
        scratch_shapes=[pltpu.VMEM((M1 + 8, C), jnp.bfloat16),
                        pltpu.VMEM((M2, C), jnp.float32)],
        compiler_params=pltpu.CompilerParams(
            dimension_semantics=("parallel", "parallel"),
            vmem_limit_bytes=_vmem_limit_bytes(F1, F2, Tb, T2t, C, NT2,
                                               single_buffer)),
    )


# ---------------------------------------------------------------------------
# One-time parameter preparation (hoisted out of the per-call wrapper)
# ---------------------------------------------------------------------------
def prepare_conv2d_subsampling2(params, idim, odim, max_positions=1024):
    if odim % 2 != 0:
        raise ValueError("PositionalEncoding requires an even odim")
    F1 = (idim - 1) // 2                 # frequency bins after conv1
    F2 = F1 - 2                          # frequency bins after conv2
    if F2 < 1:
        raise ValueError("idim too small for Conv2dSubsampling2")
    C = _round_up(odim, 128)             # padded lane (channel) count
    dc = C - odim

    w1 = params["w1"]                                             # (odim,1,3,3)
    w1k = jnp.transpose(w1[:, 0], (1, 2, 0)).reshape(9, odim)     # row = kt*3+kf
    w1k = jnp.pad(w1k, ((0, 0), (0, dc))).astype(jnp.float32)

    b1 = jnp.pad(params["b1"].reshape(1, odim), ((0, 0), (0, dc))).astype(jnp.float32)
    b2 = jnp.pad(params["b2"].reshape(1, odim), ((0, 0), (0, dc))).astype(jnp.float32)
    b3 = jnp.pad(params["b3"].reshape(1, odim), ((0, 0), (0, dc))).astype(jnp.float32)

    w2 = jnp.transpose(params["w2"], (2, 3, 1, 0)).reshape(9, odim, odim)  # (k,ci,co)
    w2k = jnp.pad(w2, ((0, 0), (0, dc), (0, dc))).astype(jnp.bfloat16)

    w3 = params["w3"].reshape(odim, odim, F2)                     # (co, ci, f)
    w3k = jnp.transpose(w3, (2, 1, 0))                            # (f, ci, co)
    w3k = jnp.pad(w3k, ((0, 0), (0, dc), (0, dc))).astype(jnp.bfloat16)

    pe = jnp.pad(_positional_encoding(max_positions, odim), ((0, 0), (0, dc)))

    return dict(idim=idim, odim=odim, F1=F1, F2=F2, C=C,
                w1=w1k, b1=b1, w2=w2k, b2=b2, w3=w3k, b3=b3, pe=pe)


# ---------------------------------------------------------------------------
# Forward
# ---------------------------------------------------------------------------
def _conv1_im2col(x, F1, Tb, T2t, nt):
    """xs[b, t, f*Tb + tau, kt*3 + kf] = x[b, 2*(t*T2t + tau) + kt, 2*f + kf].

    Pure layout plumbing (stride-2 gather + per-tile halo duplication) done
    once in XLA; keeps every in-kernel access lane-dense and tile-local.
    """
    B, T, _ = x.shape
    t_need = 2 * ((nt - 1) * T2t + Tb - 1) + 3
    if t_need > T:
        x = jnp.pad(x, ((0, 0), (0, t_need - T), (0, 0)))
    tt = jnp.arange(nt)
    tau = jnp.arange(Tb)
    kt = jnp.arange(3)
    f = jnp.arange(F1)
    kf = jnp.arange(3)
    ti = 2 * (tt[:, None, None] * T2t + tau[None, :, None]) + kt[None, None, :]
    fi = 2 * f[:, None] + kf[None, :]
    xs = x[:, ti[:, None, :, :, None], fi[None, :, None, None, :]]
    return xs.reshape(B, nt, F1 * Tb, 9).astype(jnp.float32)


def conv2d_subsampling2(x, x_mask, prep, *, t2_tile=128):
    """x: (B, T, idim) f32, x_mask: (B, 1, T) bool or None. Returns (y, mask)."""
    B, T, idim = x.shape
    if idim != prep["idim"]:
        raise ValueError("idim mismatch with prepared parameters")
    odim, F1, F2, C = prep["odim"], prep["F1"], prep["F2"], prep["C"]
    if T < 7 or idim < 7:
        raise ValueError("Conv2dSubsampling2 requires T >= 7 and idim >= 7")

    T1 = (T - 3) // 2 + 1                 # time after conv1 (stride 2, k=3)
    T2 = T1 - 2                           # time after conv2 (stride 1, k=3)

    T2t = min(_round_up(t2_tile, 8), _round_up(T2, 8))    # output rows / tile
    nt = pl.cdiv(T2, T2t)                                  # time-tile count
    NT2 = nt * T2t
    Tb = T2t + 8                          # per-frequency row block (>= T2t + 2)

    xs = _conv1_im2col(x, F1, Tb, T2t, nt)

    pe = prep["pe"]
    if pe.shape[0] < NT2:                 # extend_pe fallback
        pe = jnp.pad(_positional_encoding(NT2, odim), ((0, 0), (0, C - odim)))
    else:
        pe = pe[:NT2]

    scale = math.sqrt(odim)
    args = (xs, prep["w1"], prep["b1"], prep["w2"], prep["b2"],
            prep["w3"], prep["b3"], pe)

    def run(single_buffer):
        call = _build_call(B, nt, F1, F2, Tb, T2t, C, NT2, scale, single_buffer)
        return jax.block_until_ready(call(*args))

    try:
        y_p = run(True)        # weights / PE single-buffered (grid-invariant)
    except Exception:
        y_p = run(False)       # fallback: default double-buffering

    y = y_p[:, :T2, :odim]
    if x_mask is None:
        return y, None
    return y, x_mask[:, :, :-2:2][:, :, :-2:1]


# ---------------------------------------------------------------------------
# Pure-JAX references for validation
# ---------------------------------------------------------------------------
def _ref_f32(x, params, odim):
    """Full-f32 (HIGHEST precision) reference of the PyTorch forward."""
    hp = lax.Precision.HIGHEST
    xi = x[:, None, :, :]
    h = lax.conv_general_dilated(xi, params["w1"], (2, 2), "VALID",
                                 dimension_numbers=("NCHW", "OIHW", "NCHW"),
                                 precision=hp)
    h = jax.nn.relu(h + params["b1"][None, :, None, None])
    h = lax.conv_general_dilated(h, params["w2"], (1, 1), "VALID",
                                 dimension_numbers=("NCHW", "OIHW", "NCHW"),
                                 precision=hp)
    h = jax.nn.relu(h + params["b2"][None, :, None, None])
    B, Cc, T2, F2 = h.shape
    flat = jnp.transpose(h, (0, 2, 1, 3)).reshape(B, T2, Cc * F2)
    y = jnp.einsum("btk,ok->bto", flat, params["w3"], precision=hp)
    y = y + params["b3"]
    pe = _positional_encoding(T2, odim)
    return y * math.sqrt(odim) + pe[None]


def _ref_mirrored(x, params, odim):
    """Reference mirroring the kernel's precision recipe: f32 conv1, bf16
    operand / f32-accumulate matmuls for conv2 and the Linear."""
    hp = lax.Precision.HIGHEST
    xi = x[:, None, :, :]
    h = lax.conv_general_dilated(xi, params["w1"], (2, 2), "VALID",
                                 dimension_numbers=("NCHW", "OIHW", "NCHW"),
                                 precision=hp)
    h = jax.nn.relu(h + params["b1"][None, :, None, None]).astype(jnp.bfloat16)
    h = lax.conv_general_dilated(h, params["w2"].astype(jnp.bfloat16), (1, 1),
                                 "VALID",
                                 dimension_numbers=("NCHW", "OIHW", "NCHW"),
                                 preferred_element_type=jnp.float32)
    h = jax.nn.relu(h + params["b2"][None, :, None, None])
    B, Cc, T2, F2 = h.shape
    flat = jnp.transpose(h, (0, 2, 1, 3)).reshape(B, T2, Cc * F2)
    y = jnp.einsum("btk,ok->bto", flat.astype(jnp.bfloat16),
                   params["w3"].astype(jnp.bfloat16),
                   preferred_element_type=jnp.float32)
    y = y + params["b3"]
    pe = _positional_encoding(T2, odim)
    return y * math.sqrt(odim) + pe[None]


if __name__ == "__main__":
    key = jax.random.PRNGKey(0)
    B, T, idim, odim = 2, 16, 16, 32
    F2 = (idim - 1) // 2 - 2
    T2 = ((T - 3) // 2 + 1) - 2

    ks = jax.random.split(key, 8)
    x = jax.random.normal(ks[0], (B, T, idim), jnp.float32)
    x_mask = jnp.ones((B, 1, T), jnp.bool_)
    params = {
        "w1": 0.1 * jax.random.normal(ks[1], (odim, 1, 3, 3), jnp.float32),
        "b1": 0.1 * jax.random.normal(ks[2], (odim,), jnp.float32),
        "w2": 0.1 * jax.random.normal(ks[3], (odim, odim, 3, 3), jnp.float32),
        "b2": 0.1 * jax.random.normal(ks[4], (odim,), jnp.float32),
        "w3": 0.1 * jax.random.normal(ks[5], (odim, odim * F2), jnp.float32),
        "b3": 0.1 * jax.random.normal(ks[6], (odim,), jnp.float32),
    }

    prep = prepare_conv2d_subsampling2(params, idim, odim, max_positions=256)

    # --- single time tile ----------------------------------------------------
    y, mask = conv2d_subsampling2(x, x_mask, prep)
    y = jax.block_until_ready(y)
    assert y.shape == (B, T2, odim), y.shape
    assert mask.shape == (B, 1, T2), mask.shape

    y_mirror = _ref_mirrored(x, params, odim)
    err_m = float(jnp.max(jnp.abs(y - y_mirror)))
    assert jnp.allclose(y, y_mirror, atol=5e-2, rtol=5e-2), err_m

    y_f32 = _ref_f32(x, params, odim)
    err_f = float(jnp.max(jnp.abs(y - y_f32)))
    assert jnp.allclose(y, y_f32, atol=2e-1, rtol=1e-1), err_f

    # --- multi time-tile path (exercises the halo'd time-tile grid axis) -----
    T_long = 80
    T2_long = ((T_long - 3) // 2 + 1) - 2
    x_long = jax.random.normal(ks[7], (1, T_long, idim), jnp.float32)
    mask_long = jnp.ones((1, 1, T_long), jnp.bool_)
    y_l, m_l = conv2d_subsampling2(x_long, mask_long, prep, t2_tile=16)
    y_l = jax.block_until_ready(y_l)
    assert y_l.shape == (1, T2_long, odim), y_l.shape
    assert m_l.shape == (1, 1, T2_long), m_l.shape
    y_l_ref = _ref_mirrored(x_long, params, odim)
    err_l = float(jnp.max(jnp.abs(y_l - y_l_ref)))
    assert jnp.allclose(y_l, y_l_ref, atol=5e-2, rtol=5e-2), err_l

    print("KERNEL_OK")
</pallas_src>

<mosaic_0001>
module attributes {stable_mosaic.version = 11 : i64} {
  func.func @kernel(%arg0: i32, %arg1: i32, %arg2: memref<1x1x112x9xf32, #tpu.memory_space<vmem>>, %arg3: memref<9x128xf32, #tpu.memory_space<vmem>>, %arg4: memref<1x128xf32, #tpu.memory_space<vmem>>, %arg5: memref<9x128x128xbf16, #tpu.memory_space<vmem>>, %arg6: memref<1x128xf32, #tpu.memory_space<vmem>>, %arg7: memref<5x128x128xbf16, #tpu.memory_space<vmem>>, %arg8: memref<1x128xf32, #tpu.memory_space<vmem>>, %arg9: memref<8x128xf32, #tpu.memory_space<vmem>>, %arg10: memref<1x8x128xf32, #tpu.memory_space<vmem>>, %arg11: memref<120x128xbf16, #tpu.memory_space<vmem>>, %arg12: memref<80x128xf32, #tpu.memory_space<vmem>>) attributes {dimension_semantics = [#tpu.dimension_semantics<parallel>, #tpu.dimension_semantics<parallel>], iteration_bounds = array<i64: 2, 1>, scalar_prefetch = 0 : i64, scratch_operands = 2 : i64, tpu.core_type = #tpu.core_type<tc>, window_params = [{transform_indices = @transform_0, window_bounds = array<i64: 1, 1, 112, 9>}, {pipeline_mode = #tpu.pipeline_mode<synchronous>, transform_indices = @transform_1, window_bounds = array<i64: 9, 128>}, {pipeline_mode = #tpu.pipeline_mode<synchronous>, transform_indices = @transform_2, window_bounds = array<i64: 1, 128>}, {pipeline_mode = #tpu.pipeline_mode<synchronous>, transform_indices = @transform_3, window_bounds = array<i64: 9, 128, 128>}, {pipeline_mode = #tpu.pipeline_mode<synchronous>, transform_indices = @transform_4, window_bounds = array<i64: 1, 128>}, {pipeline_mode = #tpu.pipeline_mode<synchronous>, transform_indices = @transform_5, window_bounds = array<i64: 5, 128, 128>}, {pipeline_mode = #tpu.pipeline_mode<synchronous>, transform_indices = @transform_6, window_bounds = array<i64: 1, 128>}, {pipeline_mode = #tpu.pipeline_mode<synchronous>, transform_indices = @transform_7, window_bounds = array<i64: 8, 128>}, {transform_indices = @transform_8, window_bounds = array<i64: 1, 8, 128>}]} {
    %c0 = arith.constant 0 : index
    %c0_0 = arith.constant 0 : index
    %c0_1 = arith.constant 0 : index
    %c0_2 = arith.constant 0 : index
    %0 = vector.load %arg2[%c0, %c0_0, %c0_1, %c0_2] : memref<1x1x112x9xf32, #tpu.memory_space<vmem>>, vector<1x1x112x9xf32>
    %1 = vector.shape_cast %0 : vector<1x1x112x9xf32> to vector<112x9xf32>
    %c0_3 = arith.constant 0 : index
    %c0_4 = arith.constant 0 : index
    %2 = vector.load %arg3[%c0_3, %c0_4] : memref<9x128xf32, #tpu.memory_space<vmem>>, vector<9x128xf32>
    %cst = arith.constant dense<0.000000e+00> : vector<112x128xf32>
    %3 = tpu.matmul %1, %2, %cst {dimension_numbers = #tpu.dot_dimension_numbers<[1], [0], [0], [1], [0, 0, 1, 1], [], []>} : vector<112x9xf32>, vector<9x128xf32>, vector<112x128xf32> -> vector<112x128xf32>
    %c0_5 = arith.constant 0 : index
    %c0_6 = arith.constant 0 : index
    %4 = vector.load %arg4[%c0_5, %c0_6] : memref<1x128xf32, #tpu.memory_space<vmem>>, vector<1x128xf32>
    %5 = vector.broadcast %4 : vector<1x128xf32> to vector<112x128xf32>
    %6 = arith.addf %3, %5 : vector<112x128xf32>
    %cst_7 = arith.constant 0.000000e+00 : f32
    %7 = vector.broadcast %cst_7 : f32 to vector<112x128xf32>
    %8 = arith.maximumf %6, %7 : vector<112x128xf32>
    %9 = arith.truncf %8 : vector<112x128xf32> to vector<112x128xbf16>
    %c0_8 = arith.constant 0 : index
    %c0_9 = arith.constant 0 : index
    %10 = vector.load %arg11[%c0_8, %c0_9] : memref<120x128xbf16, #tpu.memory_space<vmem>>, vector<112x128xbf16>
    tpu.vector_store %arg11[%c0_8, %c0_9], %9 {strides = array<i32>} : memref<120x128xbf16, #tpu.memory_space<vmem>>, vector<112x128xbf16>,
    %cst_10 = arith.constant 0.000000e+00 : bf16
    %11 = vector.broadcast %cst_10 : bf16 to vector<8x128xbf16>
    %c112 = arith.constant 112 : index
    %c0_11 = arith.constant 0 : index
    %12 = vector.load %arg11[%c112, %c0_11] : memref<120x128xbf16, #tpu.memory_space<vmem>>, vector<8x128xbf16>
    tpu.vector_store %arg11[%c112, %c0_11], %11 {strides = array<i32>} : memref<120x128xbf16, #tpu.memory_space<vmem>>, vector<8x128xbf16>,
    %c0_12 = arith.constant 0 : index
    %c0_13 = arith.constant 0 : index
    %13 = vector.load %arg6[%c0_12, %c0_13] : memref<1x128xf32, #tpu.memory_space<vmem>>, vector<1x128xf32>
    %14 = vector.shape_cast %13 : vector<1x128xf32> to vector<1x128xf32>
    %15 = vector.broadcast %14 : vector<1x128xf32> to vector<80x128xf32>
    %c0_14 = arith.constant 0 : index
    %c0_15 = arith.constant 0 : index
    %16 = vector.load %arg12[%c0_14, %c0_15] : memref<80x128xf32, #tpu.memory_space<vmem>>, vector<80x128xf32>
    tpu.vector_store %arg12[%c0_14, %c0_15], %15 {strides = array<i32>} : memref<80x128xf32, #tpu.memory_space<vmem>>, vector<80x128xf32>,
    %c0_16 = arith.constant 0 : index
    %c0_17 = arith.constant 0 : index
    %17 = vector.load %arg11[%c0_16, %c0_17] : memref<120x128xbf16, #tpu.memory_space<vmem>>, vector<80x128xbf16>
    %c0_18 = arith.constant 0 : index
    %c0_19 = arith.constant 0 : index
    %18 = vector.load %arg12[%c0_18, %c0_19] : memref<80x128xf32, #tpu.memory_space<vmem>>, vector<80x128xf32>
    %c0_20 = arith.constant 0 : index
    %c0_21 = arith.constant 0 : index
    %c0_22 = arith.constant 0 : index
    %19 = vector.load %arg5[%c0_20, %c0_21, %c0_22] : memref<9x128x128xbf16, #tpu.memory_space<vmem>>, vector<1x128x128xbf16>
    %20 = vector.shape_cast %19 : vector<1x128x128xbf16> to vector<128x128xbf16>
    %cst_23 = arith.constant dense<0.000000e+00> : vector<80x128xf32>
    %21 = tpu.matmul %17, %20, %cst_23 {dimension_numbers = #tpu.dot_dimension_numbers<[1], [0], [0], [1], [0, 0, 1, 1], [], []>} : vector<80x128xbf16>, vector<128x128xbf16>, vector<80x128xf32> -> vector<80x128xf32>
    %22 = arith.addf %18, %21 : vector<80x128xf32>
    %c0_24 = arith.constant 0 : index
    %c0_25 = arith.constant 0 : index
    %23 = vector.load %arg12[%c0_24, %c0_25] : memref<80x128xf32, #tpu.memory_space<vmem>>, vector<80x128xf32>
    tpu.vector_store %arg12[%c0_24, %c0_25], %22 {strides = array<i32>} : memref<80x128xf32, #tpu.memory_space<vmem>>, vector<80x128xf32>,
    %c16 = arith.constant 16 : index
    %c0_26 = arith.constant 0 : index
    %24 = vector.load %arg11[%c16, %c0_26] : memref<120x128xbf16, #tpu.memory_space<vmem>>, vector<80x128xbf16>
    %c0_27 = arith.constant 0 : index
    %c0_28 = arith.constant 0 : index
    %25 = vector.load %arg12[%c0_27, %c0_28] : memref<80x128xf32, #tpu.memory_space<vmem>>, vector<80x128xf32>
    %c1 = arith.constant 1 : index
    %c0_29 = arith.constant 0 : index
    %c0_30 = arith.constant 0 : index
    %26 = vector.load %arg5[%c1, %c0_29, %c0_30] : memref<9x128x128xbf16, #tpu.memory_space<vmem>>, vector<1x128x128xbf16>
    %27 = vector.shape_cast %26 : vector<1x128x128xbf16> to vector<128x128xbf16>
    %cst_31 = arith.constant dense<0.000000e+00> : vector<80x128xf32>
    %28 = tpu.matmul %24, %27, %cst_31 {dimension_numbers = #tpu.dot_dimension_numbers<[1], [0], [0], [1], [0, 0, 1, 1], [], []>} : vector<80x128xbf16>, vector<128x128xbf16>, vector<80x128xf32> -> vector<80x128xf32>
    %29 = arith.addf %25, %28 : vector<80x128xf32>
    %c0_32 = arith.constant 0 : index
    %c0_33 = arith.constant 0 : index
    %30 = vector.load %arg12[%c0_32, %c0_33] : memref<80x128xf32, #tpu.memory_space<vmem>>, vector<80x128xf32>
    tpu.vector_store %arg12[%c0_32, %c0_33], %29 {strides = array<i32>} : memref<80x128xf32, #tpu.memory_space<vmem>>, vector<80x128xf32>,
    %c32 = arith.constant 32 : index
    %c0_34 = arith.constant 0 : index
    %31 = vector.load %arg11[%c32, %c0_34] : memref<120x128xbf16, #tpu.memory_space<vmem>>, vector<80x128xbf16>
    %c0_35 = arith.constant 0 : index
    %c0_36 = arith.constant 0 : index
    %32 = vector.load %arg12[%c0_35, %c0_36] : memref<80x128xf32, #tpu.memory_space<vmem>>, vector<80x128xf32>
    %c2 = arith.constant 2 : index
    %c0_37 = arith.constant 0 : index
    %c0_38 = arith.constant 0 : index
    %33 = vector.load %arg5[%c2, %c0_37, %c0_38] : memref<9x128x128xbf16, #tpu.memory_space<vmem>>, vector<1x128x128xbf16>
    %34 = vector.shape_cast %33 : vector<1x128x128xbf16> to vector<128x128xbf16>
    %cst_39 = arith.constant dense<0.000000e+00> : vector<80x128xf32>
    %35 = tpu.matmul %31, %34, %cst_39 {dimension_numbers = #tpu.dot_dimension_numbers<[1], [0], [0], [1], [0, 0, 1, 1], [], []>} : vector<80x128xbf16>, vector<128x128xbf16>, vector<80x128xf32> -> vector<80x128xf32>
    %36 = arith.addf %32, %35 : vector<80x128xf32>
    %c0_40 = arith.constant 0 : index
    %c0_41 = arith.constant 0 : index
    %37 = vector.load %arg12[%c0_40, %c0_41] : memref<80x128xf32, #tpu.memory_space<vmem>>, vector<80x128xf32>
    tpu.vector_store %arg12[%c0_40, %c0_41], %36 {strides = array<i32>} : memref<80x128xf32, #tpu.memory_space<vmem>>, vector<80x128xf32>,
    %c1_42 = arith.constant 1 : index
    %c0_43 = arith.constant 0 : index
    %38 = vector.load %arg11[%c1_42, %c0_43] : memref<120x128xbf16, #tpu.memory_space<vmem>>, vector<80x128xbf16>
    %c0_44 = arith.constant 0 : index
    %c0_45 = arith.constant 0 : index
    %39 = vector.load %arg12[%c0_44, %c0_45] : memref<80x128xf32, #tpu.memory_space<vmem>>, vector<80x128xf32>
    %c3 = arith.constant 3 : index
    %c0_46 = arith.constant 0 : index
    %c0_47 = arith.constant 0 : index
    %40 = vector.load %arg5[%c3, %c0_46, %c0_47] : memref<9x128x128xbf16, #tpu.memory_space<vmem>>, vector<1x128x128xbf16>
    %41 = vector.shape_cast %40 : vector<1x128x128xbf16> to vector<128x128xbf16>
    %cst_48 = arith.constant dense<0.000000e+00> : vector<80x128xf32>
    %42 = tpu.matmul %38, %41, %cst_48 {dimension_numbers = #tpu.dot_dimension_numbers<[1], [0], [0], [1], [0, 0, 1, 1], [], []>} : vector<80x128xbf16>, vector<128x128xbf16>, vector<80x128xf32> -> vector<80x128xf32>
    %43 = arith.addf %39, %42 : vector<80x128xf32>
    %c0_49 = arith.constant 0 : index
    %c0_50 = arith.constant 0 : index
    %44 = vector.load %arg12[%c0_49, %c0_50] : memref<80x128xf32, #tpu.memory_space<vmem>>, vector<80x128xf32>
    tpu.vector_store %arg12[%c0_49, %c0_50], %43 {strides = array<i32>} : memref<80x128xf32, #tpu.memory_space<vmem>>, vector<80x128xf32>,
    %c17 = arith.constant 17 : index
    %c0_51 = arith.constant 0 : index
    %45 = vector.load %arg11[%c17, %c0_51] : memref<120x128xbf16, #tpu.memory_space<vmem>>, vector<80x128xbf16>
    %c0_52 = arith.constant 0 : index
    %c0_53 = arith.constant 0 : index
    %46 = vector.load %arg12[%c0_52, %c0_53] : memref<80x128xf32, #tpu.memory_space<vmem>>, vector<80x128xf32>
    %c4 = arith.constant 4 : index
    %c0_54 = arith.constant 0 : index
    %c0_55 = arith.constant 0 : index
    %47 = vector.load %arg5[%c4, %c0_54, %c0_55] : memref<9x128x128xbf16, #tpu.memory_space<vmem>>, vector<1x128x128xbf16>
    %48 = vector.shape_cast %47 : vector<1x128x128xbf16> to vector<128x128xbf16>
    %cst_56 = arith.constant dense<0.000000e+00> : vector<80x128xf32>
    %49 = tpu.matmul %45, %48, %cst_56 {dimension_numbers = #tpu.dot_dimension_numbers<[1], [0], [0], [1], [0, 0, 1, 1], [], []>} : vector<80x128xbf16>, vector<128x128xbf16>, vector<80x128xf32> -> vector<80x128xf32>
    %50 = arith.addf %46, %49 : vector<80x128xf32>
    %c0_57 = arith.constant 0 : index
    %c0_58 = arith.constant 0 : index
    %51 = vector.load %arg12[%c0_57, %c0_58] : memref<80x128xf32, #tpu.memory_space<vmem>>, vector<80x128xf32>
    tpu.vector_store %arg12[%c0_57, %c0_58], %50 {strides = array<i32>} : memref<80x128xf32, #tpu.memory_space<vmem>>, vector<80x128xf32>,
    %c33 = arith.constant 33 : index
    %c0_59 = arith.constant 0 : index
    %52 = vector.load %arg11[%c33, %c0_59] : memref<120x128xbf16, #tpu.memory_space<vmem>>, vector<80x128xbf16>
    %c0_60 = arith.constant 0 : index
    %c0_61 = arith.constant 0 : index
    %53 = vector.load %arg12[%c0_60, %c0_61] : memref<80x128xf32, #tpu.memory_space<vmem>>, vector<80x128xf32>
    %c5 = arith.constant 5 : index
    %c0_62 = arith.constant 0 : index
    %c0_63 = arith.constant 0 : index
    %54 = vector.load %arg5[%c5, %c0_62, %c0_63] : memref<9x128x128xbf16, #tpu.memory_space<vmem>>, vector<1x128x128xbf16>
    %55 = vector.shape_cast %54 : vector<1x128x128xbf16> to vector<128x128xbf16>
    %cst_64 = arith.constant dense<0.000000e+00> : vector<80x128xf32>
    %56 = tpu.matmul %52, %55, %cst_64 {dimension_numbers = #tpu.dot_dimension_numbers<[1], [0], [0], [1], [0, 0, 1, 1], [], []>} : vector<80x128xbf16>, vector<128x128xbf16>, vector<80x128xf32> -> vector<80x128xf32>
    %57 = arith.addf %53, %56 : vector<80x128xf32>
    %c0_65 = arith.constant 0 : index
    %c0_66 = arith.constant 0 : index
    %58 = vector.load %arg12[%c0_65, %c0_66] : memref<80x128xf32, #tpu.memory_space<vmem>>, vector<80x128xf32>
    tpu.vector_store %arg12[%c0_65, %c0_66], %57 {strides = array<i32>} : memref<80x128xf32, #tpu.memory_space<vmem>>, vector<80x128xf32>,
    %c2_67 = arith.constant 2 : index
    %c0_68 = arith.constant 0 : index
    %59 = vector.load %arg11[%c2_67, %c0_68] : memref<120x128xbf16, #tpu.memory_space<vmem>>, vector<80x128xbf16>
    %c0_69 = arith.constant 0 : index
    %c0_70 = arith.constant 0 : index
    %60 = vector.load %arg12[%c0_69, %c0_70] : memref<80x128xf32, #tpu.memory_space<vmem>>, vector<80x128xf32>
    %c6 = arith.constant 6 : index
    %c0_71 = arith.constant 0 : index
    %c0_72 = arith.constant 0 : index
    %61 = vector.load %arg5[%c6, %c0_71, %c0_72] : memref<9x128x128xbf16, #tpu.memory_space<vmem>>, vector<1x128x128xbf16>
    %62 = vector.shape_cast %61 : vector<1x128x128xbf16> to vector<128x128xbf16>
    %cst_73 = arith.constant dense<0.000000e+00> : vector<80x128xf32>
    %63 = tpu.matmul %59, %62, %cst_73 {dimension_numbers = #tpu.dot_dimension_numbers<[1], [0], [0], [1], [0, 0, 1, 1], [], []>} : vector<80x128xbf16>, vector<128x128xbf16>, vector<80x128xf32> -> vector<80x128xf32>
    %64 = arith.addf %60, %63 : vector<80x128xf32>
    %c0_74 = arith.constant 0 : index
    %c0_75 = arith.constant 0 : index
    %65 = vector.load %arg12[%c0_74, %c0_75] : memref<80x128xf32, #tpu.memory_space<vmem>>, vector<80x128xf32>
    tpu.vector_store %arg12[%c0_74, %c0_75], %64 {strides = array<i32>} : memref<80x128xf32, #tpu.memory_space<vmem>>, vector<80x128xf32>,
    %c18 = arith.constant 18 : index
    %c0_76 = arith.constant 0 : index
    %66 = vector.load %arg11[%c18, %c0_76] : memref<120x128xbf16, #tpu.memory_space<vmem>>, vector<80x128xbf16>
    %c0_77 = arith.constant 0 : index
    %c0_78 = arith.constant 0 : index
    %67 = vector.load %arg12[%c0_77, %c0_78] : memref<80x128xf32, #tpu.memory_space<vmem>>, vector<80x128xf32>
    %c7 = arith.constant 7 : index
    %c0_79 = arith.constant 0 : index
    %c0_80 = arith.constant 0 : index
    %68 = vector.load %arg5[%c7, %c0_79, %c0_80] : memref<9x128x128xbf16, #tpu.memory_space<vmem>>, vector<1x128x128xbf16>
    %69 = vector.shape_cast %68 : vector<1x128x128xbf16> to vector<128x128xbf16>
    %cst_81 = arith.constant dense<0.000000e+00> : vector<80x128xf32>
    %70 = tpu.matmul %66, %69, %cst_81 {dimension_numbers = #tpu.dot_dimension_numbers<[1], [0], [0], [1], [0, 0, 1, 1], [], []>} : vector<80x128xbf16>, vector<128x128xbf16>, vector<80x128xf32> -> vector<80x128xf32>
    %71 = arith.addf %67, %70 : vector<80x128xf32>
    %c0_82 = arith.constant 0 : index
    %c0_83 = arith.constant 0 : index
    %72 = vector.load %arg12[%c0_82, %c0_83] : memref<80x128xf32, #tpu.memory_space<vmem>>, vector<80x128xf32>
    tpu.vector_store %arg12[%c0_82, %c0_83], %71 {strides = array<i32>} : memref<80x128xf32, #tpu.memory_space<vmem>>, vector<80x128xf32>,
    %c34 = arith.constant 34 : index
    %c0_84 = arith.constant 0 : index
    %73 = vector.load %arg11[%c34, %c0_84] : memref<120x128xbf16, #tpu.memory_space<vmem>>, vector<80x128xbf16>
    %c0_85 = arith.constant 0 : index
    %c0_86 = arith.constant 0 : index
    %74 = vector.load %arg12[%c0_85, %c0_86] : memref<80x128xf32, #tpu.memory_space<vmem>>, vector<80x128xf32>
    %c8 = arith.constant 8 : index
    %c0_87 = arith.constant 0 : index
    %c0_88 = arith.constant 0 : index
    %75 = vector.load %arg5[%c8, %c0_87, %c0_88] : memref<9x128x128xbf16, #tpu.memory_space<vmem>>, vector<1x128x128xbf16>
    %76 = vector.shape_cast %75 : vector<1x128x128xbf16> to vector<128x128xbf16>
    %cst_89 = arith.constant dense<0.000000e+00> : vector<80x128xf32>
    %77 = tpu.matmul %73, %76, %cst_89 {dimension_numbers = #tpu.dot_dimension_numbers<[1], [0], [0], [1], [0, 0, 1, 1], [], []>} : vector<80x128xbf16>, vector<128x128xbf16>, vector<80x128xf32> -> vector<80x128xf32>
    %78 = arith.addf %74, %77 : vector<80x128xf32>
    %c0_90 = arith.constant 0 : index
    %c0_91 = arith.constant 0 : index
    %79 = vector.load %arg12[%c0_90, %c0_91] : memref<80x128xf32, #tpu.memory_space<vmem>>, vector<80x128xf32>
    tpu.vector_store %arg12[%c0_90, %c0_91], %78 {strides = array<i32>} : memref<80x128xf32, #tpu.memory_space<vmem>>, vector<80x128xf32>,
    %c0_92 = arith.constant 0 : index
    %c0_93 = arith.constant 0 : index
    %80 = vector.load %arg8[%c0_92, %c0_93] : memref<1x128xf32, #tpu.memory_space<vmem>>, vector<1x128xf32>
    %81 = vector.shape_cast %80 : vector<1x128xf32> to vector<1x128xf32>
    %82 = vector.broadcast %81 : vector<1x128xf32> to vector<8x128xf32>
    %c0_94 = arith.constant 0 : index
    %c0_95 = arith.constant 0 : index
    %c0_96 = arith.constant 0 : index
    %83 = vector.load %arg10[%c0_94, %c0_95, %c0_96] : memref<1x8x128xf32, #tpu.memory_space<vmem>>, vector<1x8x128xf32>
    %84 = vector.shape_cast %83 : vector<1x8x128xf32> to vector<8x128xf32>
    %85 = vector.shape_cast %82 : vector<8x128xf32> to vector<1x8x128xf32>
    tpu.vector_store %arg10[%c0_94, %c0_95, %c0_96], %85 {strides = array<i32>} : memref<1x8x128xf32, #tpu.memory_space<vmem>>, vector<1x8x128xf32>,
    %c0_i32 = arith.constant 0 : i32
    %c5_i32 = arith.constant 5 : i32
    %86 = arith.addi %c0_i32, %c5_i32 : i32
    %c1_i32 = arith.constant 1 : i32
    scf.for %arg13 = %c0_i32 to %86 step %c1_i32  : i32 {
      %c16_i32 = arith.constant 16 : i32
      %99 = arith.muli %arg13, %c16_i32 : i32
      %100 = tpu.assume_multiple %99, 8 : i32
      %101 = arith.index_cast %100 : i32 to index
      %c0_106 = arith.constant 0 : index
      %102 = vector.load %arg12[%101, %c0_106] : memref<80x128xf32, #tpu.memory_space<vmem>>, vector<8x128xf32>
      %cst_107 = arith.constant 0.000000e+00 : f32
      %103 = vector.broadcast %cst_107 : f32 to vector<8x128xf32>
      %104 = arith.maximumf %102, %103 : vector<8x128xf32>
      %105 = arith.truncf %104 : vector<8x128xf32> to vector<8x128xbf16>
      %c0_108 = arith.constant 0 : index
      %c0_109 = arith.constant 0 : index
      %c0_110 = arith.constant 0 : index
      %106 = vector.load %arg10[%c0_108, %c0_109, %c0_110] : memref<1x8x128xf32, #tpu.memory_space<vmem>>, vector<1x8x128xf32>
      %107 = vector.shape_cast %106 : vector<1x8x128xf32> to vector<8x128xf32>
      %108 = arith.index_cast %arg13 : i32 to index
      %c0_111 = arith.constant 0 : index
      %c0_112 = arith.constant 0 : index
      %109 = vector.load %arg7[%108, %c0_111, %c0_112] : memref<5x128x128xbf16, #tpu.memory_space<vmem>>, vector<1x128x128xbf16>
      %110 = vector.shape_cast %109 : vector<1x128x128xbf16> to vector<128x128xbf16>
      %cst_113 = arith.constant dense<0.000000e+00> : vector<8x128xf32>
      %111 = tpu.matmul %105, %110, %cst_113 {dimension_numbers = #tpu.dot_dimension_numbers<[1], [0], [0], [1], [0, 0, 1, 1], [], []>} : vector<8x128xbf16>, vector<128x128xbf16>, vector<8x128xf32> -> vector<8x128xf32>
      %112 = arith.addf %107, %111 : vector<8x128xf32>
      %c0_114 = arith.constant 0 : index
      %c0_115 = arith.constant 0 : index
      %c0_116 = arith.constant 0 : index
      %113 = vector.load %arg10[%c0_114, %c0_115, %c0_116] : memref<1x8x128xf32, #tpu.memory_space<vmem>>, vector<1x8x128xf32>
      %114 = vector.shape_cast %113 : vector<1x8x128xf32> to vector<8x128xf32>
      %115 = vector.shape_cast %112 : vector<8x128xf32> to vector<1x8x128xf32>
      tpu.vector_store %arg10[%c0_114, %c0_115, %c0_116], %115 {strides = array<i32>} : memref<1x8x128xf32, #tpu.memory_space<vmem>>, vector<1x8x128xf32>,
    }
    %c5_i32_97 = arith.constant 5 : i32
    %c8_i32 = arith.constant 8 : i32
    %87 = arith.muli %arg1, %c8_i32 : i32
    %88 = tpu.assume_multiple %87, 8 : i32
    %c0_98 = arith.constant 0 : index
    %c0_99 = arith.constant 0 : index
    %c0_100 = arith.constant 0 : index
    %89 = vector.load %arg10[%c0_98, %c0_99, %c0_100] : memref<1x8x128xf32, #tpu.memory_space<vmem>>, vector<1x8x128xf32>
    %90 = vector.shape_cast %89 : vector<1x8x128xf32> to vector<8x128xf32>
    %cst_101 = arith.constant 5.65685415 : f32
    %91 = vector.broadcast %cst_101 : f32 to vector<8x128xf32>
    %92 = arith.mulf %90, %91 : vector<8x128xf32>
    %93 = arith.index_cast %88 : i32 to index
    %c0_102 = arith.constant 0 : index
    %94 = vector.load %arg9[%93, %c0_102] : memref<8x128xf32, #tpu.memory_space<vmem>>, vector<8x128xf32>
    %95 = arith.addf %92, %94 : vector<8x128xf32>
    %c0_103 = arith.constant 0 : index
    %c0_104 = arith.constant 0 : index
    %c0_105 = arith.constant 0 : index
    %96 = vector.load %arg10[%c0_103, %c0_104, %c0_105] : memref<1x8x128xf32, #tpu.memory_space<vmem>>, vector<1x8x128xf32>
    %97 = vector.shape_cast %96 : vector<1x8x128xf32> to vector<8x128xf32>
    %98 = vector.shape_cast %95 : vector<8x128xf32> to vector<1x8x128xf32>
    tpu.vector_store %arg10[%c0_103, %c0_104, %c0_105], %98 {strides = array<i32>} : memref<1x8x128xf32, #tpu.memory_space<vmem>>, vector<1x8x128xf32>,
    return
  }
  func.func @transform_0(%arg0: i32, %arg1: i32) -> (i32, i32, i32, i32) {
    %c0_i32 = arith.constant 0 : i32
    %c0_i32_0 = arith.constant 0 : i32
    %c0_i32_1 = arith.constant 0 : i32
    return %arg0, %arg1, %c0_i32, %c0_i32_0 : i32, i32, i32, i32
  }
  func.func @transform_1(%arg0: i32, %arg1: i32) -> (i32, i32) {
    %c0_i32 = arith.constant 0 : i32
    %c0_i32_0 = arith.constant 0 : i32
    %c0_i32_1 = arith.constant 0 : i32
    return %c0_i32, %c0_i32_0 : i32, i32
  }
  func.func @transform_2(%arg0: i32, %arg1: i32) -> (i32, i32) {
    %c0_i32 = arith.constant 0 : i32
    %c0_i32_0 = arith.constant 0 : i32
    %c0_i32_1 = arith.constant 0 : i32
    return %c0_i32, %c0_i32_0 : i32, i32
  }
  func.func @transform_3(%arg0: i32, %arg1: i32) -> (i32, i32, i32) {
    %c0_i32 = arith.constant 0 : i32
    %c0_i32_0 = arith.constant 0 : i32
    %c0_i32_1 = arith.constant 0 : i32
    %c0_i32_2 = arith.constant 0 : i32
    return %c0_i32, %c0_i32_0, %c0_i32_1 : i32, i32, i32
  }
  func.func @transform_4(%arg0: i32, %arg1: i32) -> (i32, i32) {
    %c0_i32 = arith.constant 0 : i32
    %c0_i32_0 = arith.constant 0 : i32
    %c0_i32_1 = arith.constant 0 : i32
    return %c0_i32, %c0_i32_0 : i32, i32
  }
  func.func @transform_5(%arg0: i32, %arg1: i32) -> (i32, i32, i32) {
    %c0_i32 = arith.constant 0 : i32
    %c0_i32_0 = arith.constant 0 : i32
    %c0_i32_1 = arith.constant 0 : i32
    %c0_i32_2 = arith.constant 0 : i32
    return %c0_i32, %c0_i32_0, %c0_i32_1 : i32, i32, i32
  }
  func.func @transform_6(%arg0: i32, %arg1: i32) -> (i32, i32) {
    %c0_i32 = arith.constant 0 : i32
    %c0_i32_0 = arith.constant 0 : i32
    %c0_i32_1 = arith.constant 0 : i32
    return %c0_i32, %c0_i32_0 : i32, i32
  }
  func.func @transform_7(%arg0: i32, %arg1: i32) -> (i32, i32) {
    %c0_i32 = arith.constant 0 : i32
    %c0_i32_0 = arith.constant 0 : i32
    %c0_i32_1 = arith.constant 0 : i32
    return %c0_i32, %c0_i32_0 : i32, i32
  }
  func.func @transform_8(%arg0: i32, %arg1: i32) -> (i32, i32, i32) {
    %c0_i32 = arith.constant 0 : i32
    %c0_i32_0 = arith.constant 0 : i32
    return %arg0, %arg1, %c0_i32 : i32, i32, i32
  }
}

module attributes {stable_mosaic.version = 11 : i64} {
  func.func @kernel(%arg0: i32, %arg1: i32, %arg2: memref<1x1x112x9xf32, #tpu.memory_space<vmem>>, %arg3: memref<9x128xf32, #tpu.memory_space<vmem>>, %arg4: memref<1x128xf32, #tpu.memory_space<vmem>>, %arg5: memref<9x128x128xbf16, #tpu.memory_space<vmem>>, %arg6: memref<1x128xf32, #tpu.memory_space<vmem>>, %arg7: memref<5x128x128xbf16, #tpu.memory_space<vmem>>, %arg8: memref<1x128xf32, #tpu.memory_space<vmem>>, %arg9: memref<8x128xf32, #tpu.memory_space<vmem>>, %arg10: memref<1x8x128xf32, #tpu.memory_space<vmem>>, %arg11: memref<120x128xbf16, #tpu.memory_space<vmem>>, %arg12: memref<80x128xf32, #tpu.memory_space<vmem>>) attributes {dimension_semantics = [#tpu.dimension_semantics<parallel>, #tpu.dimension_semantics<parallel>], iteration_bounds = array<i64: 2, 1>, scalar_prefetch = 0 : i64, scratch_operands = 2 : i64, tpu.core_type = #tpu.core_type<tc>, window_params = [{transform_indices = @transform_0, window_bounds = array<i64: 1, 1, 112, 9>}, {pipeline_mode = #tpu.pipeline_mode<synchronous>, transform_indices = @transform_1, window_bounds = array<i64: 9, 128>}, {pipeline_mode = #tpu.pipeline_mode<synchronous>, transform_indices = @transform_2, window_bounds = array<i64: 1, 128>}, {pipeline_mode = #tpu.pipeline_mode<synchronous>, transform_indices = @transform_3, window_bounds = array<i64: 9, 128, 128>}, {pipeline_mode = #tpu.pipeline_mode<synchronous>, transform_indices = @transform_4, window_bounds = array<i64: 1, 128>}, {pipeline_mode = #tpu.pipeline_mode<synchronous>, transform_indices = @transform_5, window_bounds = array<i64: 5, 128, 128>}, {pipeline_mode = #tpu.pipeline_mode<synchronous>, transform_indices = @transform_6, window_bounds = array<i64: 1, 128>}, {pipeline_mode = #tpu.pipeline_mode<synchronous>, transform_indices = @transform_7, window_bounds = array<i64: 8, 128>}, {transform_indices = @transform_8, window_bounds = array<i64: 1, 8, 128>}]} {
    %c0 = arith.constant 0 : index
    %c0_0 = arith.constant 0 : index
    %c0_1 = arith.constant 0 : index
    %c0_2 = arith.constant 0 : index
    %0 = vector.load %arg2[%c0, %c0_0, %c0_1, %c0_2] : memref<1x1x112x9xf32, #tpu.memory_space<vmem>>, vector<1x1x112x9xf32>
    %1 = vector.shape_cast %0 : vector<1x1x112x9xf32> to vector<112x9xf32>
    %c0_3 = arith.constant 0 : index
    %c0_4 = arith.constant 0 : index
    %2 = vector.load %arg3[%c0_3, %c0_4] : memref<9x128xf32, #tpu.memory_space<vmem>>, vector<9x128xf32>
    %cst = arith.constant dense<0.000000e+00> : vector<112x128xf32>
    %3 = tpu.matmul %1, %2, %cst {dimension_numbers = #tpu.dot_dimension_numbers<[1], [0], [0], [1], [0, 0, 1, 1], [], []>} : vector<112x9xf32>, vector<9x128xf32>, vector<112x128xf32> -> vector<112x128xf32>
    %c0_5 = arith.constant 0 : index
    %c0_6 = arith.constant 0 : index
    %4 = vector.load %arg4[%c0_5, %c0_6] : memref<1x128xf32, #tpu.memory_space<vmem>>, vector<1x128xf32>
    %5 = vector.broadcast %4 : vector<1x128xf32> to vector<112x128xf32>
    %6 = arith.addf %3, %5 : vector<112x128xf32>
    %cst_7 = arith.constant 0.000000e+00 : f32
    %7 = vector.broadcast %cst_7 : f32 to vector<112x128xf32>
    %8 = arith.maximumf %6, %7 : vector<112x128xf32>
    %9 = arith.truncf %8 : vector<112x128xf32> to vector<112x128xbf16>
    %c0_8 = arith.constant 0 : index
    %c0_9 = arith.constant 0 : index
    %10 = vector.load %arg11[%c0_8, %c0_9] : memref<120x128xbf16, #tpu.memory_space<vmem>>, vector<112x128xbf16>
    tpu.vector_store %arg11[%c0_8, %c0_9], %9 {strides = array<i32>} : memref<120x128xbf16, #tpu.memory_space<vmem>>, vector<112x128xbf16>,
    %cst_10 = arith.constant 0.000000e+00 : bf16
    %11 = vector.broadcast %cst_10 : bf16 to vector<8x128xbf16>
    %c112 = arith.constant 112 : index
    %c0_11 = arith.constant 0 : index
    %12 = vector.load %arg11[%c112, %c0_11] : memref<120x128xbf16, #tpu.memory_space<vmem>>, vector<8x128xbf16>
    tpu.vector_store %arg11[%c112, %c0_11], %11 {strides = array<i32>} : memref<120x128xbf16, #tpu.memory_space<vmem>>, vector<8x128xbf16>,
    %c0_12 = arith.constant 0 : index
    %c0_13 = arith.constant 0 : index
    %13 = vector.load %arg6[%c0_12, %c0_13] : memref<1x128xf32, #tpu.memory_space<vmem>>, vector<1x128xf32>
    %14 = vector.shape_cast %13 : vector<1x128xf32> to vector<1x128xf32>
    %15 = vector.broadcast %14 : vector<1x128xf32> to vector<80x128xf32>
    %c0_14 = arith.constant 0 : index
    %c0_15 = arith.constant 0 : index
    %16 = vector.load %arg12[%c0_14, %c0_15] : memref<80x128xf32, #tpu.memory_space<vmem>>, vector<80x128xf32>
    tpu.vector_store %arg12[%c0_14, %c0_15], %15 {strides = array<i32>} : memref<80x128xf32, #tpu.memory_space<vmem>>, vector<80x128xf32>,
    %c0_16 = arith.constant 0 : index
    %c0_17 = arith.constant 0 : index
    %17 = vector.load %arg11[%c0_16, %c0_17] : memref<120x128xbf16, #tpu.memory_space<vmem>>, vector<80x128xbf16>
    %c0_18 = arith.constant 0 : index
    %c0_19 = arith.constant 0 : index
    %18 = vector.load %arg12[%c0_18, %c0_19] : memref<80x128xf32, #tpu.memory_space<vmem>>, vector<80x128xf32>
    %c0_20 = arith.constant 0 : index
    %c0_21 = arith.constant 0 : index
    %c0_22 = arith.constant 0 : index
    %19 = vector.load %arg5[%c0_20, %c0_21, %c0_22] : memref<9x128x128xbf16, #tpu.memory_space<vmem>>, vector<1x128x128xbf16>
    %20 = vector.shape_cast %19 : vector<1x128x128xbf16> to vector<128x128xbf16>
    %cst_23 = arith.constant dense<0.000000e+00> : vector<80x128xf32>
    %21 = tpu.matmul %17, %20, %cst_23 {dimension_numbers = #tpu.dot_dimension_numbers<[1], [0], [0], [1], [0, 0, 1, 1], [], []>} : vector<80x128xbf16>, vector<128x128xbf16>, vector<80x128xf32> -> vector<80x128xf32>
    %22 = arith.addf %18, %21 : vector<80x128xf32>
    %c0_24 = arith.constant 0 : index
    %c0_25 = arith.constant 0 : index
    %23 = vector.load %arg12[%c0_24, %c0_25] : memref<80x128xf32, #tpu.memory_space<vmem>>, vector<80x128xf32>
    tpu.vector_store %arg12[%c0_24, %c0_25], %22 {strides = array<i32>} : memref<80x128xf32, #tpu.memory_space<vmem>>, vector<80x128xf32>,
    %c16 = arith.constant 16 : index
    %c0_26 = arith.constant 0 : index
    %24 = vector.load %arg11[%c16, %c0_26] : memref<120x128xbf16, #tpu.memory_space<vmem>>, vector<80x128xbf16>
    %c0_27 = arith.constant 0 : index
    %c0_28 = arith.constant 0 : index
    %25 = vector.load %arg12[%c0_27, %c0_28] : memref<80x128xf32, #tpu.memory_space<vmem>>, vector<80x128xf32>
    %c1 = arith.constant 1 : index
    %c0_29 = arith.constant 0 : index
    %c0_30 = arith.constant 0 : index
    %26 = vector.load %arg5[%c1, %c0_29, %c0_30] : memref<9x128x128xbf16, #tpu.memory_space<vmem>>, vector<1x128x128xbf16>
    %27 = vector.shape_cast %26 : vector<1x128x128xbf16> to vector<128x128xbf16>
    %cst_31 = arith.constant dense<0.000000e+00> : vector<80x128xf32>
    %28 = tpu.matmul %24, %27, %cst_31 {dimension_numbers = #tpu.dot_dimension_numbers<[1], [0], [0], [1], [0, 0, 1, 1], [], []>} : vector<80x128xbf16>, vector<128x128xbf16>, vector<80x128xf32> -> vector<80x128xf32>
    %29 = arith.addf %25, %28 : vector<80x128xf32>
    %c0_32 = arith.constant 0 : index
    %c0_33 = arith.constant 0 : index
    %30 = vector.load %arg12[%c0_32, %c0_33] : memref<80x128xf32, #tpu.memory_space<vmem>>, vector<80x128xf32>
    tpu.vector_store %arg12[%c0_32, %c0_33], %29 {strides = array<i32>} : memref<80x128xf32, #tpu.memory_space<vmem>>, vector<80x128xf32>,
    %c32 = arith.constant 32 : index
    %c0_34 = arith.constant 0 : index
    %31 = vector.load %arg11[%c32, %c0_34] : memref<120x128xbf16, #tpu.memory_space<vmem>>, vector<80x128xbf16>
    %c0_35 = arith.constant 0 : index
    %c0_36 = arith.constant 0 : index
    %32 = vector.load %arg12[%c0_35, %c0_36] : memref<80x128xf32, #tpu.memory_space<vmem>>, vector<80x128xf32>
    %c2 = arith.constant 2 : index
    %c0_37 = arith.constant 0 : index
    %c0_38 = arith.constant 0 : index
    %33 = vector.load %arg5[%c2, %c0_37, %c0_38] : memref<9x128x128xbf16, #tpu.memory_space<vmem>>, vector<1x128x128xbf16>
    %34 = vector.shape_cast %33 : vector<1x128x128xbf16> to vector<128x128xbf16>
    %cst_39 = arith.constant dense<0.000000e+00> : vector<80x128xf32>
    %35 = tpu.matmul %31, %34, %cst_39 {dimension_numbers = #tpu.dot_dimension_numbers<[1], [0], [0], [1], [0, 0, 1, 1], [], []>} : vector<80x128xbf16>, vector<128x128xbf16>, vector<80x128xf32> -> vector<80x128xf32>
    %36 = arith.addf %32, %35 : vector<80x128xf32>
    %c0_40 = arith.constant 0 : index
    %c0_41 = arith.constant 0 : index
    %37 = vector.load %arg12[%c0_40, %c0_41] : memref<80x128xf32, #tpu.memory_space<vmem>>, vector<80x128xf32>
    tpu.vector_store %arg12[%c0_40, %c0_41], %36 {strides = array<i32>} : memref<80x128xf32, #tpu.memory_space<vmem>>, vector<80x128xf32>,
    %c1_42 = arith.constant 1 : index
    %c0_43 = arith.constant 0 : index
    %38 = vector.load %arg11[%c1_42, %c0_43] : memref<120x128xbf16, #tpu.memory_space<vmem>>, vector<80x128xbf16>
    %c0_44 = arith.constant 0 : index
    %c0_45 = arith.constant 0 : index
    %39 = vector.load %arg12[%c0_44, %c0_45] : memref<80x128xf32, #tpu.memory_space<vmem>>, vector<80x128xf32>
    %c3 = arith.constant 3 : index
    %c0_46 = arith.constant 0 : index
    %c0_47 = arith.constant 0 : index
    %40 = vector.load %arg5[%c3, %c0_46, %c0_47] : memref<9x128x128xbf16, #tpu.memory_space<vmem>>, vector<1x128x128xbf16>
    %41 = vector.shape_cast %40 : vector<1x128x128xbf16> to vector<128x128xbf16>
    %cst_48 = arith.constant dense<0.000000e+00> : vector<80x128xf32>
    %42 = tpu.matmul %38, %41, %cst_48 {dimension_numbers = #tpu.dot_dimension_numbers<[1], [0], [0], [1], [0, 0, 1, 1], [], []>} : vector<80x128xbf16>, vector<128x128xbf16>, vector<80x128xf32> -> vector<80x128xf32>
    %43 = arith.addf %39, %42 : vector<80x128xf32>
    %c0_49 = arith.constant 0 : index
    %c0_50 = arith.constant 0 : index
    %44 = vector.load %arg12[%c0_49, %c0_50] : memref<80x128xf32, #tpu.memory_space<vmem>>, vector<80x128xf32>
    tpu.vector_store %arg12[%c0_49, %c0_50], %43 {strides = array<i32>} : memref<80x128xf32, #tpu.memory_space<vmem>>, vector<80x128xf32>,
    %c17 = arith.constant 17 : index
    %c0_51 = arith.constant 0 : index
    %45 = vector.load %arg11[%c17, %c0_51] : memref<120x128xbf16, #tpu.memory_space<vmem>>, vector<80x128xbf16>
    %c0_52 = arith.constant 0 : index
    %c0_53 = arith.constant 0 : index
    %46 = vector.load %arg12[%c0_52, %c0_53] : memref<80x128xf32, #tpu.memory_space<vmem>>, vector<80x128xf32>
    %c4 = arith.constant 4 : index
    %c0_54 = arith.constant 0 : index
    %c0_55 = arith.constant 0 : index
    %47 = vector.load %arg5[%c4, %c0_54, %c0_55] : memref<9x128x128xbf16, #tpu.memory_space<vmem>>, vector<1x128x128xbf16>
    %48 = vector.shape_cast %47 : vector<1x128x128xbf16> to vector<128x128xbf16>
    %cst_56 = arith.constant dense<0.000000e+00> : vector<80x128xf32>
    %49 = tpu.matmul %45, %48, %cst_56 {dimension_numbers = #tpu.dot_dimension_numbers<[1], [0], [0], [1], [0, 0, 1, 1], [], []>} : vector<80x128xbf16>, vector<128x128xbf16>, vector<80x128xf32> -> vector<80x128xf32>
    %50 = arith.addf %46, %49 : vector<80x128xf32>
    %c0_57 = arith.constant 0 : index
    %c0_58 = arith.constant 0 : index
    %51 = vector.load %arg12[%c0_57, %c0_58] : memref<80x128xf32, #tpu.memory_space<vmem>>, vector<80x128xf32>
    tpu.vector_store %arg12[%c0_57, %c0_58], %50 {strides = array<i32>} : memref<80x128xf32, #tpu.memory_space<vmem>>, vector<80x128xf32>,
    %c33 = arith.constant 33 : index
    %c0_59 = arith.constant 0 : index
    %52 = vector.load %arg11[%c33, %c0_59] : memref<120x128xbf16, #tpu.memory_space<vmem>>, vector<80x128xbf16>
    %c0_60 = arith.constant 0 : index
    %c0_61 = arith.constant 0 : index
    %53 = vector.load %arg12[%c0_60, %c0_61] : memref<80x128xf32, #tpu.memory_space<vmem>>, vector<80x128xf32>
    %c5 = arith.constant 5 : index
    %c0_62 = arith.constant 0 : index
    %c0_63 = arith.constant 0 : index
    %54 = vector.load %arg5[%c5, %c0_62, %c0_63] : memref<9x128x128xbf16, #tpu.memory_space<vmem>>, vector<1x128x128xbf16>
    %55 = vector.shape_cast %54 : vector<1x128x128xbf16> to vector<128x128xbf16>
    %cst_64 = arith.constant dense<0.000000e+00> : vector<80x128xf32>
    %56 = tpu.matmul %52, %55, %cst_64 {dimension_numbers = #tpu.dot_dimension_numbers<[1], [0], [0], [1], [0, 0, 1, 1], [], []>} : vector<80x128xbf16>, vector<128x128xbf16>, vector<80x128xf32> -> vector<80x128xf32>
    %57 = arith.addf %53, %56 : vector<80x128xf32>
    %c0_65 = arith.constant 0 : index
    %c0_66 = arith.constant 0 : index
    %58 = vector.load %arg12[%c0_65, %c0_66] : memref<80x128xf32, #tpu.memory_space<vmem>>, vector<80x128xf32>
    tpu.vector_store %arg12[%c0_65, %c0_66], %57 {strides = array<i32>} : memref<80x128xf32, #tpu.memory_space<vmem>>, vector<80x128xf32>,
    %c2_67 = arith.constant 2 : index
    %c0_68 = arith.constant 0 : index
    %59 = vector.load %arg11[%c2_67, %c0_68] : memref<120x128xbf16, #tpu.memory_space<vmem>>, vector<80x128xbf16>
    %c0_69 = arith.constant 0 : index
    %c0_70 = arith.constant 0 : index
    %60 = vector.load %arg12[%c0_69, %c0_70] : memref<80x128xf32, #tpu.memory_space<vmem>>, vector<80x128xf32>
    %c6 = arith.constant 6 : index
    %c0_71 = arith.constant 0 : index
    %c0_72 = arith.constant 0 : index
    %61 = vector.load %arg5[%c6, %c0_71, %c0_72] : memref<9x128x128xbf16, #tpu.memory_space<vmem>>, vector<1x128x128xbf16>
    %62 = vector.shape_cast %61 : vector<1x128x128xbf16> to vector<128x128xbf16>
    %cst_73 = arith.constant dense<0.000000e+00> : vector<80x128xf32>
    %63 = tpu.matmul %59, %62, %cst_73 {dimension_numbers = #tpu.dot_dimension_numbers<[1], [0], [0], [1], [0, 0, 1, 1], [], []>} : vector<80x128xbf16>, vector<128x128xbf16>, vector<80x128xf32> -> vector<80x128xf32>
    %64 = arith.addf %60, %63 : vector<80x128xf32>
    %c0_74 = arith.constant 0 : index
    %c0_75 = arith.constant 0 : index
    %65 = vector.load %arg12[%c0_74, %c0_75] : memref<80x128xf32, #tpu.memory_space<vmem>>, vector<80x128xf32>
    tpu.vector_store %arg12[%c0_74, %c0_75], %64 {strides = array<i32>} : memref<80x128xf32, #tpu.memory_space<vmem>>, vector<80x128xf32>,
    %c18 = arith.constant 18 : index
    %c0_76 = arith.constant 0 : index
    %66 = vector.load %arg11[%c18, %c0_76] : memref<120x128xbf16, #tpu.memory_space<vmem>>, vector<80x128xbf16>
    %c0_77 = arith.constant 0 : index
    %c0_78 = arith.constant 0 : index
    %67 = vector.load %arg12[%c0_77, %c0_78] : memref<80x128xf32, #tpu.memory_space<vmem>>, vector<80x128xf32>
    %c7 = arith.constant 7 : index
    %c0_79 = arith.constant 0 : index
    %c0_80 = arith.constant 0 : index
    %68 = vector.load %arg5[%c7, %c0_79, %c0_80] : memref<9x128x128xbf16, #tpu.memory_space<vmem>>, vector<1x128x128xbf16>
    %69 = vector.shape_cast %68 : vector<1x128x128xbf16> to vector<128x128xbf16>
    %cst_81 = arith.constant dense<0.000000e+00> : vector<80x128xf32>
    %70 = tpu.matmul %66, %69, %cst_81 {dimension_numbers = #tpu.dot_dimension_numbers<[1], [0], [0], [1], [0, 0, 1, 1], [], []>} : vector<80x128xbf16>, vector<128x128xbf16>, vector<80x128xf32> -> vector<80x128xf32>
    %71 = arith.addf %67, %70 : vector<80x128xf32>
    %c0_82 = arith.constant 0 : index
    %c0_83 = arith.constant 0 : index
    %72 = vector.load %arg12[%c0_82, %c0_83] : memref<80x128xf32, #tpu.memory_space<vmem>>, vector<80x128xf32>
    tpu.vector_store %arg12[%c0_82, %c0_83], %71 {strides = array<i32>} : memref<80x128xf32, #tpu.memory_space<vmem>>, vector<80x128xf32>,
    %c34 = arith.constant 34 : index
    %c0_84 = arith.constant 0 : index
    %73 = vector.load %arg11[%c34, %c0_84] : memref<120x128xbf16, #tpu.memory_space<vmem>>, vector<80x128xbf16>
    %c0_85 = arith.constant 0 : index
    %c0_86 = arith.constant 0 : index
    %74 = vector.load %arg12[%c0_85, %c0_86] : memref<80x128xf32, #tpu.memory_space<vmem>>, vector<80x128xf32>
    %c8 = arith.constant 8 : index
    %c0_87 = arith.constant 0 : index
    %c0_88 = arith.constant 0 : index
    %75 = vector.load %arg5[%c8, %c0_87, %c0_88] : memref<9x128x128xbf16, #tpu.memory_space<vmem>>, vector<1x128x128xbf16>
    %76 = vector.shape_cast %75 : vector<1x128x128xbf16> to vector<128x128xbf16>
    %cst_89 = arith.constant dense<0.000000e+00> : vector<80x128xf32>
    %77 = tpu.matmul %73, %76, %cst_89 {dimension_numbers = #tpu.dot_dimension_numbers<[1], [0], [0], [1], [0, 0, 1, 1], [], []>} : vector<80x128xbf16>, vector<128x128xbf16>, vector<80x128xf32> -> vector<80x128xf32>
    %78 = arith.addf %74, %77 : vector<80x128xf32>
    %c0_90 = arith.constant 0 : index
    %c0_91 = arith.constant 0 : index
    %79 = vector.load %arg12[%c0_90, %c0_91] : memref<80x128xf32, #tpu.memory_space<vmem>>, vector<80x128xf32>
    tpu.vector_store %arg12[%c0_90, %c0_91], %78 {strides = array<i32>} : memref<80x128xf32, #tpu.memory_space<vmem>>, vector<80x128xf32>,
    %c0_92 = arith.constant 0 : index
    %c0_93 = arith.constant 0 : index
    %80 = vector.load %arg8[%c0_92, %c0_93] : memref<1x128xf32, #tpu.memory_space<vmem>>, vector<1x128xf32>
    %81 = vector.shape_cast %80 : vector<1x128xf32> to vector<1x128xf32>
    %82 = vector.broadcast %81 : vector<1x128xf32> to vector<8x128xf32>
    %c0_94 = arith.constant 0 : index
    %c0_95 = arith.constant 0 : index
    %c0_96 = arith.constant 0 : index
    %83 = vector.load %arg10[%c0_94, %c0_95, %c0_96] : memref<1x8x128xf32, #tpu.memory_space<vmem>>, vector<1x8x128xf32>
    %84 = vector.shape_cast %83 : vector<1x8x128xf32> to vector<8x128xf32>
    %85 = vector.shape_cast %82 : vector<8x128xf32> to vector<1x8x128xf32>
    tpu.vector_store %arg10[%c0_94, %c0_95, %c0_96], %85 {strides = array<i32>} : memref<1x8x128xf32, #tpu.memory_space<vmem>>, vector<1x8x128xf32>,
    %c0_i32 = arith.constant 0 : i32
    %c5_i32 = arith.constant 5 : i32
    %86 = arith.addi %c0_i32, %c5_i32 : i32
    %c1_i32 = arith.constant 1 : i32
    scf.for %arg13 = %c0_i32 to %86 step %c1_i32  : i32 {
      %c16_i32 = arith.constant 16 : i32
      %99 = arith.muli %arg13, %c16_i32 : i32
      %100 = tpu.assume_multiple %99, 8 : i32
      %101 = arith.index_cast %100 : i32 to index
      %c0_106 = arith.constant 0 : index
      %102 = vector.load %arg12[%101, %c0_106] : memref<80x128xf32, #tpu.memory_space<vmem>>, vector<8x128xf32>
      %cst_107 = arith.constant 0.000000e+00 : f32
      %103 = vector.broadcast %cst_107 : f32 to vector<8x128xf32>
      %104 = arith.maximumf %102, %103 : vector<8x128xf32>
      %105 = arith.truncf %104 : vector<8x128xf32> to vector<8x128xbf16>
      %c0_108 = arith.constant 0 : index
      %c0_109 = arith.constant 0 : index
      %c0_110 = arith.constant 0 : index
      %106 = vector.load %arg10[%c0_108, %c0_109, %c0_110] : memref<1x8x128xf32, #tpu.memory_space<vmem>>, vector<1x8x128xf32>
      %107 = vector.shape_cast %106 : vector<1x8x128xf32> to vector<8x128xf32>
      %108 = arith.index_cast %arg13 : i32 to index
      %c0_111 = arith.constant 0 : index
      %c0_112 = arith.constant 0 : index
      %109 = vector.load %arg7[%108, %c0_111, %c0_112] : memref<5x128x128xbf16, #tpu.memory_space<vmem>>, vector<1x128x128xbf16>
      %110 = vector.shape_cast %109 : vector<1x128x128xbf16> to vector<128x128xbf16>
      %cst_113 = arith.constant dense<0.000000e+00> : vector<8x128xf32>
      %111 = tpu.matmul %105, %110, %cst_113 {dimension_numbers = #tpu.dot_dimension_numbers<[1], [0], [0], [1], [0, 0, 1, 1], [], []>} : vector<8x128xbf16>, vector<128x128xbf16>, vector<8x128xf32> -> vector<8x128xf32>
      %112 = arith.addf %107, %111 : vector<8x128xf32>
      %c0_114 = arith.constant 0 : index
      %c0_115 = arith.constant 0 : index
      %c0_116 = arith.constant 0 : index
      %113 = vector.load %arg10[%c0_114, %c0_115, %c0_116] : memref<1x8x128xf32, #tpu.memory_space<vmem>>, vector<1x8x128xf32>
      %114 = vector.shape_cast %113 : vector<1x8x128xf32> to vector<8x128xf32>
      %115 = vector.shape_cast %112 : vector<8x128xf32> to vector<1x8x128xf32>
      tpu.vector_store %arg10[%c0_114, %c0_115, %c0_116], %115 {strides = array<i32>} : memref<1x8x128xf32, #tpu.memory_space<vmem>>, vector<1x8x128xf32>,
    }
    %c5_i32_97 = arith.constant 5 : i32
    %c8_i32 = arith.constant 8 : i32
    %87 = arith.muli %arg1, %c8_i32 : i32
    %88 = tpu.assume_multiple %87, 8 : i32
    %c0_98 = arith.constant 0 : index
    %c0_99 = arith.constant 0 : index
    %c0_100 = arith.constant 0 : index
    %89 = vector.load %arg10[%c0_98, %c0_99, %c0_100] : memref<1x8x128xf32, #tpu.memory_space<vmem>>, vector<1x8x128xf32>
    %90 = vector.shape_cast %89 : vector<1x8x128xf32> to vector<8x128xf32>
    %cst_101 = arith.constant 5.65685415 : f32
    %91 = vector.broadcast %cst_101 : f32 to vector<8x128xf32>
    %92 = arith.mulf %90, %91 : vector<8x128xf32>
    %93 = arith.index_cast %88 : i32 to index
    %c0_102 = arith.constant 0 : index
    %94 = vector.load %arg9[%93, %c0_102] : memref<8x128xf32, #tpu.memory_space<vmem>>, vector<8x128xf32>
    %95 = arith.addf %92, %94 : vector<8x128xf32>
    %c0_103 = arith.constant 0 : index
    %c0_104 = arith.constant 0 : index
    %c0_105 = arith.constant 0 : index
    %96 = vector.load %arg10[%c0_103, %c0_104, %c0_105] : memref<1x8x128xf32, #tpu.memory_space<vmem>>, vector<1x8x128xf32>
    %97 = vector.shape_cast %96 : vector<1x8x128xf32> to vector<8x128xf32>
    %98 = vector.shape_cast %95 : vector<8x128xf32> to vector<1x8x128xf32>
    tpu.vector_store %arg10[%c0_103, %c0_104, %c0_105], %98 {strides = array<i32>} : memref<1x8x128xf32, #tpu.memory_space<vmem>>, vector<1x8x128xf32>,
    return
  }
  func.func @transform_0(%arg0: i32, %arg1: i32) -> (i32, i32, i32, i32) {
    %c0_i32 = arith.constant 0 : i32
    %c0_i32_0 = arith.constant 0 : i32
    %c0_i32_1 = arith.constant 0 : i32
    return %arg0, %arg1, %c0_i32, %c0_i32_0 : i32, i32, i32, i32
  }
  func.func @transform_1(%arg0: i32, %arg1: i32) -> (i32, i32) {
    %c0_i32 = arith.constant 0 : i32
    %c0_i32_0 = arith.constant 0 : i32
    %c0_i32_1 = arith.constant 0 : i32
    return %c0_i32, %c0_i32_0 : i32, i32
  }
  func.func @transform_2(%arg0: i32, %arg1: i32) -> (i32, i32) {
    %c0_i32 = arith.constant 0 : i32
    %c0_i32_0 = arith.constant 0 : i32
    %c0_i32_1 = arith.constant 0 : i32
    return %c0_i32, %c0_i32_0 : i32, i32
  }
  func.func @transform_3(%arg0: i32, %arg1: i32) -> (i32, i32, i32) {
    %c0_i32 = arith.constant 0 : i32
    %c0_i32_0 = arith.constant 0 : i32
    %c0_i32_1 = arith.constant 0 : i32
    %c0_i32_2 = arith.constant 0 : i32
    return %c0_i32, %c0_i32_0, %c0_i32_1 : i32, i32, i32
  }
  func.func @transform_4(%arg0: i32, %arg1: i32) -> (i32, i32) {
    %c0_i32 = arith.constant 0 : i32
    %c0_i32_0 = arith.constant 0 : i32
    %c0_i32_1 = arith.constant 0 : i32
    return %c0_i32, %c0_i32_0 : i32, i32
  }
  func.func @transform_5(%arg0: i32, %arg1: i32) -> (i32, i32, i32) {
    %c0_i32 = arith.constant 0 : i32
    %c0_i32_0 = arith.constant 0 : i32
    %c0_i32_1 = arith.constant 0 : i32
    %c0_i32_2 = arith.constant 0 : i32
    return %c0_i32, %c0_i32_0, %c0_i32_1 : i32, i32, i32
  }
  func.func @transform_6(%arg0: i32, %arg1: i32) -> (i32, i32) {
    %c0_i32 = arith.constant 0 : i32
    %c0_i32_0 = arith.constant 0 : i32
    %c0_i32_1 = arith.constant 0 : i32
    return %c0_i32, %c0_i32_0 : i32, i32
  }
  func.func @transform_7(%arg0: i32, %arg1: i32) -> (i32, i32) {
    %c0_i32 = arith.constant 0 : i32
    %c0_i32_0 = arith.constant 0 : i32
    %c0_i32_1 = arith.constant 0 : i32
    return %c0_i32, %c0_i32_0 : i32, i32
  }
  func.func @transform_8(%arg0: i32, %arg1: i32) -> (i32, i32, i32) {
    %c0_i32 = arith.constant 0 : i32
    %c0_i32_0 = arith.constant 0 : i32
    return %arg0, %arg1, %c0_i32 : i32, i32, i32
  }
}

</mosaic_0001>

<llo_original>
// kernel: tpu_custom_call.1
$region0: #{tpu_custom_call.1}
  #allocation0 [shape = 'u32[]', space=smem, size = 0x4, offset = 0x4, fixed_abs, tag = 'smem constant byte address 0x4 - core index']
  #allocation1 [shape = 'u32[144,128]{1,0:T(1,128)}', space=vmem, size = 0x12000, scoped, tag = 'internal scratch']
  #allocation2 [shape = 'bf16[120,128]{1,0:T(8,128)(2,1)}', space=vmem, size = 0x7800, scoped, tag = 'scratch operand']
  #allocation3 [shape = 'f32[80,128]{1,0:T(8,128)}', space=vmem, size = 0xa000, scoped, tag = 'scratch operand']
  %s0 = inlined_call_operand.vmem [shape: f32[2,1,112,9], index: 0, kind: input, shape index: {}]
  %s1 = inlined_call_operand.vmem [shape: f32[9,128], index: 1, kind: input, shape index: {}]
  %s2 = inlined_call_operand.vmem [shape: f32[1,128], index: 2, kind: input, shape index: {}]
  %s3 = inlined_call_operand.hbm [shape: bf16[9,128,128], index: 3, kind: input, shape index: {}]
  %s4 = inlined_call_operand.vmem [shape: f32[1,128], index: 4, kind: input, shape index: {}]
  %s5 = inlined_call_operand.hbm [shape: bf16[5,128,128], index: 5, kind: input, shape index: {}]
  %s6 = inlined_call_operand.vmem [shape: f32[1,128], index: 6, kind: input, shape index: {}]
  %s7 = inlined_call_operand.vmem [shape: f32[8,128], index: 7, kind: input, shape index: {}]
  %s8 = inlined_call_operand.hbm [shape: f32[2,8,128], index: 8, kind: output, shape index: {}]
  %s9 = sld [smem:[#allocation0]]
  $region80: #{tpu_custom_call.1} parent=0
    _
  %s11 = ssub.s32 1, %s9
  %s12 = scalar_select 0, %s11, %s9
  $region1: #{tpu_custom_call.1} parent=0
    #allocation4 [shape = 'u8[294912]{0}', space=vmem, size = 0x48000, scoped, tag = 'input window, operand 3, single buffered']
    #allocation5 [shape = 's32[2]{0}', space=sflag, size = 0x8, scoped, tag = 'scoped memory for tpu_custom_call.1']
    #allocation6 [shape = 's32[2]{0}', space=sflag, size = 0x8, scoped, tag = 'scoped memory for tpu_custom_call.1']
    #allocation7 [shape = 'u8[163840]{0}', space=vmem, size = 0x28000, scoped, tag = 'input window, operand 5, single buffered']
    #allocation8 [shape = 's32[1]{0}', space=sflag, size = 0x4, scoped, tag = 'scoped memory for tpu_custom_call.1']
    #allocation9 [shape = 'u8[8192]{0}', space=vmem, size = 0x2000, scoped, tag = 'output window, operand 0']
    %13 = vsyncpa [#allocation5], 0
    %14 = vsyncpa [#allocation8], 0
    %15 = vsyncpa [#allocation6], 0
    %s16 = scalar_lea.sflag [#allocation6], 1
    %17 = vsyncpa %s16, 0
    loop: start=0, step=1, limit=4
    $region2: #{tpu_custom_call.1} parent=1 // loop_pre_header
      _
    $region3: #{tpu_custom_call.1} parent=1 // loop_header
      %s19 = sphi 0, %s23
      %p20 = scmp.ge.s32.totalorder %s19, 4
      %s26 = sphi 0, %s38
      %s27 = sphi 0, %s34
      %s28 = sphi 0, %s26
      %s29 = sphi 0, %s27
      %s30 = sphi 0, %s28
      %s31 = sphi 0, %s29
      %s43 = sphi 0, %s45
      %s46 = sphi 0, %s43
      %s47 = sphi 0, %s46
      %s63 = sphi 0, %s47
      %s67 = sphi 0, %s67
      %s69 = sphi 0, %s67
      %s70 = sphi 0, %s69
      %s84 = sphi 0, %s70
      %s88 = sphi 0, %s88
      %s90 = sphi 0, %s88
      %s91 = sphi 0, %s90
      %s105 = sphi 0, %s91
      %s109 = sphi 0, %s109
      %s111 = sphi 0, %s109
      %s112 = sphi 0, %s111
      %s126 = sphi 0, %s112
      %s130 = sphi 0, %s130
      %s132 = sphi 0, %s130
      %s133 = sphi 0, %s132
      %s147 = sphi 0, %s133
      %s151 = sphi 0, %s151
      %s153 = sphi 0, %s151
      %s154 = sphi 0, %s153
      %s168 = sphi 0, %s154
      %s172 = sphi 0, %s172
      %s174 = sphi 0, %s172
      %s175 = sphi 0, %s174
      %s189 = sphi 0, %s175
      %s193 = sphi 0, %s193
      %s195 = sphi 0, %s193
      %s196 = sphi 0, %s195
      %s210 = sphi 0, %s196
      %s218 = sphi 0, %s220
      %s221 = sphi 0, %s218
      %s222 = sphi 0, %s221
      %s238 = sphi 0, %s222
    $region4: #{tpu_custom_call.1} parent=1 // loop_header_branch
      %22 = sbr.rel (%p20) target = $region8
    $region5: #{tpu_custom_call.1} parent=1 // loop_body
      %s24 = ssub.s32 %s19, 1
      %s25 = ssub.s32 %s19, 2
      %s32 = sadd.s32 1, %s27
      %p33 = scmp.ge.s32.totalorder %s32, 1
      %s34 = scalar_select %p33, 0, %s32
      %s35 = sadd.s32 1, %s26
      %s36 = scalar_select %p33, %s35, %s26
      %p37 = scmp.ge.s32.totalorder %s36, 2
      %s38 = scalar_select %p37, 0, %s36
      %s39 = ssub.s32 %s26, %s38
      %s40 = ssub.s32 %s27, %s34
      %s41 = sor.u32 %s39, %s40
      %p42 = scmp.eq.s32.totalorder %s41, 0
      %s44 = sadd.s32 %s43, 1
      %s45 = scalar_select %p42, %s43, %s44
      %p48 = pneg %p42
      %p49 = scmp.eq.s32.totalorder %s19, 1
      %p50 = por %p48, %p49
      %p51 = scmp.ne.s32.totalorder %s43, %s46
      %p52 = scmp.eq.s32.totalorder %s19, 0
      %p53 = por %p51, %p52
      %p54 = scmp.ne.s32.totalorder %s43, %s46
      %p55 = scmp.eq.s32.totalorder %s24, 1
      %p56 = por %p54, %p55
      %p57 = scmp.ne.s32.totalorder %s46, %s47
      %p58 = scmp.eq.s32.totalorder %s24, 0
      %p59 = por %p57, %p58
      %p60 = scmp.ne.s32.totalorder %s46, %s47
      %p61 = scmp.eq.s32.totalorder %s25, 1
      %p62 = por %p60, %p61
      %p64 = scmp.ne.s32.totalorder %s47, %s63
      %p65 = scmp.eq.s32.totalorder %s25, 0
      %p66 = por %p64, %p65
      %s68 = sadd.s32 %s67, 1
      %p71 = scmp.eq.s32.totalorder %s19, 1
      %p72 = scmp.ne.s32.totalorder %s67, %s69
      %p73 = scmp.eq.s32.totalorder %s19, 0
      %p74 = por %p72, %p73
      %p75 = scmp.ne.s32.totalorder %s67, %s69
      %p76 = scmp.eq.s32.totalorder %s24, 1
      %p77 = por %p75, %p76
      %p78 = scmp.ne.s32.totalorder %s69, %s70
      %p79 = scmp.eq.s32.totalorder %s24, 0
      %p80 = por %p78, %p79
      %p81 = scmp.ne.s32.totalorder %s69, %s70
      %p82 = scmp.eq.s32.totalorder %s25, 1
      %p83 = por %p81, %p82
      %p85 = scmp.ne.s32.totalorder %s70, %s84
      %p86 = scmp.eq.s32.totalorder %s25, 0
      %p87 = por %p85, %p86
      %s89 = sadd.s32 %s88, 1
      %p92 = scmp.eq.s32.totalorder %s19, 1
      %p93 = scmp.ne.s32.totalorder %s88, %s90
      %p94 = scmp.eq.s32.totalorder %s19, 0
      %p95 = por %p93, %p94
      %p96 = scmp.ne.s32.totalorder %s88, %s90
      %p97 = scmp.eq.s32.totalorder %s24, 1
      %p98 = por %p96, %p97
      %p99 = scmp.ne.s32.totalorder %s90, %s91
      %p100 = scmp.eq.s32.totalorder %s24, 0
      %p101 = por %p99, %p100
      %p102 = scmp.ne.s32.totalorder %s90, %s91
      %p103 = scmp.eq.s32.totalorder %s25, 1
      %p104 = por %p102, %p103
      %p106 = scmp.ne.s32.totalorder %s91, %s105
      %p107 = scmp.eq.s32.totalorder %s25, 0
      %p108 = por %p106, %p107
      %s110 = sadd.s32 %s109, 1
      %p113 = scmp.eq.s32.totalorder %s19, 1
      %p114 = scmp.ne.s32.totalorder %s109, %s111
      %p115 = scmp.eq.s32.totalorder %s19, 0
      %p116 = por %p114, %p115
      %p117 = scmp.ne.s32.totalorder %s109, %s111
      %p118 = scmp.eq.s32.totalorder %s24, 1
      %p119 = por %p117, %p118
      %p120 = scmp.ne.s32.totalorder %s111, %s112
      %p121 = scmp.eq.s32.totalorder %s24, 0
      %p122 = por %p120, %p121
      %p123 = scmp.ne.s32.totalorder %s111, %s112
      %p124 = scmp.eq.s32.totalorder %s25, 1
      %p125 = por %p123, %p124
      %p127 = scmp.ne.s32.totalorder %s112, %s126
      %p128 = scmp.eq.s32.totalorder %s25, 0
      %p129 = por %p127, %p128
      %s131 = sadd.s32 %s130, 1
      %p134 = scmp.eq.s32.totalorder %s19, 1
      %p135 = scmp.ne.s32.totalorder %s130, %s132
      %p136 = scmp.eq.s32.totalorder %s19, 0
      %p137 = por %p135, %p136
      %p138 = scmp.ne.s32.totalorder %s130, %s132
      %p139 = scmp.eq.s32.totalorder %s24, 1
      %p140 = por %p138, %p139
      %p141 = scmp.ne.s32.totalorder %s132, %s133
      %p142 = scmp.eq.s32.totalorder %s24, 0
      %p143 = por %p141, %p142
      %p144 = scmp.ne.s32.totalorder %s132, %s133
      %p145 = scmp.eq.s32.totalorder %s25, 1
      %p146 = por %p144, %p145
      %p148 = scmp.ne.s32.totalorder %s133, %s147
      %p149 = scmp.eq.s32.totalorder %s25, 0
      %p150 = por %p148, %p149
      %s152 = sadd.s32 %s151, 1
      %p155 = scmp.eq.s32.totalorder %s19, 1
      %p156 = scmp.ne.s32.totalorder %s151, %s153
      %p157 = scmp.eq.s32.totalorder %s19, 0
      %p158 = por %p156, %p157
      %p159 = scmp.ne.s32.totalorder %s151, %s153
      %p160 = scmp.eq.s32.totalorder %s24, 1
      %p161 = por %p159, %p160
      %p162 = scmp.ne.s32.totalorder %s153, %s154
      %p163 = scmp.eq.s32.totalorder %s24, 0
      %p164 = por %p162, %p163
      %p165 = scmp.ne.s32.totalorder %s153, %s154
      %p166 = scmp.eq.s32.totalorder %s25, 1
      %p167 = por %p165, %p166
      %p169 = scmp.ne.s32.totalorder %s154, %s168
      %p170 = scmp.eq.s32.totalorder %s25, 0
      %p171 = por %p169, %p170
      %s173 = sadd.s32 %s172, 1
      %p176 = scmp.eq.s32.totalorder %s19, 1
      %p177 = scmp.ne.s32.totalorder %s172, %s174
      %p178 = scmp.eq.s32.totalorder %s19, 0
      %p179 = por %p177, %p178
      %p180 = scmp.ne.s32.totalorder %s172, %s174
      %p181 = scmp.eq.s32.totalorder %s24, 1
      %p182 = por %p180, %p181
      %p183 = scmp.ne.s32.totalorder %s174, %s175
      %p184 = scmp.eq.s32.totalorder %s24, 0
      %p185 = por %p183, %p184
      %p186 = scmp.ne.s32.totalorder %s174, %s175
      %p187 = scmp.eq.s32.totalorder %s25, 1
      %p188 = por %p186, %p187
      %p190 = scmp.ne.s32.totalorder %s175, %s189
      %p191 = scmp.eq.s32.totalorder %s25, 0
      %p192 = por %p190, %p191
      %s194 = sadd.s32 %s193, 1
      %p197 = scmp.eq.s32.totalorder %s19, 1
      %p198 = scmp.ne.s32.totalorder %s193, %s195
      %p199 = scmp.eq.s32.totalorder %s19, 0
      %p200 = por %p198, %p199
      %p201 = scmp.ne.s32.totalorder %s193, %s195
      %p202 = scmp.eq.s32.totalorder %s24, 1
      %p203 = por %p201, %p202
      %p204 = scmp.ne.s32.totalorder %s195, %s196
      %p205 = scmp.eq.s32.totalorder %s24, 0
      %p206 = por %p204, %p205
      %p207 = scmp.ne.s32.totalorder %s195, %s196
      %p208 = scmp.eq.s32.totalorder %s25, 1
      %p209 = por %p207, %p208
      %p211 = scmp.ne.s32.totalorder %s196, %s210
      %p212 = scmp.eq.s32.totalorder %s25, 0
      %p213 = por %p211, %p212
      %s214 = ssub.s32 %s26, %s38
      %s215 = ssub.s32 %s27, %s34
      %s216 = sor.u32 %s214, %s215
      %p217 = scmp.eq.s32.totalorder %s216, 0
      %s219 = sadd.s32 %s218, 1
      %s220 = scalar_select %p217, %s218, %s219
      %p223 = pneg %p217
      %p224 = scmp.eq.s32.totalorder %s19, 1
      %p225 = por %p223, %p224
      %p226 = scmp.ne.s32.totalorder %s218, %s221
      %p227 = scmp.eq.s32.totalorder %s19, 0
      %p228 = por %p226, %p227
      %p229 = scmp.ne.s32.totalorder %s218, %s221
      %p230 = scmp.eq.s32.totalorder %s24, 1
      %p231 = por %p229, %p230
      %p232 = scmp.ne.s32.totalorder %s221, %s222
      %p233 = scmp.eq.s32.totalorder %s24, 0
      %p234 = por %p232, %p233
      %p235 = scmp.ne.s32.totalorder %s221, %s222
      %p236 = scmp.eq.s32.totalorder %s25, 1
      %p237 = por %p235, %p236
      %p239 = scmp.ne.s32.totalorder %s222, %s238
      %p240 = scmp.eq.s32.totalorder %s25, 0
      %p241 = por %p239, %p240
      %p242 = scmp.le.s32.totalorder 1, %s19
      %p243 = scmp.lt.s32.totalorder %s19, 3
      %p244 = pnand %p242, %p243
      %p245 = pneg %p244
      // Predicated region
      $region9: #{tpu_custom_call.1} parent=5 // pred_check
        _
      $region10: #{tpu_custom_call.1} parent=5 // pred_check_branch
        %247 = sbr.rel (%p244) target = $region12
      $region11: #{tpu_custom_call.1} parent=5 // pred_region
        %s248 = ssub.s32 %s19, 1
        // Predicated region
        $region13: #{tpu_custom_call.1} parent=11 // pred_check
          %p249 = pneg %p80
        $region14: #{tpu_custom_call.1} parent=11 // pred_check_branch
          %251 = sbr.rel (%p249) target = $region16
        $region15: #{tpu_custom_call.1} parent=11 // pred_region
          _
        $region16: #{tpu_custom_call.1} parent=11 // pred_fallthru
          _
        // Predicated region
        $region17: #{tpu_custom_call.1} parent=11 // pred_check
          %p252 = pneg %p101
        $region18: #{tpu_custom_call.1} parent=11 // pred_check_branch
          %254 = sbr.rel (%p252) target = $region20
        $region19: #{tpu_custom_call.1} parent=11 // pred_region
          _
        $region20: #{tpu_custom_call.1} parent=11 // pred_fallthru
          _
        // Predicated region
        $region21: #{tpu_custom_call.1} parent=11 // pred_check
          %p255 = pneg %p122
        $region22: #{tpu_custom_call.1} parent=11 // pred_check_branch
          %257 = sbr.rel (%p255) target = $region24
        $region23: #{tpu_custom_call.1} parent=11 // pred_region
          %s259 = ssub.s32 9216, 9216
          %260 = vsyncadd [#allocation5], %s259
          %s261 = sshll.u32 [#allocation4], 4
          %s262 = int_to_ptr.vmem [resolvable:$true] %s261
          %267 = dma.hbm_to_vmem [thread:$0]  %s3, 9216, %s262, [#allocation5], 64, 64, 4
        $region24: #{tpu_custom_call.1} parent=11 // pred_fallthru
          _
        // Predicated region
        $region25: #{tpu_custom_call.1} parent=11 // pred_check
          %p268 = pneg %p143
        $region26: #{tpu_custom_call.1} parent=11 // pred_check_branch
          %270 = sbr.rel (%p268) target = $region28
        $region27: #{tpu_custom_call.1} parent=11 // pred_region
          _
        $region28: #{tpu_custom_call.1} parent=11 // pred_fallthru
          _
        // Predicated region
        $region29: #{tpu_custom_call.1} parent=11 // pred_check
          %p271 = pneg %p164
        $region30: #{tpu_custom_call.1} parent=11 // pred_check_branch
          %273 = sbr.rel (%p271) target = $region32
        $region31: #{tpu_custom_call.1} parent=11 // pred_region
          %s275 = ssub.s32 5120, 5120
          %276 = vsyncadd [#allocation8], %s275
          %s277 = sshll.u32 [#allocation7], 4
          %s278 = int_to_ptr.vmem [resolvable:$true] %s277
          %283 = dma.hbm_to_vmem [thread:$0]  %s5, 5120, %s278, [#allocation8], 64, 64, 4
        $region32: #{tpu_custom_call.1} parent=11 // pred_fallthru
          _
        // Predicated region
        $region33: #{tpu_custom_call.1} parent=11 // pred_check
          %p284 = pneg %p185
        $region34: #{tpu_custom_call.1} parent=11 // pred_check_branch
          %286 = sbr.rel (%p284) target = $region36
        $region35: #{tpu_custom_call.1} parent=11 // pred_region
          _
        $region36: #{tpu_custom_call.1} parent=11 // pred_fallthru
          _
        // Predicated region
        $region37: #{tpu_custom_call.1} parent=11 // pred_check
          %p287 = pneg %p206
        $region38: #{tpu_custom_call.1} parent=11 // pred_check_branch
          %289 = sbr.rel (%p287) target = $region40
        $region39: #{tpu_custom_call.1} parent=11 // pred_region
          _
        $region40: #{tpu_custom_call.1} parent=11 // pred_fallthru
          _
      $region12: #{tpu_custom_call.1} parent=5 // pred_fallthru
        _
      %p290 = scmp.lt.s32.totalorder %s19, 2
      // Predicated region
      $region41: #{tpu_custom_call.1} parent=5 // pred_check
        %p291 = pneg %p290
      $region42: #{tpu_custom_call.1} parent=5 // pred_check_branch
        %293 = sbr.rel (%p291) target = $region44
      $region43: #{tpu_custom_call.1} parent=5 // pred_region
        // Predicated region
        $region45: #{tpu_custom_call.1} parent=43 // pred_check
          %p294 = pneg %p53
        $region46: #{tpu_custom_call.1} parent=43 // pred_check_branch
          %296 = sbr.rel (%p294) target = $region48
        $region47: #{tpu_custom_call.1} parent=43 // pred_region
          %p297 = scmp.lt.s32.totalorder %s26, 1
          %s298 = scalar_select %p297, %s26, 1
          %p299 = scmp.lt.s32.totalorder %s27, 0
          %s300 = scalar_select %p299, %s27, 0
          %s301 = smul.addr %s300, 14
          %s302 = smul.addr %s298, 14
          %s303 = sadd.s32 %s301, %s302
          %s304 = smul.addr %s303, 8
          %s305 = scalar_lea.vmem %s0, %s304
        $region48: #{tpu_custom_call.1} parent=43 // pred_fallthru
          _
      $region44: #{tpu_custom_call.1} parent=5 // pred_fallthru
        _
      %p306 = scmp.le.s32.totalorder 1, %s19
      %p307 = scmp.lt.s32.totalorder %s19, 3
      %p308 = pnand %p306, %p307
      %p309 = pneg %p308
      // Predicated region
      $region49: #{tpu_custom_call.1} parent=5 // pred_check
        _
      $region50: #{tpu_custom_call.1} parent=5 // pred_check_branch
        %311 = sbr.rel (%p308) target = $region52
      $region51: #{tpu_custom_call.1} parent=5 // pred_region
        %s312 = ssub.s32 %s19, 1
        // Predicated region
        $region53: #{tpu_custom_call.1} parent=51 // pred_check
          %p313 = pneg %p122
        $region54: #{tpu_custom_call.1} parent=51 // pred_check_branch
          %315 = sbr.rel (%p313) target = $region56
        $region55: #{tpu_custom_call.1} parent=51 // pred_region
          %316 = dma.done [#allocation5], 9216
        $region56: #{tpu_custom_call.1} parent=51 // pred_fallthru
          _
        // Predicated region
        $region57: #{tpu_custom_call.1} parent=51 // pred_check
          %p317 = pneg %p164
        $region58: #{tpu_custom_call.1} parent=51 // pred_check_branch
          %319 = sbr.rel (%p317) target = $region60
        $region59: #{tpu_custom_call.1} parent=51 // pred_region
          %320 = dma.done [#allocation8], 5120
        $region60: #{tpu_custom_call.1} parent=51 // pred_fallthru
          _
        %p321 = scmp.lt.s32.totalorder %s28, 1
        %s322 = scalar_select %p321, %s28, 1
        %p323 = scmp.lt.s32.totalorder %s29, 0
        %s324 = scalar_select %p323, %s29, 0
        %s325 = smul.addr %s324, 14
        %s326 = smul.addr %s322, 14
        %s327 = sadd.s32 %s325, %s326
        %s328 = smul.addr %s327, 8
        %s329 = scalar_lea.vmem %s0, %s328
        %p330 = pneg %p59
        %p331 = pneg %p56
        %p332 = pneg %p80
        %p333 = pneg %p77
        %p334 = pneg %p101
        %p335 = pneg %p98
        %p336 = pneg %p122
        %p337 = pneg %p119
        %p338 = pneg %p143
        %p339 = pneg %p140
        %p340 = pneg %p164
        %p341 = pneg %p161
        %p342 = pneg %p185
        %p343 = pneg %p182
        %p344 = pneg %p206
        %p345 = pneg %p203
        %p346 = pneg %p234
        %p347 = pneg %p231
        %s348 = sand.u32 %s221, 1
        %s349 = scalar_lea.sflag [#allocation6], %s348
        %s350 = sand.u32 %s221, 1
        %s351 = smul.addr %s350, 8
        %s352 = scalar_lea.vmem [#allocation9], %s351
        %p353 = scmp.lt.s32.totalorder %s28, 1
        %s354 = scalar_select %p353, %s28, 1
        %p355 = scmp.lt.s32.totalorder %s29, 0
        %s356 = scalar_select %p355, %s29, 0
        %s357 = smul.addr %s356, 14
        %s358 = smul.addr %s354, 14
        %s359 = sadd.s32 %s357, %s358
        %s360 = smul.addr %s359, 8
        %s361 = scalar_lea.vmem %s0, %s360
        %v363 = vld [vmem:[%s361] sm:$0xff]
        %v364 = vld [vmem:[%s361 + $0x8] sm:$0xff]
        %v365 = vld [vmem:[%s361 + $0x10] sm:$0xff]
        %v366 = vld [vmem:[%s361 + $0x18] sm:$0xff]
        %v367 = vld [vmem:[%s361 + $0x20] sm:$0xff]
        %v368 = vld [vmem:[%s361 + $0x28] sm:$0xff]
        %v369 = vld [vmem:[%s361 + $0x30] sm:$0xff]
        %v370 = vld [vmem:[%s361 + $0x38] sm:$0xff]
        %v371 = vld [vmem:[%s361 + $0x40] sm:$0xff]
        %v372 = vld [vmem:[%s361 + $0x48] sm:$0xff]
        %v373 = vld [vmem:[%s361 + $0x50] sm:$0xff]
        %v374 = vld [vmem:[%s361 + $0x58] sm:$0xff]
        %v375 = vld [vmem:[%s361 + $0x60] sm:$0xff]
        %v376 = vld [vmem:[%s361 + $0x68] sm:$0xff]
        %v377 = vld [vmem:[%s1] sm:$0xff]
        %v378 = vld [vmem:[%s1 + $0x8] sm:$0x1]
        %v379 = vld [vmem:[%s2] sm:$0x1]
        %v381 = vlaneseq
        %v382 = vshrl.u32 %v381, 7
        %v383 = vsub.s32 0, %v382
        %v384 = vrot.slane %v379, %v383
        %vm386 = vcmask 72704
        %v388 = vsel %vm386, %v363, 0
        %v391 = vsel %vm386, %v364, 0
        %v394 = vsel %vm386, %v365, 0
        %v397 = vsel %vm386, %v366, 0
        %v400 = vsel %vm386, %v367, 0
        %v403 = vsel %vm386, %v368, 0
        %v406 = vsel %vm386, %v369, 0
        %v409 = vsel %vm386, %v370, 0
        %v412 = vsel %vm386, %v371, 0
        %v415 = vsel %vm386, %v372, 0
        %v418 = vsel %vm386, %v373, 0
        %v421 = vsel %vm386, %v374, 0
        %v424 = vsel %vm386, %v375, 0
        %v427 = vsel %vm386, %v376, 0
        %vm429 = vcmask 1040384
        %v431 = vsel %vm429, %v378, 0
        %433 = vmatprep.subr.mxu0 0.0
        %434 = vmatpush1.msra.mxu0 %v377
        %435 = vmatprep.subr.mxu0 0.0
        %436 = vmatpush1.msra.mxu0 %v431
        %437 = vmatprep.subr.mxu0 0.0
        %438 = vmatpush1.msra.mxu0 0.0
        %439 = vmatprep.subr.mxu0 0.0
        %440 = vmatpush1.msra.mxu0 0.0
        %441 = vmatprep.subr.mxu0 0.0
        %442 = vmatpush1.msra.mxu0 0.0
        %443 = vmatprep.subr.mxu0 0.0
        %444 = vmatpush1.msra.mxu0 0.0
        %445 = vmatprep.subr.mxu0 0.0
        %446 = vmatpush1.msra.mxu0 0.0
        %447 = vmatprep.subr.mxu0 0.0
        %448 = vmatpush1.msra.mxu0 0.0
        %449 = vmatprep.subr.mxu0 0.0
        %450 = vmatpush1.msra.mxu0 0.0
        %451 = vmatprep.subr.mxu0 0.0
        %452 = vmatpush1.msra.mxu0 0.0
        %453 = vmatprep.subr.mxu0 0.0
        %454 = vmatpush1.msra.mxu0 0.0
        %455 = vmatprep.subr.mxu0 0.0
        %456 = vmatpush1.msra.mxu0 0.0
        %457 = vmatprep.subr.mxu0 0.0
        %458 = vmatpush1.msra.mxu0 0.0
        %459 = vmatprep.subr.mxu0 0.0
        %460 = vmatpush1.msra.mxu0 0.0
        %461 = vmatprep.subr.mxu0 0.0
        %462 = vmatpush1.msra.mxu0 0.0
        %463 = vmatprep.subr.mxu0 0.0
        %464 = vmatpush1.msra.mxu0 0.0
        %465 = vmatprep.subr.mxu0 0.0
        %466 = vmatpush1.msra.mxu0 0.0
        %467 = vmatprep.subr.mxu0 0.0
        %468 = vmatpush1.msra.mxu0 0.0
        %469 = vmatprep.subr.mxu0 0.0
        %470 = vmatpush1.msra.mxu0 0.0
        %471 = vmatprep.subr.mxu0 0.0
        %472 = vmatpush1.msra.mxu0 0.0
        %473 = vmatprep.subr.mxu0 0.0
        %474 = vmatpush1.msra.mxu0 0.0
        %475 = vmatprep.subr.mxu0 0.0
        %476 = vmatpush1.msra.mxu0 0.0
        %477 = vmatprep.subr.mxu0 0.0
        %478 = vmatpush1.msra.mxu0 0.0
        %479 = vmatprep.subr.mxu0 0.0
        %480 = vmatpush1.msra.mxu0 0.0
        %481 = vmatprep.subr.mxu0 0.0
        %482 = vmatpush1.msra.mxu0 0.0
        %483 = vmatprep.subr.mxu0 0.0
        %484 = vmatpush1.msra.mxu0 0.0
        %485 = vmatprep.subr.mxu0 0.0
        %486 = vmatpush1.msra.mxu0 0.0
        %487 = vmatprep.subr.mxu0 0.0
        %488 = vmatpush1.msra.mxu0 0.0
        %489 = vmatprep.subr.mxu0 0.0
        %490 = vmatpush1.msra.mxu0 0.0
        %491 = vmatprep.subr.mxu0 0.0
        %492 = vmatpush1.msra.mxu0 0.0
        %493 = vmatprep.subr.mxu0 0.0
        %494 = vmatpush1.msra.mxu0 0.0
        %495 = vmatprep.subr.mxu0 0.0
        %496 = vmatpush1.msra.mxu0 0.0
        %497 = vmatprep.mubr.f32.mxu0 0.0
        %498 = vmatmul.mubr.f32.gmra.mrb[0].mxu0 %v388
        %v499 = vpop.f32.mrb[0].mxu0
        %v500 = vadd.f32 %v384, %v499
        %v501 = vpop.f32.mrb[0].mxu0
        %502 = vmatprep.mubr.f32.mxu0 0.0
        %503 = vmatmul.mubr.f32.gmra.mrb[0].mxu0 %v391
        %v504 = vpop.f32.mrb[0].mxu0
        %v505 = vadd.f32 %v384, %v504
        %v506 = vpop.f32.mrb[0].mxu0
        %507 = vmatprep.mubr.f32.mxu0 0.0
        %508 = vmatmul.mubr.f32.gmra.mrb[0].mxu0 %v394
        %v509 = vpop.f32.mrb[0].mxu0
        %v510 = vadd.f32 %v384, %v509
        %v511 = vpop.f32.mrb[0].mxu0
        %512 = vmatprep.mubr.f32.mxu0 0.0
        %513 = vmatmul.mubr.f32.gmra.mrb[0].mxu0 %v397
        %v514 = vpop.f32.mrb[0].mxu0
        %v515 = vadd.f32 %v384, %v514
        %v516 = vpop.f32.mrb[0].mxu0
        %517 = vmatprep.mubr.f32.mxu0 0.0
        %518 = vmatmul.mubr.f32.gmra.mrb[0].mxu0 %v400
        %v519 = vpop.f32.mrb[0].mxu0
        %v520 = vadd.f32 %v384, %v519
        %v521 = vpop.f32.mrb[0].mxu0
        %522 = vmatprep.mubr.f32.mxu0 0.0
        %523 = vmatmul.mubr.f32.gmra.mrb[0].mxu0 %v403
        %v524 = vpop.f32.mrb[0].mxu0
        %v525 = vadd.f32 %v384, %v524
        %v526 = vpop.f32.mrb[0].mxu0
        %527 = vmatprep.mubr.f32.mxu0 0.0
        %528 = vmatmul.mubr.f32.gmra.mrb[0].mxu0 %v406
        %v529 = vpop.f32.mrb[0].mxu0
        %v530 = vadd.f32 %v384, %v529
        %v531 = vpop.f32.mrb[0].mxu0
        %532 = vmatprep.mubr.f32.mxu0 0.0
        %533 = vmatmul.mubr.f32.gmra.mrb[0].mxu0 %v409
        %v534 = vpop.f32.mrb[0].mxu0
        %v535 = vadd.f32 %v384, %v534
        %v536 = vpop.f32.mrb[0].mxu0
        %537 = vmatprep.mubr.f32.mxu0 0.0
        %538 = vmatmul.mubr.f32.gmra.mrb[0].mxu0 %v412
        %v539 = vpop.f32.mrb[0].mxu0
        %v540 = vadd.f32 %v384, %v539
        %v541 = vpop.f32.mrb[0].mxu0
        %542 = vmatprep.mubr.f32.mxu0 0.0
        %543 = vmatmul.mubr.f32.gmra.mrb[0].mxu0 %v415
        %v544 = vpop.f32.mrb[0].mxu0
        %v545 = vadd.f32 %v384, %v544
        %v546 = vpop.f32.mrb[0].mxu0
        %547 = vmatprep.mubr.f32.mxu0 0.0
        %548 = vmatmul.mubr.f32.gmra.mrb[0].mxu0 %v418
        %v549 = vpop.f32.mrb[0].mxu0
        %v550 = vadd.f32 %v384, %v549
        %v551 = vpop.f32.mrb[0].mxu0
        %552 = vmatprep.mubr.f32.mxu0 0.0
        %553 = vmatmul.mubr.f32.gmra.mrb[0].mxu0 %v421
        %v554 = vpop.f32.mrb[0].mxu0
        %v555 = vadd.f32 %v384, %v554
        %v556 = vpop.f32.mrb[0].mxu0
        %557 = vmatprep.mubr.f32.mxu0 0.0
        %558 = vmatmul.mubr.f32.gmra.mrb[0].mxu0 %v424
        %v559 = vpop.f32.mrb[0].mxu0
        %v560 = vadd.f32 %v384, %v559
        %v561 = vpop.f32.mrb[0].mxu0
        %562 = vmatprep.mubr.f32.mxu0 0.0
        %563 = vmatmul.mubr.f32.gmra.mrb[0].mxu0 %v427
        %v564 = vpop.f32.mrb[0].mxu0
        %v565 = vadd.f32 %v384, %v564
        %v566 = vpop.f32.mrb[0].mxu0
        %567 = vdwg.mxu0
        %v568 = vmax.f32 %v500, 0.0
        %v569 = vmax.f32 %v505, 0.0
        %v570 = vmax.f32 %v510, 0.0
        %v571 = vmax.f32 %v515, 0.0
        %v572 = vmax.f32 %v520, 0.0
        %v573 = vmax.f32 %v525, 0.0
        %v574 = vmax.f32 %v530, 0.0
        %v575 = vmax.f32 %v535, 0.0
        %v576 = vmax.f32 %v540, 0.0
        %v577 = vmax.f32 %v545, 0.0
        %v578 = vmax.f32 %v550, 0.0
        %v579 = vmax.f32 %v555, 0.0
        %v580 = vmax.f32 %v560, 0.0
        %v581 = vmax.f32 %v565, 0.0
        %v582 = vpack.c.bf16 %v569, %v568
        %v583 = vpack.c.bf16 %v571, %v570
        %v584 = vpack.c.bf16 %v573, %v572
        %v585 = vpack.c.bf16 %v575, %v574
        %v586 = vpack.c.bf16 %v577, %v576
        %v587 = vpack.c.bf16 %v579, %v578
        %v588 = vpack.c.bf16 %v581, %v580
        %v596 = vunpack.c.l.b16 %v582
        %v597 = vunpack.c.h.b16 %v582
        %v598 = vunpack.c.l.b16 %v583
        %v599 = vunpack.c.h.b16 %v583
        %v600 = vunpack.c.l.b16 %v584
        %v601 = vunpack.c.h.b16 %v584
        %v602 = vunpack.c.l.b16 %v585
        %v603 = vunpack.c.h.b16 %v585
        %v604 = vunpack.c.l.b16 %v586
        %v605 = vunpack.c.h.b16 %v586
        %v606 = vunpack.c.l.b16 %v587
        %v607 = vunpack.c.h.b16 %v587
        %v608 = vunpack.c.l.b16 %v588
        %v609 = vunpack.c.h.b16 %v588
        %v610 = vpack.c.b16 %v596, %v596
        %v611 = vpack.c.b16 %v597, %v597
        %v612 = vpack.c.b16 %v598, %v598
        %v613 = vpack.c.b16 %v599, %v599
        %v614 = vpack.c.b16 %v600, %v600
        %v615 = vpack.c.b16 %v601, %v601
        %v616 = vpack.c.b16 %v602, %v602
        %v617 = vpack.c.b16 %v603, %v603
        %v618 = vpack.c.b16 %v604, %v604
        %v619 = vpack.c.b16 %v605, %v605
        %v620 = vpack.c.b16 %v606, %v606
        %v621 = vpack.c.b16 %v607, %v607
        %v622 = vpack.c.b16 %v608, %v608
        %v623 = vpack.c.b16 %v609, %v609
        %638 = vst [vmem:[#allocation2] sm:$0xf] %v610
        %639 = vst [vmem:[#allocation2 + $0x4] sm:$0xf] %v611
        %640 = vst [vmem:[#allocation2 + $0x8] sm:$0xf] %v612
        %641 = vst [vmem:[#allocation2 + $0xc] sm:$0xf] %v613
        %642 = vst [vmem:[#allocation2 + $0x10] sm:$0xf] %v614
        %643 = vst [vmem:[#allocation2 + $0x14] sm:$0xf] %v615
        %644 = vst [vmem:[#allocation2 + $0x18] sm:$0xf] %v616
        %645 = vst [vmem:[#allocation2 + $0x1c] sm:$0xf] %v617
        %646 = vst [vmem:[#allocation2 + $0x20] sm:$0xf] %v618
        %647 = vst [vmem:[#allocation2 + $0x24] sm:$0xf] %v619
        %648 = vst [vmem:[#allocation2 + $0x28] sm:$0xf] %v620
        %649 = vst [vmem:[#allocation2 + $0x2c] sm:$0xf] %v621
        %650 = vst [vmem:[#allocation2 + $0x30] sm:$0xf] %v622
        %651 = vst [vmem:[#allocation2 + $0x34] sm:$0xf] %v623
        %652 = vst [vmem:[#allocation2 + $0x38] sm:$0xf] 0
        %v653 = vld [vmem:[%s4] sm:$0x1]
        %v655 = vlaneseq
        %v656 = vshrl.u32 %v655, 7
        %v657 = vsub.s32 0, %v656
        %v658 = vrot.slane %v653, %v657
        %660 = vst [vmem:[#allocation3] sm:$0xff] %v658
        %661 = vst [vmem:[#allocation3 + $0x8] sm:$0xff] %v658
        %662 = vst [vmem:[#allocation3 + $0x10] sm:$0xff] %v658
        %663 = vst [vmem:[#allocation3 + $0x18] sm:$0xff] %v658
        %664 = vst [vmem:[#allocation3 + $0x20] sm:$0xff] %v658
        %665 = vst [vmem:[#allocation3 + $0x28] sm:$0xff] %v658
        %666 = vst [vmem:[#allocation3 + $0x30] sm:$0xff] %v658
        %667 = vst [vmem:[#allocation3 + $0x38] sm:$0xff] %v658
        %668 = vst [vmem:[#allocation3 + $0x40] sm:$0xff] %v658
        %669 = vst [vmem:[#allocation3 + $0x48] sm:$0xff] %v658
        %v670 = vld [vmem:[#allocation2] sm:$0xf]
        %v671 = vld [vmem:[#allocation2 + $0x4] sm:$0xf]
        %v672 = vld [vmem:[#allocation2 + $0x8] sm:$0xf]
        %v673 = vld [vmem:[#allocation2 + $0xc] sm:$0xf]
        %v674 = vld [vmem:[#allocation2 + $0x10] sm:$0xf]
        %v675 = vld [vmem:[#allocation2 + $0x14] sm:$0xf]
        %v676 = vld [vmem:[#allocation2 + $0x18] sm:$0xf]
        %v677 = vld [vmem:[#allocation2 + $0x1c] sm:$0xf]
        %v678 = vld [vmem:[#allocation2 + $0x20] sm:$0xf]
        %v679 = vld [vmem:[#allocation2 + $0x24] sm:$0xf]
        %v680 = vld [vmem:[#allocation3] sm:$0xff]
        %v681 = vld [vmem:[#allocation3 + $0x8] sm:$0xff]
        %v682 = vld [vmem:[#allocation3 + $0x10] sm:$0xff]
        %v683 = vld [vmem:[#allocation3 + $0x18] sm:$0xff]
        %v684 = vld [vmem:[#allocation3 + $0x20] sm:$0xff]
        %v685 = vld [vmem:[#allocation3 + $0x28] sm:$0xff]
        %v686 = vld [vmem:[#allocation3 + $0x30] sm:$0xff]
        %v687 = vld [vmem:[#allocation3 + $0x38] sm:$0xff]
        %v688 = vld [vmem:[#allocation3 + $0x40] sm:$0xff]
        %v689 = vld [vmem:[#allocation3 + $0x48] sm:$0xff]
        %v690 = vld [vmem:[#allocation4] sm:$0xf]
        %v691 = vld [vmem:[#allocation4 + $0x4] sm:$0xf]
        %v692 = vld [vmem:[#allocation4 + $0x8] sm:$0xf]
        %v693 = vld [vmem:[#allocation4 + $0xc] sm:$0xf]
        %v694 = vld [vmem:[#allocation4 + $0x10] sm:$0xf]
        %v695 = vld [vmem:[#allocation4 + $0x14] sm:$0xf]
        %v696 = vld [vmem:[#allocation4 + $0x18] sm:$0xf]
        %v697 = vld [vmem:[#allocation4 + $0x1c] sm:$0xf]
        %v698 = vld [vmem:[#allocation4 + $0x20] sm:$0xf]
        %v699 = vld [vmem:[#allocation4 + $0x24] sm:$0xf]
        %v700 = vld [vmem:[#allocation4 + $0x28] sm:$0xf]
        %v701 = vld [vmem:[#allocation4 + $0x2c] sm:$0xf]
        %v702 = vld [vmem:[#allocation4 + $0x30] sm:$0xf]
        %v703 = vld [vmem:[#allocation4 + $0x34] sm:$0xf]
        %v704 = vld [vmem:[#allocation4 + $0x38] sm:$0xf]
        %v705 = vld [vmem:[#allocation4 + $0x3c] sm:$0xf]
        %v716 = vunpack.c.l.b16 %v670
        %v717 = vunpack.c.l.b16 %v671
        %v718 = vunpack.c.l.b16 %v672
        %v719 = vunpack.c.l.b16 %v673
        %v720 = vunpack.c.l.b16 %v674
        %v721 = vunpack.c.l.b16 %v675
        %v722 = vunpack.c.l.b16 %v676
        %v723 = vunpack.c.l.b16 %v677
        %v724 = vunpack.c.l.b16 %v678
        %v725 = vunpack.c.l.b16 %v679
        %v726 = vpack.c.b16 %v717, %v716
        %v727 = vpack.c.b16 %v719, %v718
        %v728 = vpack.c.b16 %v721, %v720
        %v729 = vpack.c.b16 %v723, %v722
        %v730 = vpack.c.b16 %v725, %v724
        %v752 = vunpack.c.l.b16 %v690
        %v753 = vunpack.c.l.b16 %v691
        %v754 = vunpack.c.l.b16 %v692
        %v755 = vunpack.c.l.b16 %v693
        %v756 = vunpack.c.l.b16 %v694
        %v757 = vunpack.c.l.b16 %v695
        %v758 = vunpack.c.l.b16 %v696
        %v759 = vunpack.c.l.b16 %v697
        %v760 = vunpack.c.l.b16 %v698
        %v761 = vunpack.c.l.b16 %v699
        %v762 = vunpack.c.l.b16 %v700
        %v763 = vunpack.c.l.b16 %v701
        %v764 = vunpack.c.l.b16 %v702
        %v765 = vunpack.c.l.b16 %v703
        %v766 = vunpack.c.l.b16 %v704
        %v767 = vunpack.c.l.b16 %v705
        %v768 = vpack.c.b16 %v753, %v752
        %v769 = vpack.c.b16 %v755, %v754
        %v770 = vpack.c.b16 %v757, %v756
        %v771 = vpack.c.b16 %v759, %v758
        %v772 = vpack.c.b16 %v761, %v760
        %v773 = vpack.c.b16 %v763, %v762
        %v774 = vpack.c.b16 %v765, %v764
        %v775 = vpack.c.b16 %v767, %v766
        %784 = vmatprep.subr.bf16.mxu0 0
        %785 = vmatpush1.bf16.msra.mxu0 %v768
        %786 = vmatprep.subr.bf16.mxu0 0
        %787 = vmatpush1.bf16.msra.mxu0 %v769
        %788 = vmatprep.subr.bf16.mxu0 0
        %789 = vmatpush1.bf16.msra.mxu0 %v770
        %790 = vmatprep.subr.bf16.mxu0 0
        %791 = vmatpush1.bf16.msra.mxu0 %v771
        %792 = vmatprep.subr.bf16.mxu0 0
        %793 = vmatpush1.bf16.msra.mxu0 %v772
        %794 = vmatprep.subr.bf16.mxu0 0
        %795 = vmatpush1.bf16.msra.mxu0 %v773
        %796 = vmatprep.subr.bf16.mxu0 0
        %797 = vmatpush1.bf16.msra.mxu0 %v774
        %798 = vmatprep.subr.bf16.mxu0 0
        %799 = vmatpush1.bf16.msra.mxu0 %v775
        %800 = vmatprep.subr.bf16.mxu0 0
        %801 = vmatpush1.bf16.msra.mxu0 0
        %802 = vmatprep.subr.bf16.mxu0 0
        %803 = vmatpush1.bf16.msra.mxu0 0
        %804 = vmatprep.subr.bf16.mxu0 0
        %805 = vmatpush1.bf16.msra.mxu0 0
        %806 = vmatprep.subr.bf16.mxu0 0
        %807 = vmatpush1.bf16.msra.mxu0 0
        %808 = vmatprep.subr.bf16.mxu0 0
        %809 = vmatpush1.bf16.msra.mxu0 0
        %810 = vmatprep.subr.bf16.mxu0 0
        %811 = vmatpush1.bf16.msra.mxu0 0
        %812 = vmatprep.subr.bf16.mxu0 0
        %813 = vmatpush1.bf16.msra.mxu0 0
        %814 = vmatprep.subr.bf16.mxu0 0
        %815 = vmatpush1.bf16.msra.mxu0 0
        %816 = vmatprep.mubr.bf16.mxu0 0
        %817 = vmatmul.mubr.bf16.gmra.mrb[0].mxu0 %v726
        %v818 = vpop.f32.mrb[0].mxu0
        %v819 = vadd.f32 0.0, %v818
        %v820 = vpop.f32.mrb[0].mxu0
        %v821 = vpop.f32.mrb[0].mxu0
        %v822 = vadd.f32 0.0, %v821
        %v823 = vpop.f32.mrb[0].mxu0
        %824 = vmatprep.mubr.bf16.mxu0 0
        %825 = vmatmul.mubr.bf16.gmra.mrb[0].mxu0 %v727
        %v826 = vpop.f32.mrb[0].mxu0
        %v827 = vadd.f32 0.0, %v826
        %v828 = vpop.f32.mrb[0].mxu0
        %v829 = vpop.f32.mrb[0].mxu0
        %v830 = vadd.f32 0.0, %v829
        %v831 = vpop.f32.mrb[0].mxu0
        %832 = vmatprep.mubr.bf16.mxu0 0
        %833 = vmatmul.mubr.bf16.gmra.mrb[0].mxu0 %v728
        %v834 = vpop.f32.mrb[0].mxu0
        %v835 = vadd.f32 0.0, %v834
        %v836 = vpop.f32.mrb[0].mxu0
        %v837 = vpop.f32.mrb[0].mxu0
        %v838 = vadd.f32 0.0, %v837
        %v839 = vpop.f32.mrb[0].mxu0
        %840 = vmatprep.mubr.bf16.mxu0 0
        %841 = vmatmul.mubr.bf16.gmra.mrb[0].mxu0 %v729
        %v842 = vpop.f32.mrb[0].mxu0
        %v843 = vadd.f32 0.0, %v842
        %v844 = vpop.f32.mrb[0].mxu0
        %v845 = vpop.f32.mrb[0].mxu0
        %v846 = vadd.f32 0.0, %v845
        %v847 = vpop.f32.mrb[0].mxu0
        %848 = vmatprep.mubr.bf16.mxu0 0
        %849 = vmatmul.mubr.bf16.gmra.mrb[0].mxu0 %v730
        %v850 = vpop.f32.mrb[0].mxu0
        %v851 = vadd.f32 0.0, %v850
        %v852 = vpop.f32.mrb[0].mxu0
        %v853 = vpop.f32.mrb[0].mxu0
        %v854 = vadd.f32 0.0, %v853
        %v855 = vpop.f32.mrb[0].mxu0
        %856 = vdwg.mxu0
        %v857 = vadd.f32 %v680, %v819
        %v858 = vadd.f32 %v681, %v822
        %v859 = vadd.f32 %v682, %v827
        %v860 = vadd.f32 %v683, %v830
        %v861 = vadd.f32 %v684, %v835
        %v862 = vadd.f32 %v685, %v838
        %v863 = vadd.f32 %v686, %v843
        %v864 = vadd.f32 %v687, %v846
        %v865 = vadd.f32 %v688, %v851
        %v866 = vadd.f32 %v689, %v854
        %867 = vst [vmem:[#allocation3] sm:$0xff] %v857
        %868 = vst [vmem:[#allocation3 + $0x8] sm:$0xff] %v858
        %869 = vst [vmem:[#allocation3 + $0x10] sm:$0xff] %v859
        %870 = vst [vmem:[#allocation3 + $0x18] sm:$0xff] %v860
        %871 = vst [vmem:[#allocation3 + $0x20] sm:$0xff] %v861
        %872 = vst [vmem:[#allocation3 + $0x28] sm:$0xff] %v862
        %873 = vst [vmem:[#allocation3 + $0x30] sm:$0xff] %v863
        %874 = vst [vmem:[#allocation3 + $0x38] sm:$0xff] %v864
        %875 = vst [vmem:[#allocation3 + $0x40] sm:$0xff] %v865
        %876 = vst [vmem:[#allocation3 + $0x48] sm:$0xff] %v866
        %v877 = vld [vmem:[#allocation2 + $0x8] sm:$0xf]
        %v878 = vld [vmem:[#allocation2 + $0xc] sm:$0xf]
        %v879 = vld [vmem:[#allocation2 + $0x10] sm:$0xf]
        %v880 = vld [vmem:[#allocation2 + $0x14] sm:$0xf]
        %v881 = vld [vmem:[#allocation2 + $0x18] sm:$0xf]
        %v882 = vld [vmem:[#allocation2 + $0x1c] sm:$0xf]
        %v883 = vld [vmem:[#allocation2 + $0x20] sm:$0xf]
        %v884 = vld [vmem:[#allocation2 + $0x24] sm:$0xf]
        %v885 = vld [vmem:[#allocation2 + $0x28] sm:$0xf]
        %v886 = vld [vmem:[#allocation2 + $0x2c] sm:$0xf]
        %v887 = vld [vmem:[#allocation3] sm:$0xff]
        %v888 = vld [vmem:[#allocation3 + $0x8] sm:$0xff]
        %v889 = vld [vmem:[#allocation3 + $0x10] sm:$0xff]
        %v890 = vld [vmem:[#allocation3 + $0x18] sm:$0xff]
        %v891 = vld [vmem:[#allocation3 + $0x20] sm:$0xff]
        %v892 = vld [vmem:[#allocation3 + $0x28] sm:$0xff]
        %v893 = vld [vmem:[#allocation3 + $0x30] sm:$0xff]
        %v894 = vld [vmem:[#allocation3 + $0x38] sm:$0xff]
        %v895 = vld [vmem:[#allocation3 + $0x40] sm:$0xff]
        %v896 = vld [vmem:[#allocation3 + $0x48] sm:$0xff]
        %s897 = scalar_lea.vmem [#allocation4], 64
        %v898 = vld [vmem:[%s897] sm:$0xf]
        %v899 = vld [vmem:[%s897 + $0x4] sm:$0xf]
        %v900 = vld [vmem:[%s897 + $0x8] sm:$0xf]
        %v901 = vld [vmem:[%s897 + $0xc] sm:$0xf]
        %v902 = vld [vmem:[%s897 + $0x10] sm:$0xf]
        %v903 = vld [vmem:[%s897 + $0x14] sm:$0xf]
        %v904 = vld [vmem:[%s897 + $0x18] sm:$0xf]
        %v905 = vld [vmem:[%s897 + $0x1c] sm:$0xf]
        %v906 = vld [vmem:[%s897 + $0x20] sm:$0xf]
        %v907 = vld [vmem:[%s897 + $0x24] sm:$0xf]
        %v908 = vld [vmem:[%s897 + $0x28] sm:$0xf]
        %v909 = vld [vmem:[%s897 + $0x2c] sm:$0xf]
        %v910 = vld [vmem:[%s897 + $0x30] sm:$0xf]
        %v911 = vld [vmem:[%s897 + $0x34] sm:$0xf]
        %v912 = vld [vmem:[%s897 + $0x38] sm:$0xf]
        %v913 = vld [vmem:[%s897 + $0x3c] sm:$0xf]
        %v924 = vunpack.c.l.b16 %v877
        %v925 = vunpack.c.l.b16 %v878
        %v926 = vunpack.c.l.b16 %v879
        %v927 = vunpack.c.l.b16 %v880
        %v928 = vunpack.c.l.b16 %v881
        %v929 = vunpack.c.l.b16 %v882
        %v930 = vunpack.c.l.b16 %v883
        %v931 = vunpack.c.l.b16 %v884
        %v932 = vunpack.c.l.b16 %v885
        %v933 = vunpack.c.l.b16 %v886
        %v934 = vpack.c.b16 %v925, %v924
        %v935 = vpack.c.b16 %v927, %v926
        %v936 = vpack.c.b16 %v929, %v928
        %v937 = vpack.c.b16 %v931, %v930
        %v938 = vpack.c.b16 %v933, %v932
        %v960 = vunpack.c.l.b16 %v898
        %v961 = vunpack.c.l.b16 %v899
        %v962 = vunpack.c.l.b16 %v900
        %v963 = vunpack.c.l.b16 %v901
        %v964 = vunpack.c.l.b16 %v902
        %v965 = vunpack.c.l.b16 %v903
        %v966 = vunpack.c.l.b16 %v904
        %v967 = vunpack.c.l.b16 %v905
        %v968 = vunpack.c.l.b16 %v906
        %v969 = vunpack.c.l.b16 %v907
        %v970 = vunpack.c.l.b16 %v908
        %v971 = vunpack.c.l.b16 %v909
        %v972 = vunpack.c.l.b16 %v910
        %v973 = vunpack.c.l.b16 %v911
        %v974 = vunpack.c.l.b16 %v912
        %v975 = vunpack.c.l.b16 %v913
        %v976 = vpack.c.b16 %v961, %v960
        %v977 = vpack.c.b16 %v963, %v962
        %v978 = vpack.c.b16 %v965, %v964
        %v979 = vpack.c.b16 %v967, %v966
        %v980 = vpack.c.b16 %v969, %v968
        %v981 = vpack.c.b16 %v971, %v970
        %v982 = vpack.c.b16 %v973, %v972
        %v983 = vpack.c.b16 %v975, %v974
        %992 = vmatprep.subr.bf16.mxu0 0
        %993 = vmatpush1.bf16.msra.mxu0 %v976
        %994 = vmatprep.subr.bf16.mxu0 0
        %995 = vmatpush1.bf16.msra.mxu0 %v977
        %996 = vmatprep.subr.bf16.mxu0 0
        %997 = vmatpush1.bf16.msra.mxu0 %v978
        %998 = vmatprep.subr.bf16.mxu0 0
        %999 = vmatpush1.bf16.msra.mxu0 %v979
        %1000 = vmatprep.subr.bf16.mxu0 0
        %1001 = vmatpush1.bf16.msra.mxu0 %v980
        %1002 = vmatprep.subr.bf16.mxu0 0
        %1003 = vmatpush1.bf16.msra.mxu0 %v981
        %1004 = vmatprep.subr.bf16.mxu0 0
        %1005 = vmatpush1.bf16.msra.mxu0 %v982
        %1006 = vmatprep.subr.bf16.mxu0 0
        %1007 = vmatpush1.bf16.msra.mxu0 %v983
        %1008 = vmatprep.subr.bf16.mxu0 0
        %1009 = vmatpush1.bf16.msra.mxu0 0
        %1010 = vmatprep.subr.bf16.mxu0 0
        %1011 = vmatpush1.bf16.msra.mxu0 0
        %1012 = vmatprep.subr.bf16.mxu0 0
        %1013 = vmatpush1.bf16.msra.mxu0 0
        %1014 = vmatprep.subr.bf16.mxu0 0
        %1015 = vmatpush1.bf16.msra.mxu0 0
        %1016 = vmatprep.subr.bf16.mxu0 0
        %1017 = vmatpush1.bf16.msra.mxu0 0
        %1018 = vmatprep.subr.bf16.mxu0 0
        %1019 = vmatpush1.bf16.msra.mxu0 0
        %1020 = vmatprep.subr.bf16.mxu0 0
        %1021 = vmatpush1.bf16.msra.mxu0 0
        %1022 = vmatprep.subr.bf16.mxu0 0
        %1023 = vmatpush1.bf16.msra.mxu0 0
        %1024 = vmatprep.mubr.bf16.mxu0 0
        %1025 = vmatmul.mubr.bf16.gmra.mrb[0].mxu0 %v934
        %v1026 = vpop.f32.mrb[0].mxu0
        %v1027 = vadd.f32 0.0, %v1026
        %v1028 = vpop.f32.mrb[0].mxu0
        %v1029 = vpop.f32.mrb[0].mxu0
        %v1030 = vadd.f32 0.0, %v1029
        %v1031 = vpop.f32.mrb[0].mxu0
        %1032 = vmatprep.mubr.bf16.mxu0 0
        %1033 = vmatmul.mubr.bf16.gmra.mrb[0].mxu0 %v935
        %v1034 = vpop.f32.mrb[0].mxu0
        %v1035 = vadd.f32 0.0, %v1034
        %v1036 = vpop.f32.mrb[0].mxu0
        %v1037 = vpop.f32.mrb[0].mxu0
        %v1038 = vadd.f32 0.0, %v1037
        %v1039 = vpop.f32.mrb[0].mxu0
        %1040 = vmatprep.mubr.bf16.mxu0 0
        %1041 = vmatmul.mubr.bf16.gmra.mrb[0].mxu0 %v936
        %v1042 = vpop.f32.mrb[0].mxu0
        %v1043 = vadd.f32 0.0, %v1042
        %v1044 = vpop.f32.mrb[0].mxu0
        %v1045 = vpop.f32.mrb[0].mxu0
        %v1046 = vadd.f32 0.0, %v1045
        %v1047 = vpop.f32.mrb[0].mxu0
        %1048 = vmatprep.mubr.bf16.mxu0 0
        %1049 = vmatmul.mubr.bf16.gmra.mrb[0].mxu0 %v937
        %v1050 = vpop.f32.mrb[0].mxu0
        %v1051 = vadd.f32 0.0, %v1050
        %v1052 = vpop.f32.mrb[0].mxu0
        %v1053 = vpop.f32.mrb[0].mxu0
        %v1054 = vadd.f32 0.0, %v1053
        %v1055 = vpop.f32.mrb[0].mxu0
        %1056 = vmatprep.mubr.bf16.mxu0 0
        %1057 = vmatmul.mubr.bf16.gmra.mrb[0].mxu0 %v938
        %v1058 = vpop.f32.mrb[0].mxu0
        %v1059 = vadd.f32 0.0, %v1058
        %v1060 = vpop.f32.mrb[0].mxu0
        %v1061 = vpop.f32.mrb[0].mxu0
        %v1062 = vadd.f32 0.0, %v1061
        %v1063 = vpop.f32.mrb[0].mxu0
        %1064 = vdwg.mxu0
        %v1065 = vadd.f32 %v887, %v1027
        %v1066 = vadd.f32 %v888, %v1030
        %v1067 = vadd.f32 %v889, %v1035
        %v1068 = vadd.f32 %v890, %v1038
        %v1069 = vadd.f32 %v891, %v1043
        %v1070 = vadd.f32 %v892, %v1046
        %v1071 = vadd.f32 %v893, %v1051
        %v1072 = vadd.f32 %v894, %v1054
        %v1073 = vadd.f32 %v895, %v1059
        %v1074 = vadd.f32 %v896, %v1062
        %1075 = vst [vmem:[#allocation3] sm:$0xff] %v1065
        %1076 = vst [vmem:[#allocation3 + $0x8] sm:$0xff] %v1066
        %1077 = vst [vmem:[#allocation3 + $0x10] sm:$0xff] %v1067
        %1078 = vst [vmem:[#allocation3 + $0x18] sm:$0xff] %v1068
        %1079 = vst [vmem:[#allocation3 + $0x20] sm:$0xff] %v1069
        %1080 = vst [vmem:[#allocation3 + $0x28] sm:$0xff] %v1070
        %1081 = vst [vmem:[#allocation3 + $0x30] sm:$0xff] %v1071
        %1082 = vst [vmem:[#allocation3 + $0x38] sm:$0xff] %v1072
        %1083 = vst [vmem:[#allocation3 + $0x40] sm:$0xff] %v1073
        %1084 = vst [vmem:[#allocation3 + $0x48] sm:$0xff] %v1074
        %v1085 = vld [vmem:[#allocation2 + $0x10] sm:$0xf]
        %v1086 = vld [vmem:[#allocation2 + $0x14] sm:$0xf]
        %v1087 = vld [vmem:[#allocation2 + $0x18] sm:$0xf]
        %v1088 = vld [vmem:[#allocation2 + $0x1c] sm:$0xf]
        %v1089 = vld [vmem:[#allocation2 + $0x20] sm:$0xf]
        %v1090 = vld [vmem:[#allocation2 + $0x24] sm:$0xf]
        %v1091 = vld [vmem:[#allocation2 + $0x28] sm:$0xf]
        %v1092 = vld [vmem:[#allocation2 + $0x2c] sm:$0xf]
        %v1093 = vld [vmem:[#allocation2 + $0x30] sm:$0xf]
        %v1094 = vld [vmem:[#allocation2 + $0x34] sm:$0xf]
        %v1095 = vld [vmem:[#allocation3] sm:$0xff]
        %v1096 = vld [vmem:[#allocation3 + $0x8] sm:$0xff]
        %v1097 = vld [vmem:[#allocation3 + $0x10] sm:$0xff]
        %v1098 = vld [vmem:[#allocation3 + $0x18] sm:$0xff]
        %v1099 = vld [vmem:[#allocation3 + $0x20] sm:$0xff]
        %v1100 = vld [vmem:[#allocation3 + $0x28] sm:$0xff]
        %v1101 = vld [vmem:[#allocation3 + $0x30] sm:$0xff]
        %v1102 = vld [vmem:[#allocation3 + $0x38] sm:$0xff]
        %v1103 = vld [vmem:[#allocation3 + $0x40] sm:$0xff]
        %v1104 = vld [vmem:[#allocation3 + $0x48] sm:$0xff]
        %s1105 = scalar_lea.vmem [#allocation4], 128
        %v1106 = vld [vmem:[%s1105] sm:$0xf]
        %v1107 = vld [vmem:[%s1105 + $0x4] sm:$0xf]
        %v1108 = vld [vmem:[%s1105 + $0x8] sm:$0xf]
        %v1109 = vld [vmem:[%s1105 + $0xc] sm:$0xf]
        %v1110 = vld [vmem:[%s1105 + $0x10] sm:$0xf]
        %v1111 = vld [vmem:[%s1105 + $0x14] sm:$0xf]
        %v1112 = vld [vmem:[%s1105 + $0x18] sm:$0xf]
        %v1113 = vld [vmem:[%s1105 + $0x1c] sm:$0xf]
        %v1114 = vld [vmem:[%s1105 + $0x20] sm:$0xf]
        %v1115 = vld [vmem:[%s1105 + $0x24] sm:$0xf]
        %v1116 = vld [vmem:[%s1105 + $0x28] sm:$0xf]
        %v1117 = vld [vmem:[%s1105 + $0x2c] sm:$0xf]
        %v1118 = vld [vmem:[%s1105 + $0x30] sm:$0xf]
        %v1119 = vld [vmem:[%s1105 + $0x34] sm:$0xf]
        %v1120 = vld [vmem:[%s1105 + $0x38] sm:$0xf]
        %v1121 = vld [vmem:[%s1105 + $0x3c] sm:$0xf]
        %v1132 = vunpack.c.l.b16 %v1085
        %v1133 = vunpack.c.l.b16 %v1086
        %v1134 = vunpack.c.l.b16 %v1087
        %v1135 = vunpack.c.l.b16 %v1088
        %v1136 = vunpack.c.l.b16 %v1089
        %v1137 = vunpack.c.l.b16 %v1090
        %v1138 = vunpack.c.l.b16 %v1091
        %v1139 = vunpack.c.l.b16 %v1092
        %v1140 = vunpack.c.l.b16 %v1093
        %v1141 = vunpack.c.l.b16 %v1094
        %v1142 = vpack.c.b16 %v1133, %v1132
        %v1143 = vpack.c.b16 %v1135, %v1134
        %v1144 = vpack.c.b16 %v1137, %v1136
        %v1145 = vpack.c.b16 %v1139, %v1138
        %v1146 = vpack.c.b16 %v1141, %v1140
        %v1168 = vunpack.c.l.b16 %v1106
        %v1169 = vunpack.c.l.b16 %v1107
        %v1170 = vunpack.c.l.b16 %v1108
        %v1171 = vunpack.c.l.b16 %v1109
        %v1172 = vunpack.c.l.b16 %v1110
        %v1173 = vunpack.c.l.b16 %v1111
        %v1174 = vunpack.c.l.b16 %v1112
        %v1175 = vunpack.c.l.b16 %v1113
        %v1176 = vunpack.c.l.b16 %v1114
        %v1177 = vunpack.c.l.b16 %v1115
        %v1178 = vunpack.c.l.b16 %v1116
        %v1179 = vunpack.c.l.b16 %v1117
        %v1180 = vunpack.c.l.b16 %v1118
        %v1181 = vunpack.c.l.b16 %v1119
        %v1182 = vunpack.c.l.b16 %v1120
        %v1183 = vunpack.c.l.b16 %v1121
        %v1184 = vpack.c.b16 %v1169, %v1168
        %v1185 = vpack.c.b16 %v1171, %v1170
        %v1186 = vpack.c.b16 %v1173, %v1172
        %v1187 = vpack.c.b16 %v1175, %v1174
        %v1188 = vpack.c.b16 %v1177, %v1176
        %v1189 = vpack.c.b16 %v1179, %v1178
        %v1190 = vpack.c.b16 %v1181, %v1180
        %v1191 = vpack.c.b16 %v1183, %v1182
        %1200 = vmatprep.subr.bf16.mxu0 0
        %1201 = vmatpush1.bf16.msra.mxu0 %v1184
        %1202 = vmatprep.subr.bf16.mxu0 0
        %1203 = vmatpush1.bf16.msra.mxu0 %v1185
        %1204 = vmatprep.subr.bf16.mxu0 0
        %1205 = vmatpush1.bf16.msra.mxu0 %v1186
        %1206 = vmatprep.subr.bf16.mxu0 0
        %1207 = vmatpush1.bf16.msra.mxu0 %v1187
        %1208 = vmatprep.subr.bf16.mxu0 0
        %1209 = vmatpush1.bf16.msra.mxu0 %v1188
        %1210 = vmatprep.subr.bf16.mxu0 0
        %1211 = vmatpush1.bf16.msra.mxu0 %v1189
        %1212 = vmatprep.subr.bf16.mxu0 0
        %1213 = vmatpush1.bf16.msra.mxu0 %v1190
        %1214 = vmatprep.subr.bf16.mxu0 0
        %1215 = vmatpush1.bf16.msra.mxu0 %v1191
        %1216 = vmatprep.subr.bf16.mxu0 0
        %1217 = vmatpush1.bf16.msra.mxu0 0
        %1218 = vmatprep.subr.bf16.mxu0 0
        %1219 = vmatpush1.bf16.msra.mxu0 0
        %1220 = vmatprep.subr.bf16.mxu0 0
        %1221 = vmatpush1.bf16.msra.mxu0 0
        %1222 = vmatprep.subr.bf16.mxu0 0
        %1223 = vmatpush1.bf16.msra.mxu0 0
        %1224 = vmatprep.subr.bf16.mxu0 0
        %1225 = vmatpush1.bf16.msra.mxu0 0
        %1226 = vmatprep.subr.bf16.mxu0 0
        %1227 = vmatpush1.bf16.msra.mxu0 0
        %1228 = vmatprep.subr.bf16.mxu0 0
        %1229 = vmatpush1.bf16.msra.mxu0 0
        %1230 = vmatprep.subr.bf16.mxu0 0
        %1231 = vmatpush1.bf16.msra.mxu0 0
        %1232 = vmatprep.mubr.bf16.mxu0 0
        %1233 = vmatmul.mubr.bf16.gmra.mrb[0].mxu0 %v1142
        %v1234 = vpop.f32.mrb[0].mxu0
        %v1235 = vadd.f32 0.0, %v1234
        %v1236 = vpop.f32.mrb[0].mxu0
        %v1237 = vpop.f32.mrb[0].mxu0
        %v1238 = vadd.f32 0.0, %v1237
        %v1239 = vpop.f32.mrb[0].mxu0
        %1240 = vmatprep.mubr.bf16.mxu0 0
        %1241 = vmatmul.mubr.bf16.gmra.mrb[0].mxu0 %v1143
        %v1242 = vpop.f32.mrb[0].mxu0
        %v1243 = vadd.f32 0.0, %v1242
        %v1244 = vpop.f32.mrb[0].mxu0
        %v1245 = vpop.f32.mrb[0].mxu0
        %v1246 = vadd.f32 0.0, %v1245
        %v1247 = vpop.f32.mrb[0].mxu0
        %1248 = vmatprep.mubr.bf16.mxu0 0
        %1249 = vmatmul.mubr.bf16.gmra.mrb[0].mxu0 %v1144
        %v1250 = vpop.f32.mrb[0].mxu0
        %v1251 = vadd.f32 0.0, %v1250
        %v1252 = vpop.f32.mrb[0].mxu0
        %v1253 = vpop.f32.mrb[0].mxu0
        %v1254 = vadd.f32 0.0, %v1253
        %v1255 = vpop.f32.mrb[0].mxu0
        %1256 = vmatprep.mubr.bf16.mxu0 0
        %1257 = vmatmul.mubr.bf16.gmra.mrb[0].mxu0 %v1145
        %v1258 = vpop.f32.mrb[0].mxu0
        %v1259 = vadd.f32 0.0, %v1258
        %v1260 = vpop.f32.mrb[0].mxu0
        %v1261 = vpop.f32.mrb[0].mxu0
        %v1262 = vadd.f32 0.0, %v1261
        %v1263 = vpop.f32.mrb[0].mxu0
        %1264 = vmatprep.mubr.bf16.mxu0 0
        %1265 = vmatmul.mubr.bf16.gmra.mrb[0].mxu0 %v1146
        %v1266 = vpop.f32.mrb[0].mxu0
        %v1267 = vadd.f32 0.0, %v1266
        %v1268 = vpop.f32.mrb[0].mxu0
        %v1269 = vpop.f32.mrb[0].mxu0
        %v1270 = vadd.f32 0.0, %v1269
        %v1271 = vpop.f32.mrb[0].mxu0
        %1272 = vdwg.mxu0
        %v1273 = vadd.f32 %v1095, %v1235
        %v1274 = vadd.f32 %v1096, %v1238
        %v1275 = vadd.f32 %v1097, %v1243
        %v1276 = vadd.f32 %v1098, %v1246
        %v1277 = vadd.f32 %v1099, %v1251
        %v1278 = vadd.f32 %v1100, %v1254
        %v1279 = vadd.f32 %v1101, %v1259
        %v1280 = vadd.f32 %v1102, %v1262
        %v1281 = vadd.f32 %v1103, %v1267
        %v1282 = vadd.f32 %v1104, %v1270
        %1283 = vst [vmem:[#allocation3] sm:$0xff] %v1273
        %1284 = vst [vmem:[#allocation3 + $0x8] sm:$0xff] %v1274
        %1285 = vst [vmem:[#allocation3 + $0x10] sm:$0xff] %v1275
        %1286 = vst [vmem:[#allocation3 + $0x18] sm:$0xff] %v1276
        %1287 = vst [vmem:[#allocation3 + $0x20] sm:$0xff] %v1277
        %1288 = vst [vmem:[#allocation3 + $0x28] sm:$0xff] %v1278
        %1289 = vst [vmem:[#allocation3 + $0x30] sm:$0xff] %v1279
        %1290 = vst [vmem:[#allocation3 + $0x38] sm:$0xff] %v1280
        %1291 = vst [vmem:[#allocation3 + $0x40] sm:$0xff] %v1281
        %1292 = vst [vmem:[#allocation3 + $0x48] sm:$0xff] %v1282
        %v1293 = vld [vmem:[#allocation2] sm:$0xf]
        %v1294 = vld [vmem:[#allocation2 + $0x4] sm:$0xf]
        %v1295 = vld [vmem:[#allocation2 + $0x8] sm:$0xf]
        %v1296 = vld [vmem:[#allocation2 + $0xc] sm:$0xf]
        %v1297 = vld [vmem:[#allocation2 + $0x10] sm:$0xf]
        %v1298 = vld [vmem:[#allocation2 + $0x14] sm:$0xf]
        %v1299 = vld [vmem:[#allocation2 + $0x18] sm:$0xf]
        %v1300 = vld [vmem:[#allocation2 + $0x1c] sm:$0xf]
        %v1301 = vld [vmem:[#allocation2 + $0x20] sm:$0xf]
        %v1302 = vld [vmem:[#allocation2 + $0x24] sm:$0xf]
        %v1303 = vld [vmem:[#allocation2 + $0x28] sm:$0x1]
        %v1304 = vld [vmem:[#allocation3] sm:$0xff]
        %v1305 = vld [vmem:[#allocation3 + $0x8] sm:$0xff]
        %v1306 = vld [vmem:[#allocation3 + $0x10] sm:$0xff]
        %v1307 = vld [vmem:[#allocation3 + $0x18] sm:$0xff]
        %v1308 = vld [vmem:[#allocation3 + $0x20] sm:$0xff]
        %v1309 = vld [vmem:[#allocation3 + $0x28] sm:$0xff]
        %v1310 = vld [vmem:[#allocation3 + $0x30] sm:$0xff]
        %v1311 = vld [vmem:[#allocation3 + $0x38] sm:$0xff]
        %v1312 = vld [vmem:[#allocation3 + $0x40] sm:$0xff]
        %v1313 = vld [vmem:[#allocation3 + $0x48] sm:$0xff]
        %s1314 = scalar_lea.vmem [#allocation4], 192
        %v1315 = vld [vmem:[%s1314] sm:$0xf]
        %v1316 = vld [vmem:[%s1314 + $0x4] sm:$0xf]
        %v1317 = vld [vmem:[%s1314 + $0x8] sm:$0xf]
        %v1318 = vld [vmem:[%s1314 + $0xc] sm:$0xf]
        %v1319 = vld [vmem:[%s1314 + $0x10] sm:$0xf]
        %v1320 = vld [vmem:[%s1314 + $0x14] sm:$0xf]
        %v1321 = vld [vmem:[%s1314 + $0x18] sm:$0xf]
        %v1322 = vld [vmem:[%s1314 + $0x1c] sm:$0xf]
        %v1323 = vld [vmem:[%s1314 + $0x20] sm:$0xf]
        %v1324 = vld [vmem:[%s1314 + $0x24] sm:$0xf]
        %v1325 = vld [vmem:[%s1314 + $0x28] sm:$0xf]
        %v1326 = vld [vmem:[%s1314 + $0x2c] sm:$0xf]
        %v1327 = vld [vmem:[%s1314 + $0x30] sm:$0xf]
        %v1328 = vld [vmem:[%s1314 + $0x34] sm:$0xf]
        %v1329 = vld [vmem:[%s1314 + $0x38] sm:$0xf]
        %v1330 = vld [vmem:[%s1314 + $0x3c] sm:$0xf]
        %v1342 = vunpack.c.l.b16 %v1293
        %v1343 = vunpack.c.l.b16 %v1294
        %v1344 = vunpack.c.l.b16 %v1295
        %v1345 = vunpack.c.l.b16 %v1296
        %v1346 = vunpack.c.l.b16 %v1297
        %v1347 = vunpack.c.l.b16 %v1298
        %v1348 = vunpack.c.l.b16 %v1299
        %v1349 = vunpack.c.l.b16 %v1300
        %v1350 = vunpack.c.l.b16 %v1301
        %v1351 = vunpack.c.l.b16 %v1302
        %v1352 = vunpack.c.l.b16 %v1303
        %v1353 = vpack.c.b16 %v1343, %v1342
        %v1354 = vpack.c.b16 %v1345, %v1344
        %v1355 = vpack.c.b16 %v1347, %v1346
        %v1356 = vpack.c.b16 %v1349, %v1348
        %v1357 = vpack.c.b16 %v1351, %v1350
        %v1358 = vpack.c.b16 %v1352, %v1352
        %vm1359 = vsmask.f32 7424
        %v1361 = vshrl.u32 %v1353, 16
        %v1363 = vshll.u32 %v1353, 16
        %v1365 = vrot.slane %v1363, 1
        %v1366 = vor.u32 %v1361, %v1365
        %v1368 = vshll.u32 %v1354, 16
        %v1370 = vrot.slane %v1368, 1
        %v1371 = vsel %vm1359, %v1366, %v1370
        %v1372 = vshrl.u32 %v1354, 16
        %v1374 = vor.u32 %v1372, %v1370
        %v1376 = vshll.u32 %v1355, 16
        %v1378 = vrot.slane %v1376, 1
        %v1379 = vsel %vm1359, %v1374, %v1378
        %v1380 = vshrl.u32 %v1355, 16
        %v1382 = vor.u32 %v1380, %v1378
        %v1384 = vshll.u32 %v1356, 16
        %v1386 = vrot.slane %v1384, 1
        %v1387 = vsel %vm1359, %v1382, %v1386
        %v1388 = vshrl.u32 %v1356, 16
        %v1390 = vor.u32 %v1388, %v1386
        %v1392 = vshll.u32 %v1357, 16
        %v1394 = vrot.slane %v1392, 1
        %v1395 = vsel %vm1359, %v1390, %v1394
        %v1396 = vshrl.u32 %v1357, 16
        %v1398 = vor.u32 %v1396, %v1394
        %v1400 = vshll.u32 %v1358, 16
        %v1402 = vrot.slane %v1400, 1
        %v1403 = vsel %vm1359, %v1398, %v1402
        %v1425 = vunpack.c.l.b16 %v1315
        %v1426 = vunpack.c.l.b16 %v1316
        %v1427 = vunpack.c.l.b16 %v1317
        %v1428 = vunpack.c.l.b16 %v1318
        %v1429 = vunpack.c.l.b16 %v1319
        %v1430 = vunpack.c.l.b16 %v1320
        %v1431 = vunpack.c.l.b16 %v1321
        %v1432 = vunpack.c.l.b16 %v1322
        %v1433 = vunpack.c.l.b16 %v1323
        %v1434 = vunpack.c.l.b16 %v1324
        %v1435 = vunpack.c.l.b16 %v1325
        %v1436 = vunpack.c.l.b16 %v1326
        %v1437 = vunpack.c.l.b16 %v1327
        %v1438 = vunpack.c.l.b16 %v1328
        %v1439 = vunpack.c.l.b16 %v1329
        %v1440 = vunpack.c.l.b16 %v1330
        %v1441 = vpack.c.b16 %v1426, %v1425
        %v1442 = vpack.c.b16 %v1428, %v1427
        %v1443 = vpack.c.b16 %v1430, %v1429
        %v1444 = vpack.c.b16 %v1432, %v1431
        %v1445 = vpack.c.b16 %v1434, %v1433
        %v1446 = vpack.c.b16 %v1436, %v1435
        %v1447 = vpack.c.b16 %v1438, %v1437
        %v1448 = vpack.c.b16 %v1440, %v1439
        %1457 = vmatprep.subr.bf16.mxu0 0
        %1458 = vmatpush1.bf16.msra.mxu0 %v1441
        %1459 = vmatprep.subr.bf16.mxu0 0
        %1460 = vmatpush1.bf16.msra.mxu0 %v1442
        %1461 = vmatprep.subr.bf16.mxu0 0
        %1462 = vmatpush1.bf16.msra.mxu0 %v1443
        %1463 = vmatprep.subr.bf16.mxu0 0
        %1464 = vmatpush1.bf16.msra.mxu0 %v1444
        %1465 = vmatprep.subr.bf16.mxu0 0
        %1466 = vmatpush1.bf16.msra.mxu0 %v1445
        %1467 = vmatprep.subr.bf16.mxu0 0
        %1468 = vmatpush1.bf16.msra.mxu0 %v1446
        %1469 = vmatprep.subr.bf16.mxu0 0
        %1470 = vmatpush1.bf16.msra.mxu0 %v1447
        %1471 = vmatprep.subr.bf16.mxu0 0
        %1472 = vmatpush1.bf16.msra.mxu0 %v1448
        %1473 = vmatprep.subr.bf16.mxu0 0
        %1474 = vmatpush1.bf16.msra.mxu0 0
        %1475 = vmatprep.subr.bf16.mxu0 0
        %1476 = vmatpush1.bf16.msra.mxu0 0
        %1477 = vmatprep.subr.bf16.mxu0 0
        %1478 = vmatpush1.bf16.msra.mxu0 0
        %1479 = vmatprep.subr.bf16.mxu0 0
        %1480 = vmatpush1.bf16.msra.mxu0 0
        %1481 = vmatprep.subr.bf16.mxu0 0
        %1482 = vmatpush1.bf16.msra.mxu0 0
        %1483 = vmatprep.subr.bf16.mxu0 0
        %1484 = vmatpush1.bf16.msra.mxu0 0
        %1485 = vmatprep.subr.bf16.mxu0 0
        %1486 = vmatpush1.bf16.msra.mxu0 0
        %1487 = vmatprep.subr.bf16.mxu0 0
        %1488 = vmatpush1.bf16.msra.mxu0 0
        %1489 = vmatprep.mubr.bf16.mxu0 0
        %1490 = vmatmul.mubr.bf16.gmra.mrb[0].mxu0 %v1371
        %v1491 = vpop.f32.mrb[0].mxu0
        %v1492 = vadd.f32 0.0, %v1491
        %v1493 = vpop.f32.mrb[0].mxu0
        %v1494 = vpop.f32.mrb[0].mxu0
        %v1495 = vadd.f32 0.0, %v1494
        %v1496 = vpop.f32.mrb[0].mxu0
        %1497 = vmatprep.mubr.bf16.mxu0 0
        %1498 = vmatmul.mubr.bf16.gmra.mrb[0].mxu0 %v1379
        %v1499 = vpop.f32.mrb[0].mxu0
        %v1500 = vadd.f32 0.0, %v1499
        %v1501 = vpop.f32.mrb[0].mxu0
        %v1502 = vpop.f32.mrb[0].mxu0
        %v1503 = vadd.f32 0.0, %v1502
        %v1504 = vpop.f32.mrb[0].mxu0
        %1505 = vmatprep.mubr.bf16.mxu0 0
        %1506 = vmatmul.mubr.bf16.gmra.mrb[0].mxu0 %v1387
        %v1507 = vpop.f32.mrb[0].mxu0
        %v1508 = vadd.f32 0.0, %v1507
        %v1509 = vpop.f32.mrb[0].mxu0
        %v1510 = vpop.f32.mrb[0].mxu0
        %v1511 = vadd.f32 0.0, %v1510
        %v1512 = vpop.f32.mrb[0].mxu0
        %1513 = vmatprep.mubr.bf16.mxu0 0
        %1514 = vmatmul.mubr.bf16.gmra.mrb[0].mxu0 %v1395
        %v1515 = vpop.f32.mrb[0].mxu0
        %v1516 = vadd.f32 0.0, %v1515
        %v1517 = vpop.f32.mrb[0].mxu0
        %v1518 = vpop.f32.mrb[0].mxu0
        %v1519 = vadd.f32 0.0, %v1518
        %v1520 = vpop.f32.mrb[0].mxu0
        %1521 = vmatprep.mubr.bf16.mxu0 0
        %1522 = vmatmul.mubr.bf16.gmra.mrb[0].mxu0 %v1403
        %v1523 = vpop.f32.mrb[0].mxu0
        %v1524 = vadd.f32 0.0, %v1523
        %v1525 = vpop.f32.mrb[0].mxu0
        %v1526 = vpop.f32.mrb[0].mxu0
        %v1527 = vadd.f32 0.0, %v1526
        %v1528 = vpop.f32.mrb[0].mxu0
        %1529 = vdwg.mxu0
        %v1530 = vadd.f32 %v1304, %v1492
        %v1531 = vadd.f32 %v1305, %v1495
        %v1532 = vadd.f32 %v1306, %v1500
        %v1533 = vadd.f32 %v1307, %v1503
        %v1534 = vadd.f32 %v1308, %v1508
        %v1535 = vadd.f32 %v1309, %v1511
        %v1536 = vadd.f32 %v1310, %v1516
        %v1537 = vadd.f32 %v1311, %v1519
        %v1538 = vadd.f32 %v1312, %v1524
        %v1539 = vadd.f32 %v1313, %v1527
        %1540 = vst [vmem:[#allocation3] sm:$0xff] %v1530
        %1541 = vst [vmem:[#allocation3 + $0x8] sm:$0xff] %v1531
        %1542 = vst [vmem:[#allocation3 + $0x10] sm:$0xff] %v1532
        %1543 = vst [vmem:[#allocation3 + $0x18] sm:$0xff] %v1533
        %1544 = vst [vmem:[#allocation3 + $0x20] sm:$0xff] %v1534
        %1545 = vst [vmem:[#allocation3 + $0x28] sm:$0xff] %v1535
        %1546 = vst [vmem:[#allocation3 + $0x30] sm:$0xff] %v1536
        %1547 = vst [vmem:[#allocation3 + $0x38] sm:$0xff] %v1537
        %1548 = vst [vmem:[#allocation3 + $0x40] sm:$0xff] %v1538
        %1549 = vst [vmem:[#allocation3 + $0x48] sm:$0xff] %v1539
        %v1550 = vld [vmem:[#allocation2 + $0x8] sm:$0xf]
        %v1551 = vld [vmem:[#allocation2 + $0xc] sm:$0xf]
        %v1552 = vld [vmem:[#allocation2 + $0x10] sm:$0xf]
        %v1553 = vld [vmem:[#allocation2 + $0x14] sm:$0xf]
        %v1554 = vld [vmem:[#allocation2 + $0x18] sm:$0xf]
        %v1555 = vld [vmem:[#allocation2 + $0x1c] sm:$0xf]
        %v1556 = vld [vmem:[#allocation2 + $0x20] sm:$0xf]
        %v1557 = vld [vmem:[#allocation2 + $0x24] sm:$0xf]
        %v1558 = vld [vmem:[#allocation2 + $0x28] sm:$0xf]
        %v1559 = vld [vmem:[#allocation2 + $0x2c] sm:$0xf]
        %v1560 = vld [vmem:[#allocation2 + $0x30] sm:$0x1]
        %v1561 = vld [vmem:[#allocation3] sm:$0xff]
        %v1562 = vld [vmem:[#allocation3 + $0x8] sm:$0xff]
        %v1563 = vld [vmem:[#allocation3 + $0x10] sm:$0xff]
        %v1564 = vld [vmem:[#allocation3 + $0x18] sm:$0xff]
        %v1565 = vld [vmem:[#allocation3 + $0x20] sm:$0xff]
        %v1566 = vld [vmem:[#allocation3 + $0x28] sm:$0xff]
        %v1567 = vld [vmem:[#allocation3 + $0x30] sm:$0xff]
        %v1568 = vld [vmem:[#allocation3 + $0x38] sm:$0xff]
        %v1569 = vld [vmem:[#allocation3 + $0x40] sm:$0xff]
        %v1570 = vld [vmem:[#allocation3 + $0x48] sm:$0xff]
        %s1571 = scalar_lea.vmem [#allocation4], 256
        %v1572 = vld [vmem:[%s1571] sm:$0xf]
        %v1573 = vld [vmem:[%s1571 + $0x4] sm:$0xf]
        %v1574 = vld [vmem:[%s1571 + $0x8] sm:$0xf]
        %v1575 = vld [vmem:[%s1571 + $0xc] sm:$0xf]
        %v1576 = vld [vmem:[%s1571 + $0x10] sm:$0xf]
        %v1577 = vld [vmem:[%s1571 + $0x14] sm:$0xf]
        %v1578 = vld [vmem:[%s1571 + $0x18] sm:$0xf]
        %v1579 = vld [vmem:[%s1571 + $0x1c] sm:$0xf]
        %v1580 = vld [vmem:[%s1571 + $0x20] sm:$0xf]
        %v1581 = vld [vmem:[%s1571 + $0x24] sm:$0xf]
        %v1582 = vld [vmem:[%s1571 + $0x28] sm:$0xf]
        %v1583 = vld [vmem:[%s1571 + $0x2c] sm:$0xf]
        %v1584 = vld [vmem:[%s1571 + $0x30] sm:$0xf]
        %v1585 = vld [vmem:[%s1571 + $0x34] sm:$0xf]
        %v1586 = vld [vmem:[%s1571 + $0x38] sm:$0xf]
        %v1587 = vld [vmem:[%s1571 + $0x3c] sm:$0xf]
        %v1599 = vunpack.c.l.b16 %v1550
        %v1600 = vunpack.c.l.b16 %v1551
        %v1601 = vunpack.c.l.b16 %v1552
        %v1602 = vunpack.c.l.b16 %v1553
        %v1603 = vunpack.c.l.b16 %v1554
        %v1604 = vunpack.c.l.b16 %v1555
        %v1605 = vunpack.c.l.b16 %v1556
        %v1606 = vunpack.c.l.b16 %v1557
        %v1607 = vunpack.c.l.b16 %v1558
        %v1608 = vunpack.c.l.b16 %v1559
        %v1609 = vunpack.c.l.b16 %v1560
        %v1610 = vpack.c.b16 %v1600, %v1599
        %v1611 = vpack.c.b16 %v1602, %v1601
        %v1612 = vpack.c.b16 %v1604, %v1603
        %v1613 = vpack.c.b16 %v1606, %v1605
        %v1614 = vpack.c.b16 %v1608, %v1607
        %v1615 = vpack.c.b16 %v1609, %v1609
        %v1617 = vshrl.u32 %v1610, 16
        %v1619 = vshll.u32 %v1610, 16
        %v1621 = vrot.slane %v1619, 1
        %v1622 = vor.u32 %v1617, %v1621
        %v1624 = vshll.u32 %v1611, 16
        %v1626 = vrot.slane %v1624, 1
        %v1627 = vsel %vm1359, %v1622, %v1626
        %v1628 = vshrl.u32 %v1611, 16
        %v1630 = vor.u32 %v1628, %v1626
        %v1632 = vshll.u32 %v1612, 16
        %v1634 = vrot.slane %v1632, 1
        %v1635 = vsel %vm1359, %v1630, %v1634
        %v1636 = vshrl.u32 %v1612, 16
        %v1638 = vor.u32 %v1636, %v1634
        %v1640 = vshll.u32 %v1613, 16
        %v1642 = vrot.slane %v1640, 1
        %v1643 = vsel %vm1359, %v1638, %v1642
        %v1644 = vshrl.u32 %v1613, 16
        %v1646 = vor.u32 %v1644, %v1642
        %v1648 = vshll.u32 %v1614, 16
        %v1650 = vrot.slane %v1648, 1
        %v1651 = vsel %vm1359, %v1646, %v1650
        %v1652 = vshrl.u32 %v1614, 16
        %v1654 = vor.u32 %v1652, %v1650
        %v1656 = vshll.u32 %v1615, 16
        %v1658 = vrot.slane %v1656, 1
        %v1659 = vsel %vm1359, %v1654, %v1658
        %v1681 = vunpack.c.l.b16 %v1572
        %v1682 = vunpack.c.l.b16 %v1573
        %v1683 = vunpack.c.l.b16 %v1574
        %v1684 = vunpack.c.l.b16 %v1575
        %v1685 = vunpack.c.l.b16 %v1576
        %v1686 = vunpack.c.l.b16 %v1577
        %v1687 = vunpack.c.l.b16 %v1578
        %v1688 = vunpack.c.l.b16 %v1579
        %v1689 = vunpack.c.l.b16 %v1580
        %v1690 = vunpack.c.l.b16 %v1581
        %v1691 = vunpack.c.l.b16 %v1582
        %v1692 = vunpack.c.l.b16 %v1583
        %v1693 = vunpack.c.l.b16 %v1584
        %v1694 = vunpack.c.l.b16 %v1585
        %v1695 = vunpack.c.l.b16 %v1586
        %v1696 = vunpack.c.l.b16 %v1587
        %v1697 = vpack.c.b16 %v1682, %v1681
        %v1698 = vpack.c.b16 %v1684, %v1683
        %v1699 = vpack.c.b16 %v1686, %v1685
        %v1700 = vpack.c.b16 %v1688, %v1687
        %v1701 = vpack.c.b16 %v1690, %v1689
        %v1702 = vpack.c.b16 %v1692, %v1691
        %v1703 = vpack.c.b16 %v1694, %v1693
        %v1704 = vpack.c.b16 %v1696, %v1695
        %1713 = vmatprep.subr.bf16.mxu0 0
        %1714 = vmatpush1.bf16.msra.mxu0 %v1697
        %1715 = vmatprep.subr.bf16.mxu0 0
        %1716 = vmatpush1.bf16.msra.mxu0 %v1698
        %1717 = vmatprep.subr.bf16.mxu0 0
        %1718 = vmatpush1.bf16.msra.mxu0 %v1699
        %1719 = vmatprep.subr.bf16.mxu0 0
        %1720 = vmatpush1.bf16.msra.mxu0 %v1700
        %1721 = vmatprep.subr.bf16.mxu0 0
        %1722 = vmatpush1.bf16.msra.mxu0 %v1701
        %1723 = vmatprep.subr.bf16.mxu0 0
        %1724 = vmatpush1.bf16.msra.mxu0 %v1702
        %1725 = vmatprep.subr.bf16.mxu0 0
        %1726 = vmatpush1.bf16.msra.mxu0 %v1703
        %1727 = vmatprep.subr.bf16.mxu0 0
        %1728 = vmatpush1.bf16.msra.mxu0 %v1704
        %1729 = vmatprep.subr.bf16.mxu0 0
        %1730 = vmatpush1.bf16.msra.mxu0 0
        %1731 = vmatprep.subr.bf16.mxu0 0
        %1732 = vmatpush1.bf16.msra.mxu0 0
        %1733 = vmatprep.subr.bf16.mxu0 0
        %1734 = vmatpush1.bf16.msra.mxu0 0
        %1735 = vmatprep.subr.bf16.mxu0 0
        %1736 = vmatpush1.bf16.msra.mxu0 0
        %1737 = vmatprep.subr.bf16.mxu0 0
        %1738 = vmatpush1.bf16.msra.mxu0 0
        %1739 = vmatprep.subr.bf16.mxu0 0
        %1740 = vmatpush1.bf16.msra.mxu0 0
        %1741 = vmatprep.subr.bf16.mxu0 0
        %1742 = vmatpush1.bf16.msra.mxu0 0
        %1743 = vmatprep.subr.bf16.mxu0 0
        %1744 = vmatpush1.bf16.msra.mxu0 0
        %1745 = vmatprep.mubr.bf16.mxu0 0
        %1746 = vmatmul.mubr.bf16.gmra.mrb[0].mxu0 %v1627
        %v1747 = vpop.f32.mrb[0].mxu0
        %v1748 = vadd.f32 0.0, %v1747
        %v1749 = vpop.f32.mrb[0].mxu0
        %v1750 = vpop.f32.mrb[0].mxu0
        %v1751 = vadd.f32 0.0, %v1750
        %v1752 = vpop.f32.mrb[0].mxu0
        %1753 = vmatprep.mubr.bf16.mxu0 0
        %1754 = vmatmul.mubr.bf16.gmra.mrb[0].mxu0 %v1635
        %v1755 = vpop.f32.mrb[0].mxu0
        %v1756 = vadd.f32 0.0, %v1755
        %v1757 = vpop.f32.mrb[0].mxu0
        %v1758 = vpop.f32.mrb[0].mxu0
        %v1759 = vadd.f32 0.0, %v1758
        %v1760 = vpop.f32.mrb[0].mxu0
        %1761 = vmatprep.mubr.bf16.mxu0 0
        %1762 = vmatmul.mubr.bf16.gmra.mrb[0].mxu0 %v1643
        %v1763 = vpop.f32.mrb[0].mxu0
        %v1764 = vadd.f32 0.0, %v1763
        %v1765 = vpop.f32.mrb[0].mxu0
        %v1766 = vpop.f32.mrb[0].mxu0
        %v1767 = vadd.f32 0.0, %v1766
        %v1768 = vpop.f32.mrb[0].mxu0
        %1769 = vmatprep.mubr.bf16.mxu0 0
        %1770 = vmatmul.mubr.bf16.gmra.mrb[0].mxu0 %v1651
        %v1771 = vpop.f32.mrb[0].mxu0
        %v1772 = vadd.f32 0.0, %v1771
        %v1773 = vpop.f32.mrb[0].mxu0
        %v1774 = vpop.f32.mrb[0].mxu0
        %v1775 = vadd.f32 0.0, %v1774
        %v1776 = vpop.f32.mrb[0].mxu0
        %1777 = vmatprep.mubr.bf16.mxu0 0
        %1778 = vmatmul.mubr.bf16.gmra.mrb[0].mxu0 %v1659
        %v1779 = vpop.f32.mrb[0].mxu0
        %v1780 = vadd.f32 0.0, %v1779
        %v1781 = vpop.f32.mrb[0].mxu0
        %v1782 = vpop.f32.mrb[0].mxu0
        %v1783 = vadd.f32 0.0, %v1782
        %v1784 = vpop.f32.mrb[0].mxu0
        %1785 = vdwg.mxu0
        %v1786 = vadd.f32 %v1561, %v1748
        %v1787 = vadd.f32 %v1562, %v1751
        %v1788 = vadd.f32 %v1563, %v1756
        %v1789 = vadd.f32 %v1564, %v1759
        %v1790 = vadd.f32 %v1565, %v1764
        %v1791 = vadd.f32 %v1566, %v1767
        %v1792 = vadd.f32 %v1567, %v1772
        %v1793 = vadd.f32 %v1568, %v1775
        %v1794 = vadd.f32 %v1569, %v1780
        %v1795 = vadd.f32 %v1570, %v1783
        %1796 = vst [vmem:[#allocation3] sm:$0xff] %v1786
        %1797 = vst [vmem:[#allocation3 + $0x8] sm:$0xff] %v1787
        %1798 = vst [vmem:[#allocation3 + $0x10] sm:$0xff] %v1788
        %1799 = vst [vmem:[#allocation3 + $0x18] sm:$0xff] %v1789
        %1800 = vst [vmem:[#allocation3 + $0x20] sm:$0xff] %v1790
        %1801 = vst [vmem:[#allocation3 + $0x28] sm:$0xff] %v1791
        %1802 = vst [vmem:[#allocation3 + $0x30] sm:$0xff] %v1792
        %1803 = vst [vmem:[#allocation3 + $0x38] sm:$0xff] %v1793
        %1804 = vst [vmem:[#allocation3 + $0x40] sm:$0xff] %v1794
        %1805 = vst [vmem:[#allocation3 + $0x48] sm:$0xff] %v1795
        %v1806 = vld [vmem:[#allocation2 + $0x10] sm:$0xf]
        %v1807 = vld [vmem:[#allocation2 + $0x14] sm:$0xf]
        %v1808 = vld [vmem:[#allocation2 + $0x18] sm:$0xf]
        %v1809 = vld [vmem:[#allocation2 + $0x1c] sm:$0xf]
        %v1810 = vld [vmem:[#allocation2 + $0x20] sm:$0xf]
        %v1811 = vld [vmem:[#allocation2 + $0x24] sm:$0xf]
        %v1812 = vld [vmem:[#allocation2 + $0x28] sm:$0xf]
        %v1813 = vld [vmem:[#allocation2 + $0x2c] sm:$0xf]
        %v1814 = vld [vmem:[#allocation2 + $0x30] sm:$0xf]
        %v1815 = vld [vmem:[#allocation2 + $0x34] sm:$0xf]
        %v1816 = vld [vmem:[#allocation2 + $0x38] sm:$0x1]
        %v1817 = vld [vmem:[#allocation3] sm:$0xff]
        %v1818 = vld [vmem:[#allocation3 + $0x8] sm:$0xff]
        %v1819 = vld [vmem:[#allocation3 + $0x10] sm:$0xff]
        %v1820 = vld [vmem:[#allocation3 + $0x18] sm:$0xff]
        %v1821 = vld [vmem:[#allocation3 + $0x20] sm:$0xff]
        %v1822 = vld [vmem:[#allocation3 + $0x28] sm:$0xff]
        %v1823 = vld [vmem:[#allocation3 + $0x30] sm:$0xff]
        %v1824 = vld [vmem:[#allocation3 + $0x38] sm:$0xff]
        %v1825 = vld [vmem:[#allocation3 + $0x40] sm:$0xff]
        %v1826 = vld [vmem:[#allocation3 + $0x48] sm:$0xff]
        %s1827 = scalar_lea.vmem [#allocation4], 320
        %v1828 = vld [vmem:[%s1827] sm:$0xf]
        %v1829 = vld [vmem:[%s1827 + $0x4] sm:$0xf]
        %v1830 = vld [vmem:[%s1827 + $0x8] sm:$0xf]
        %v1831 = vld [vmem:[%s1827 + $0xc] sm:$0xf]
        %v1832 = vld [vmem:[%s1827 + $0x10] sm:$0xf]
        %v1833 = vld [vmem:[%s1827 + $0x14] sm:$0xf]
        %v1834 = vld [vmem:[%s1827 + $0x18] sm:$0xf]
        %v1835 = vld [vmem:[%s1827 + $0x1c] sm:$0xf]
        %v1836 = vld [vmem:[%s1827 + $0x20] sm:$0xf]
        %v1837 = vld [vmem:[%s1827 + $0x24] sm:$0xf]
        %v1838 = vld [vmem:[%s1827 + $0x28] sm:$0xf]
        %v1839 = vld [vmem:[%s1827 + $0x2c] sm:$0xf]
        %v1840 = vld [vmem:[%s1827 + $0x30] sm:$0xf]
        %v1841 = vld [vmem:[%s1827 + $0x34] sm:$0xf]
        %v1842 = vld [vmem:[%s1827 + $0x38] sm:$0xf]
        %v1843 = vld [vmem:[%s1827 + $0x3c] sm:$0xf]
        %v1855 = vunpack.c.l.b16 %v1806
        %v1856 = vunpack.c.l.b16 %v1807
        %v1857 = vunpack.c.l.b16 %v1808
        %v1858 = vunpack.c.l.b16 %v1809
        %v1859 = vunpack.c.l.b16 %v1810
        %v1860 = vunpack.c.l.b16 %v1811
        %v1861 = vunpack.c.l.b16 %v1812
        %v1862 = vunpack.c.l.b16 %v1813
        %v1863 = vunpack.c.l.b16 %v1814
        %v1864 = vunpack.c.l.b16 %v1815
        %v1865 = vunpack.c.l.b16 %v1816
        %v1866 = vpack.c.b16 %v1856, %v1855
        %v1867 = vpack.c.b16 %v1858, %v1857
        %v1868 = vpack.c.b16 %v1860, %v1859
        %v1869 = vpack.c.b16 %v1862, %v1861
        %v1870 = vpack.c.b16 %v1864, %v1863
        %v1871 = vpack.c.b16 %v1865, %v1865
        %v1873 = vshrl.u32 %v1866, 16
        %v1875 = vshll.u32 %v1866, 16
        %v1877 = vrot.slane %v1875, 1
        %v1878 = vor.u32 %v1873, %v1877
        %v1880 = vshll.u32 %v1867, 16
        %v1882 = vrot.slane %v1880, 1
        %v1883 = vsel %vm1359, %v1878, %v1882
        %v1884 = vshrl.u32 %v1867, 16
        %v1886 = vor.u32 %v1884, %v1882
        %v1888 = vshll.u32 %v1868, 16
        %v1890 = vrot.slane %v1888, 1
        %v1891 = vsel %vm1359, %v1886, %v1890
        %v1892 = vshrl.u32 %v1868, 16
        %v1894 = vor.u32 %v1892, %v1890
        %v1896 = vshll.u32 %v1869, 16
        %v1898 = vrot.slane %v1896, 1
        %v1899 = vsel %vm1359, %v1894, %v1898
        %v1900 = vshrl.u32 %v1869, 16
        %v1902 = vor.u32 %v1900, %v1898
        %v1904 = vshll.u32 %v1870, 16
        %v1906 = vrot.slane %v1904, 1
        %v1907 = vsel %vm1359, %v1902, %v1906
        %v1908 = vshrl.u32 %v1870, 16
        %v1910 = vor.u32 %v1908, %v1906
        %v1912 = vshll.u32 %v1871, 16
        %v1914 = vrot.slane %v1912, 1
        %v1915 = vsel %vm1359, %v1910, %v1914
        %v1937 = vunpack.c.l.b16 %v1828
        %v1938 = vunpack.c.l.b16 %v1829
        %v1939 = vunpack.c.l.b16 %v1830
        %v1940 = vunpack.c.l.b16 %v1831
        %v1941 = vunpack.c.l.b16 %v1832
        %v1942 = vunpack.c.l.b16 %v1833
        %v1943 = vunpack.c.l.b16 %v1834
        %v1944 = vunpack.c.l.b16 %v1835
        %v1945 = vunpack.c.l.b16 %v1836
        %v1946 = vunpack.c.l.b16 %v1837
        %v1947 = vunpack.c.l.b16 %v1838
        %v1948 = vunpack.c.l.b16 %v1839
        %v1949 = vunpack.c.l.b16 %v1840
        %v1950 = vunpack.c.l.b16 %v1841
        %v1951 = vunpack.c.l.b16 %v1842
        %v1952 = vunpack.c.l.b16 %v1843
        %v1953 = vpack.c.b16 %v1938, %v1937
        %v1954 = vpack.c.b16 %v1940, %v1939
        %v1955 = vpack.c.b16 %v1942, %v1941
        %v1956 = vpack.c.b16 %v1944, %v1943
        %v1957 = vpack.c.b16 %v1946, %v1945
        %v1958 = vpack.c.b16 %v1948, %v1947
        %v1959 = vpack.c.b16 %v1950, %v1949
        %v1960 = vpack.c.b16 %v1952, %v1951
        %1969 = vmatprep.subr.bf16.mxu0 0
        %1970 = vmatpush1.bf16.msra.mxu0 %v1953
        %1971 = vmatprep.subr.bf16.mxu0 0
        %1972 = vmatpush1.bf16.msra.mxu0 %v1954
        %1973 = vmatprep.subr.bf16.mxu0 0
        %1974 = vmatpush1.bf16.msra.mxu0 %v1955
        %1975 = vmatprep.subr.bf16.mxu0 0
        %1976 = vmatpush1.bf16.msra.mxu0 %v1956
        %1977 = vmatprep.subr.bf16.mxu0 0
        %1978 = vmatpush1.bf16.msra.mxu0 %v1957
        %1979 = vmatprep.subr.bf16.mxu0 0
        %1980 = vmatpush1.bf16.msra.mxu0 %v1958
        %1981 = vmatprep.subr.bf16.mxu0 0
        %1982 = vmatpush1.bf16.msra.mxu0 %v1959
        %1983 = vmatprep.subr.bf16.mxu0 0
        %1984 = vmatpush1.bf16.msra.mxu0 %v1960
        %1985 = vmatprep.subr.bf16.mxu0 0
        %1986 = vmatpush1.bf16.msra.mxu0 0
        %1987 = vmatprep.subr.bf16.mxu0 0
        %1988 = vmatpush1.bf16.msra.mxu0 0
        %1989 = vmatprep.subr.bf16.mxu0 0
        %1990 = vmatpush1.bf16.msra.mxu0 0
        %1991 = vmatprep.subr.bf16.mxu0 0
        %1992 = vmatpush1.bf16.msra.mxu0 0
        %1993 = vmatprep.subr.bf16.mxu0 0
        %1994 = vmatpush1.bf16.msra.mxu0 0
        %1995 = vmatprep.subr.bf16.mxu0 0
        %1996 = vmatpush1.bf16.msra.mxu0 0
        %1997 = vmatprep.subr.bf16.mxu0 0
        %1998 = vmatpush1.bf16.msra.mxu0 0
        %1999 = vmatprep.subr.bf16.mxu0 0
        %2000 = vmatpush1.bf16.msra.mxu0 0
        %2001 = vmatprep.mubr.bf16.mxu0 0
        %2002 = vmatmul.mubr.bf16.gmra.mrb[0].mxu0 %v1883
        %v2003 = vpop.f32.mrb[0].mxu0
        %v2004 = vadd.f32 0.0, %v2003
        %v2005 = vpop.f32.mrb[0].mxu0
        %v2006 = vpop.f32.mrb[0].mxu0
        %v2007 = vadd.f32 0.0, %v2006
        %v2008 = vpop.f32.mrb[0].mxu0
        %2009 = vmatprep.mubr.bf16.mxu0 0
        %2010 = vmatmul.mubr.bf16.gmra.mrb[0].mxu0 %v1891
        %v2011 = vpop.f32.mrb[0].mxu0
        %v2012 = vadd.f32 0.0, %v2011
        %v2013 = vpop.f32.mrb[0].mxu0
        %v2014 = vpop.f32.mrb[0].mxu0
        %v2015 = vadd.f32 0.0, %v2014
        %v2016 = vpop.f32.mrb[0].mxu0
        %2017 = vmatprep.mubr.bf16.mxu0 0
        %2018 = vmatmul.mubr.bf16.gmra.mrb[0].mxu0 %v1899
        %v2019 = vpop.f32.mrb[0].mxu0
        %v2020 = vadd.f32 0.0, %v2019
        %v2021 = vpop.f32.mrb[0].mxu0
        %v2022 = vpop.f32.mrb[0].mxu0
        %v2023 = vadd.f32 0.0, %v2022
        %v2024 = vpop.f32.mrb[0].mxu0
        %2025 = vmatprep.mubr.bf16.mxu0 0
        %2026 = vmatmul.mubr.bf16.gmra.mrb[0].mxu0 %v1907
        %v2027 = vpop.f32.mrb[0].mxu0
        %v2028 = vadd.f32 0.0, %v2027
        %v2029 = vpop.f32.mrb[0].mxu0
        %v2030 = vpop.f32.mrb[0].mxu0
        %v2031 = vadd.f32 0.0, %v2030
        %v2032 = vpop.f32.mrb[0].mxu0
        %2033 = vmatprep.mubr.bf16.mxu0 0
        %2034 = vmatmul.mubr.bf16.gmra.mrb[0].mxu0 %v1915
        %v2035 = vpop.f32.mrb[0].mxu0
        %v2036 = vadd.f32 0.0, %v2035
        %v2037 = vpop.f32.mrb[0].mxu0
        %v2038 = vpop.f32.mrb[0].mxu0
        %v2039 = vadd.f32 0.0, %v2038
        %v2040 = vpop.f32.mrb[0].mxu0
        %2041 = vdwg.mxu0
        %v2042 = vadd.f32 %v1817, %v2004
        %v2043 = vadd.f32 %v1818, %v2007
        %v2044 = vadd.f32 %v1819, %v2012
        %v2045 = vadd.f32 %v1820, %v2015
        %v2046 = vadd.f32 %v1821, %v2020
        %v2047 = vadd.f32 %v1822, %v2023
        %v2048 = vadd.f32 %v1823, %v2028
        %v2049 = vadd.f32 %v1824, %v2031
        %v2050 = vadd.f32 %v1825, %v2036
        %v2051 = vadd.f32 %v1826, %v2039
        %2052 = vst [vmem:[#allocation3] sm:$0xff] %v2042
        %2053 = vst [vmem:[#allocation3 + $0x8] sm:$0xff] %v2043
        %2054 = vst [vmem:[#allocation3 + $0x10] sm:$0xff] %v2044
        %2055 = vst [vmem:[#allocation3 + $0x18] sm:$0xff] %v2045
        %2056 = vst [vmem:[#allocation3 + $0x20] sm:$0xff] %v2046
        %2057 = vst [vmem:[#allocation3 + $0x28] sm:$0xff] %v2047
        %2058 = vst [vmem:[#allocation3 + $0x30] sm:$0xff] %v2048
        %2059 = vst [vmem:[#allocation3 + $0x38] sm:$0xff] %v2049
        %2060 = vst [vmem:[#allocation3 + $0x40] sm:$0xff] %v2050
        %2061 = vst [vmem:[#allocation3 + $0x48] sm:$0xff] %v2051
        %v2062 = vld [vmem:[#allocation2] sm:$0xe]
        %v2063 = vld [vmem:[#allocation2 + $0x4] sm:$0xf]
        %v2064 = vld [vmem:[#allocation2 + $0x8] sm:$0xf]
        %v2065 = vld [vmem:[#allocation2 + $0xc] sm:$0xf]
        %v2066 = vld [vmem:[#allocation2 + $0x10] sm:$0xf]
        %v2067 = vld [vmem:[#allocation2 + $0x14] sm:$0xf]
        %v2068 = vld [vmem:[#allocation2 + $0x18] sm:$0xf]
        %v2069 = vld [vmem:[#allocation2 + $0x1c] sm:$0xf]
        %v2070 = vld [vmem:[#allocation2 + $0x20] sm:$0xf]
        %v2071 = vld [vmem:[#allocation2 + $0x24] sm:$0xf]
        %v2072 = vld [vmem:[#allocation2 + $0x28] sm:$0x1]
        %v2073 = vld [vmem:[#allocation3] sm:$0xff]
        %v2074 = vld [vmem:[#allocation3 + $0x8] sm:$0xff]
        %v2075 = vld [vmem:[#allocation3 + $0x10] sm:$0xff]
        %v2076 = vld [vmem:[#allocation3 + $0x18] sm:$0xff]
        %v2077 = vld [vmem:[#allocation3 + $0x20] sm:$0xff]
        %v2078 = vld [vmem:[#allocation3 + $0x28] sm:$0xff]
        %v2079 = vld [vmem:[#allocation3 + $0x30] sm:$0xff]
        %v2080 = vld [vmem:[#allocation3 + $0x38] sm:$0xff]
        %v2081 = vld [vmem:[#allocation3 + $0x40] sm:$0xff]
        %v2082 = vld [vmem:[#allocation3 + $0x48] sm:$0xff]
        %s2083 = scalar_lea.vmem [#allocation4], 384
        %v2084 = vld [vmem:[%s2083] sm:$0xf]
        %v2085 = vld [vmem:[%s2083 + $0x4] sm:$0xf]
        %v2086 = vld [vmem:[%s2083 + $0x8] sm:$0xf]
        %v2087 = vld [vmem:[%s2083 + $0xc] sm:$0xf]
        %v2088 = vld [vmem:[%s2083 + $0x10] sm:$0xf]
        %v2089 = vld [vmem:[%s2083 + $0x14] sm:$0xf]
        %v2090 = vld [vmem:[%s2083 + $0x18] sm:$0xf]
        %v2091 = vld [vmem:[%s2083 + $0x1c] sm:$0xf]
        %v2092 = vld [vmem:[%s2083 + $0x20] sm:$0xf]
        %v2093 = vld [vmem:[%s2083 + $0x24] sm:$0xf]
        %v2094 = vld [vmem:[%s2083 + $0x28] sm:$0xf]
        %v2095 = vld [vmem:[%s2083 + $0x2c] sm:$0xf]
        %v2096 = vld [vmem:[%s2083 + $0x30] sm:$0xf]
        %v2097 = vld [vmem:[%s2083 + $0x34] sm:$0xf]
        %v2098 = vld [vmem:[%s2083 + $0x38] sm:$0xf]
        %v2099 = vld [vmem:[%s2083 + $0x3c] sm:$0xf]
        %v2111 = vunpack.c.l.b16 %v2062
        %v2112 = vunpack.c.l.b16 %v2063
        %v2113 = vunpack.c.l.b16 %v2064
        %v2114 = vunpack.c.l.b16 %v2065
        %v2115 = vunpack.c.l.b16 %v2066
        %v2116 = vunpack.c.l.b16 %v2067
        %v2117 = vunpack.c.l.b16 %v2068
        %v2118 = vunpack.c.l.b16 %v2069
        %v2119 = vunpack.c.l.b16 %v2070
        %v2120 = vunpack.c.l.b16 %v2071
        %v2121 = vunpack.c.l.b16 %v2072
        %v2122 = vpack.c.b16 %v2112, %v2111
        %v2123 = vpack.c.b16 %v2114, %v2113
        %v2124 = vpack.c.b16 %v2116, %v2115
        %v2125 = vpack.c.b16 %v2118, %v2117
        %v2126 = vpack.c.b16 %v2120, %v2119
        %v2127 = vpack.c.b16 %v2121, %v2121
        %vm2128 = vcmask 1046528
        %v2129 = vrot.slane %v2122, 1
        %v2130 = vrot.slane %v2123, 1
        %v2131 = vsel %vm2128, %v2129, %v2130
        %v2132 = vrot.slane %v2124, 1
        %v2133 = vsel %vm2128, %v2130, %v2132
        %v2134 = vrot.slane %v2125, 1
        %v2135 = vsel %vm2128, %v2132, %v2134
        %v2136 = vrot.slane %v2126, 1
        %v2137 = vsel %vm2128, %v2134, %v2136
        %v2138 = vrot.slane %v2127, 1
        %v2139 = vsel %vm2128, %v2136, %v2138
        %v2161 = vunpack.c.l.b16 %v2084
        %v2162 = vunpack.c.l.b16 %v2085
        %v2163 = vunpack.c.l.b16 %v2086
        %v2164 = vunpack.c.l.b16 %v2087
        %v2165 = vunpack.c.l.b16 %v2088
        %v2166 = vunpack.c.l.b16 %v2089
        %v2167 = vunpack.c.l.b16 %v2090
        %v2168 = vunpack.c.l.b16 %v2091
        %v2169 = vunpack.c.l.b16 %v2092
        %v2170 = vunpack.c.l.b16 %v2093
        %v2171 = vunpack.c.l.b16 %v2094
        %v2172 = vunpack.c.l.b16 %v2095
        %v2173 = vunpack.c.l.b16 %v2096
        %v2174 = vunpack.c.l.b16 %v2097
        %v2175 = vunpack.c.l.b16 %v2098
        %v2176 = vunpack.c.l.b16 %v2099
        %v2177 = vpack.c.b16 %v2162, %v2161
        %v2178 = vpack.c.b16 %v2164, %v2163
        %v2179 = vpack.c.b16 %v2166, %v2165
        %v2180 = vpack.c.b16 %v2168, %v2167
        %v2181 = vpack.c.b16 %v2170, %v2169
        %v2182 = vpack.c.b16 %v2172, %v2171
        %v2183 = vpack.c.b16 %v2174, %v2173
        %v2184 = vpack.c.b16 %v2176, %v2175
        %2193 = vmatprep.subr.bf16.mxu0 0
        %2194 = vmatpush1.bf16.msra.mxu0 %v2177
        %2195 = vmatprep.subr.bf16.mxu0 0
        %2196 = vmatpush1.bf16.msra.mxu0 %v2178
        %2197 = vmatprep.subr.bf16.mxu0 0
        %2198 = vmatpush1.bf16.msra.mxu0 %v2179
        %2199 = vmatprep.subr.bf16.mxu0 0
        %2200 = vmatpush1.bf16.msra.mxu0 %v2180
        %2201 = vmatprep.subr.bf16.mxu0 0
        %2202 = vmatpush1.bf16.msra.mxu0 %v2181
        %2203 = vmatprep.subr.bf16.mxu0 0
        %2204 = vmatpush1.bf16.msra.mxu0 %v2182
        %2205 = vmatprep.subr.bf16.mxu0 0
        %2206 = vmatpush1.bf16.msra.mxu0 %v2183
        %2207 = vmatprep.subr.bf16.mxu0 0
        %2208 = vmatpush1.bf16.msra.mxu0 %v2184
        %2209 = vmatprep.subr.bf16.mxu0 0
        %2210 = vmatpush1.bf16.msra.mxu0 0
        %2211 = vmatprep.subr.bf16.mxu0 0
        %2212 = vmatpush1.bf16.msra.mxu0 0
        %2213 = vmatprep.subr.bf16.mxu0 0
        %2214 = vmatpush1.bf16.msra.mxu0 0
        %2215 = vmatprep.subr.bf16.mxu0 0
        %2216 = vmatpush1.bf16.msra.mxu0 0
        %2217 = vmatprep.subr.bf16.mxu0 0
        %2218 = vmatpush1.bf16.msra.mxu0 0
        %2219 = vmatprep.subr.bf16.mxu0 0
        %2220 = vmatpush1.bf16.msra.mxu0 0
        %2221 = vmatprep.subr.bf16.mxu0 0
        %2222 = vmatpush1.bf16.msra.mxu0 0
        %2223 = vmatprep.subr.bf16.mxu0 0
        %2224 = vmatpush1.bf16.msra.mxu0 0
        %2225 = vmatprep.mubr.bf16.mxu0 0
        %2226 = vmatmul.mubr.bf16.gmra.mrb[0].mxu0 %v2131
        %v2227 = vpop.f32.mrb[0].mxu0
        %v2228 = vadd.f32 0.0, %v2227
        %v2229 = vpop.f32.mrb[0].mxu0
        %v2230 = vpop.f32.mrb[0].mxu0
        %v2231 = vadd.f32 0.0, %v2230
        %v2232 = vpop.f32.mrb[0].mxu0
        %2233 = vmatprep.mubr.bf16.mxu0 0
        %2234 = vmatmul.mubr.bf16.gmra.mrb[0].mxu0 %v2133
        %v2235 = vpop.f32.mrb[0].mxu0
        %v2236 = vadd.f32 0.0, %v2235
        %v2237 = vpop.f32.mrb[0].mxu0
        %v2238 = vpop.f32.mrb[0].mxu0
        %v2239 = vadd.f32 0.0, %v2238
        %v2240 = vpop.f32.mrb[0].mxu0
        %2241 = vmatprep.mubr.bf16.mxu0 0
        %2242 = vmatmul.mubr.bf16.gmra.mrb[0].mxu0 %v2135
        %v2243 = vpop.f32.mrb[0].mxu0
        %v2244 = vadd.f32 0.0, %v2243
        %v2245 = vpop.f32.mrb[0].mxu0
        %v2246 = vpop.f32.mrb[0].mxu0
        %v2247 = vadd.f32 0.0, %v2246
        %v2248 = vpop.f32.mrb[0].mxu0
        %2249 = vmatprep.mubr.bf16.mxu0 0
        %2250 = vmatmul.mubr.bf16.gmra.mrb[0].mxu0 %v2137
        %v2251 = vpop.f32.mrb[0].mxu0
        %v2252 = vadd.f32 0.0, %v2251
        %v2253 = vpop.f32.mrb[0].mxu0
        %v2254 = vpop.f32.mrb[0].mxu0
        %v2255 = vadd.f32 0.0, %v2254
        %v2256 = vpop.f32.mrb[0].mxu0
        %2257 = vmatprep.mubr.bf16.mxu0 0
        %2258 = vmatmul.mubr.bf16.gmra.mrb[0].mxu0 %v2139
        %v2259 = vpop.f32.mrb[0].mxu0
        %v2260 = vadd.f32 0.0, %v2259
        %v2261 = vpop.f32.mrb[0].mxu0
        %v2262 = vpop.f32.mrb[0].mxu0
        %v2263 = vadd.f32 0.0, %v2262
        %v2264 = vpop.f32.mrb[0].mxu0
        %2265 = vdwg.mxu0
        %v2266 = vadd.f32 %v2073, %v2228
        %v2267 = vadd.f32 %v2074, %v2231
        %v2268 = vadd.f32 %v2075, %v2236
        %v2269 = vadd.f32 %v2076, %v2239
        %v2270 = vadd.f32 %v2077, %v2244
        %v2271 = vadd.f32 %v2078, %v2247
        %v2272 = vadd.f32 %v2079, %v2252
        %v2273 = vadd.f32 %v2080, %v2255
        %v2274 = vadd.f32 %v2081, %v2260
        %v2275 = vadd.f32 %v2082, %v2263
        %2276 = vst [vmem:[#allocation3] sm:$0xff] %v2266
        %2277 = vst [vmem:[#allocation3 + $0x8] sm:$0xff] %v2267
        %2278 = vst [vmem:[#allocation3 + $0x10] sm:$0xff] %v2268
        %2279 = vst [vmem:[#allocation3 + $0x18] sm:$0xff] %v2269
        %2280 = vst [vmem:[#allocation3 + $0x20] sm:$0xff] %v2270
        %2281 = vst [vmem:[#allocation3 + $0x28] sm:$0xff] %v2271
        %2282 = vst [vmem:[#allocation3 + $0x30] sm:$0xff] %v2272
        %2283 = vst [vmem:[#allocation3 + $0x38] sm:$0xff] %v2273
        %2284 = vst [vmem:[#allocation3 + $0x40] sm:$0xff] %v2274
        %2285 = vst [vmem:[#allocation3 + $0x48] sm:$0xff] %v2275
        %v2286 = vld [vmem:[#allocation2 + $0x8] sm:$0xe]
        %v2287 = vld [vmem:[#allocation2 + $0xc] sm:$0xf]
        %v2288 = vld [vmem:[#allocation2 + $0x10] sm:$0xf]
        %v2289 = vld [vmem:[#allocation2 + $0x14] sm:$0xf]
        %v2290 = vld [vmem:[#allocation2 + $0x18] sm:$0xf]
        %v2291 = vld [vmem:[#allocation2 + $0x1c] sm:$0xf]
        %v2292 = vld [vmem:[#allocation2 + $0x20] sm:$0xf]
        %v2293 = vld [vmem:[#allocation2 + $0x24] sm:$0xf]
        %v2294 = vld [vmem:[#allocation2 + $0x28] sm:$0xf]
        %v2295 = vld [vmem:[#allocation2 + $0x2c] sm:$0xf]
        %v2296 = vld [vmem:[#allocation2 + $0x30] sm:$0x1]
        %v2297 = vld [vmem:[#allocation3] sm:$0xff]
        %v2298 = vld [vmem:[#allocation3 + $0x8] sm:$0xff]
        %v2299 = vld [vmem:[#allocation3 + $0x10] sm:$0xff]
        %v2300 = vld [vmem:[#allocation3 + $0x18] sm:$0xff]
        %v2301 = vld [vmem:[#allocation3 + $0x20] sm:$0xff]
        %v2302 = vld [vmem:[#allocation3 + $0x28] sm:$0xff]
        %v2303 = vld [vmem:[#allocation3 + $0x30] sm:$0xff]
        %v2304 = vld [vmem:[#allocation3 + $0x38] sm:$0xff]
        %v2305 = vld [vmem:[#allocation3 + $0x40] sm:$0xff]
        %v2306 = vld [vmem:[#allocation3 + $0x48] sm:$0xff]
        %s2307 = scalar_lea.vmem [#allocation4], 448
        %v2308 = vld [vmem:[%s2307] sm:$0xf]
        %v2309 = vld [vmem:[%s2307 + $0x4] sm:$0xf]
        %v2310 = vld [vmem:[%s2307 + $0x8] sm:$0xf]
        %v2311 = vld [vmem:[%s2307 + $0xc] sm:$0xf]
        %v2312 = vld [vmem:[%s2307 + $0x10] sm:$0xf]
        %v2313 = vld [vmem:[%s2307 + $0x14] sm:$0xf]
        %v2314 = vld [vmem:[%s2307 + $0x18] sm:$0xf]
        %v2315 = vld [vmem:[%s2307 + $0x1c] sm:$0xf]
        %v2316 = vld [vmem:[%s2307 + $0x20] sm:$0xf]
        %v2317 = vld [vmem:[%s2307 + $0x24] sm:$0xf]
        %v2318 = vld [vmem:[%s2307 + $0x28] sm:$0xf]
        %v2319 = vld [vmem:[%s2307 + $0x2c] sm:$0xf]
        %v2320 = vld [vmem:[%s2307 + $0x30] sm:$0xf]
        %v2321 = vld [vmem:[%s2307 + $0x34] sm:$0xf]
        %v2322 = vld [vmem:[%s2307 + $0x38] sm:$0xf]
        %v2323 = vld [vmem:[%s2307 + $0x3c] sm:$0xf]
        %v2335 = vunpack.c.l.b16 %v2286
        %v2336 = vunpack.c.l.b16 %v2287
        %v2337 = vunpack.c.l.b16 %v2288
        %v2338 = vunpack.c.l.b16 %v2289
        %v2339 = vunpack.c.l.b16 %v2290
        %v2340 = vunpack.c.l.b16 %v2291
        %v2341 = vunpack.c.l.b16 %v2292
        %v2342 = vunpack.c.l.b16 %v2293
        %v2343 = vunpack.c.l.b16 %v2294
        %v2344 = vunpack.c.l.b16 %v2295
        %v2345 = vunpack.c.l.b16 %v2296
        %v2346 = vpack.c.b16 %v2336, %v2335
        %v2347 = vpack.c.b16 %v2338, %v2337
        %v2348 = vpack.c.b16 %v2340, %v2339
        %v2349 = vpack.c.b16 %v2342, %v2341
        %v2350 = vpack.c.b16 %v2344, %v2343
        %v2351 = vpack.c.b16 %v2345, %v2345
        %v2352 = vrot.slane %v2346, 1
        %v2353 = vrot.slane %v2347, 1
        %v2354 = vsel %vm2128, %v2352, %v2353
        %v2355 = vrot.slane %v2348, 1
        %v2356 = vsel %vm2128, %v2353, %v2355
        %v2357 = vrot.slane %v2349, 1
        %v2358 = vsel %vm2128, %v2355, %v2357
        %v2359 = vrot.slane %v2350, 1
        %v2360 = vsel %vm2128, %v2357, %v2359
        %v2361 = vrot.slane %v2351, 1
        %v2362 = vsel %vm2128, %v2359, %v2361
        %v2384 = vunpack.c.l.b16 %v2308
        %v2385 = vunpack.c.l.b16 %v2309
        %v2386 = vunpack.c.l.b16 %v2310
        %v2387 = vunpack.c.l.b16 %v2311
        %v2388 = vunpack.c.l.b16 %v2312
        %v2389 = vunpack.c.l.b16 %v2313
        %v2390 = vunpack.c.l.b16 %v2314
        %v2391 = vunpack.c.l.b16 %v2315
        %v2392 = vunpack.c.l.b16 %v2316
        %v2393 = vunpack.c.l.b16 %v2317
        %v2394 = vunpack.c.l.b16 %v2318
        %v2395 = vunpack.c.l.b16 %v2319
        %v2396 = vunpack.c.l.b16 %v2320
        %v2397 = vunpack.c.l.b16 %v2321
        %v2398 = vunpack.c.l.b16 %v2322
        %v2399 = vunpack.c.l.b16 %v2323
        %v2400 = vpack.c.b16 %v2385, %v2384
        %v2401 = vpack.c.b16 %v2387, %v2386
        %v2402 = vpack.c.b16 %v2389, %v2388
        %v2403 = vpack.c.b16 %v2391, %v2390
        %v2404 = vpack.c.b16 %v2393, %v2392
        %v2405 = vpack.c.b16 %v2395, %v2394
        %v2406 = vpack.c.b16 %v2397, %v2396
        %v2407 = vpack.c.b16 %v2399, %v2398
        %2416 = vmatprep.subr.bf16.mxu0 0
        %2417 = vmatpush1.bf16.msra.mxu0 %v2400
        %2418 = vmatprep.subr.bf16.mxu0 0
        %2419 = vmatpush1.bf16.msra.mxu0 %v2401
        %2420 = vmatprep.subr.bf16.mxu0 0
        %2421 = vmatpush1.bf16.msra.mxu0 %v2402
        %2422 = vmatprep.subr.bf16.mxu0 0
        %2423 = vmatpush1.bf16.msra.mxu0 %v2403
        %2424 = vmatprep.subr.bf16.mxu0 0
        %2425 = vmatpush1.bf16.msra.mxu0 %v2404
        %2426 = vmatprep.subr.bf16.mxu0 0
        %2427 = vmatpush1.bf16.msra.mxu0 %v2405
        %2428 = vmatprep.subr.bf16.mxu0 0
        %2429 = vmatpush1.bf16.msra.mxu0 %v2406
        %2430 = vmatprep.subr.bf16.mxu0 0
        %2431 = vmatpush1.bf16.msra.mxu0 %v2407
        %2432 = vmatprep.subr.bf16.mxu0 0
        %2433 = vmatpush1.bf16.msra.mxu0 0
        %2434 = vmatprep.subr.bf16.mxu0 0
        %2435 = vmatpush1.bf16.msra.mxu0 0
        %2436 = vmatprep.subr.bf16.mxu0 0
        %2437 = vmatpush1.bf16.msra.mxu0 0
        %2438 = vmatprep.subr.bf16.mxu0 0
        %2439 = vmatpush1.bf16.msra.mxu0 0
        %2440 = vmatprep.subr.bf16.mxu0 0
        %2441 = vmatpush1.bf16.msra.mxu0 0
        %2442 = vmatprep.subr.bf16.mxu0 0
        %2443 = vmatpush1.bf16.msra.mxu0 0
        %2444 = vmatprep.subr.bf16.mxu0 0
        %2445 = vmatpush1.bf16.msra.mxu0 0
        %2446 = vmatprep.subr.bf16.mxu0 0
        %2447 = vmatpush1.bf16.msra.mxu0 0
        %2448 = vmatprep.mubr.bf16.mxu0 0
        %2449 = vmatmul.mubr.bf16.gmra.mrb[0].mxu0 %v2354
        %v2450 = vpop.f32.mrb[0].mxu0
        %v2451 = vadd.f32 0.0, %v2450
        %v2452 = vpop.f32.mrb[0].mxu0
        %v2453 = vpop.f32.mrb[0].mxu0
        %v2454 = vadd.f32 0.0, %v2453
        %v2455 = vpop.f32.mrb[0].mxu0
        %2456 = vmatprep.mubr.bf16.mxu0 0
        %2457 = vmatmul.mubr.bf16.gmra.mrb[0].mxu0 %v2356
        %v2458 = vpop.f32.mrb[0].mxu0
        %v2459 = vadd.f32 0.0, %v2458
        %v2460 = vpop.f32.mrb[0].mxu0
        %v2461 = vpop.f32.mrb[0].mxu0
        %v2462 = vadd.f32 0.0, %v2461
        %v2463 = vpop.f32.mrb[0].mxu0
        %2464 = vmatprep.mubr.bf16.mxu0 0
        %2465 = vmatmul.mubr.bf16.gmra.mrb[0].mxu0 %v2358
        %v2466 = vpop.f32.mrb[0].mxu0
        %v2467 = vadd.f32 0.0, %v2466
        %v2468 = vpop.f32.mrb[0].mxu0
        %v2469 = vpop.f32.mrb[0].mxu0
        %v2470 = vadd.f32 0.0, %v2469
        %v2471 = vpop.f32.mrb[0].mxu0
        %2472 = vmatprep.mubr.bf16.mxu0 0
        %2473 = vmatmul.mubr.bf16.gmra.mrb[0].mxu0 %v2360
        %v2474 = vpop.f32.mrb[0].mxu0
        %v2475 = vadd.f32 0.0, %v2474
        %v2476 = vpop.f32.mrb[0].mxu0
        %v2477 = vpop.f32.mrb[0].mxu0
        %v2478 = vadd.f32 0.0, %v2477
        %v2479 = vpop.f32.mrb[0].mxu0
        %2480 = vmatprep.mubr.bf16.mxu0 0
        %2481 = vmatmul.mubr.bf16.gmra.mrb[0].mxu0 %v2362
        %v2482 = vpop.f32.mrb[0].mxu0
        %v2483 = vadd.f32 0.0, %v2482
        %v2484 = vpop.f32.mrb[0].mxu0
        %v2485 = vpop.f32.mrb[0].mxu0
        %v2486 = vadd.f32 0.0, %v2485
        %v2487 = vpop.f32.mrb[0].mxu0
        %2488 = vdwg.mxu0
        %v2489 = vadd.f32 %v2297, %v2451
        %v2490 = vadd.f32 %v2298, %v2454
        %v2491 = vadd.f32 %v2299, %v2459
        %v2492 = vadd.f32 %v2300, %v2462
        %v2493 = vadd.f32 %v2301, %v2467
        %v2494 = vadd.f32 %v2302, %v2470
        %v2495 = vadd.f32 %v2303, %v2475
        %v2496 = vadd.f32 %v2304, %v2478
        %v2497 = vadd.f32 %v2305, %v2483
        %v2498 = vadd.f32 %v2306, %v2486
        %2499 = vst [vmem:[#allocation3] sm:$0xff] %v2489
        %2500 = vst [vmem:[#allocation3 + $0x8] sm:$0xff] %v2490
        %2501 = vst [vmem:[#allocation3 + $0x10] sm:$0xff] %v2491
        %2502 = vst [vmem:[#allocation3 + $0x18] sm:$0xff] %v2492
        %2503 = vst [vmem:[#allocation3 + $0x20] sm:$0xff] %v2493
        %2504 = vst [vmem:[#allocation3 + $0x28] sm:$0xff] %v2494
        %2505 = vst [vmem:[#allocation3 + $0x30] sm:$0xff] %v2495
        %2506 = vst [vmem:[#allocation3 + $0x38] sm:$0xff] %v2496
        %2507 = vst [vmem:[#allocation3 + $0x40] sm:$0xff] %v2497
        %2508 = vst [vmem:[#allocation3 + $0x48] sm:$0xff] %v2498
        %v2509 = vld [vmem:[#allocation2 + $0x10] sm:$0xe]
        %v2510 = vld [vmem:[#allocation2 + $0x14] sm:$0xf]
        %v2511 = vld [vmem:[#allocation2 + $0x18] sm:$0xf]
        %v2512 = vld [vmem:[#allocation2 + $0x1c] sm:$0xf]
        %v2513 = vld [vmem:[#allocation2 + $0x20] sm:$0xf]
        %v2514 = vld [vmem:[#allocation2 + $0x24] sm:$0xf]
        %v2515 = vld [vmem:[#allocation2 + $0x28] sm:$0xf]
        %v2516 = vld [vmem:[#allocation2 + $0x2c] sm:$0xf]
        %v2517 = vld [vmem:[#allocation2 + $0x30] sm:$0xf]
        %v2518 = vld [vmem:[#allocation2 + $0x34] sm:$0xf]
        %v2519 = vld [vmem:[#allocation2 + $0x38] sm:$0x1]
        %v2520 = vld [vmem:[#allocation3] sm:$0xff]
        %v2521 = vld [vmem:[#allocation3 + $0x8] sm:$0xff]
        %v2522 = vld [vmem:[#allocation3 + $0x10] sm:$0xff]
        %v2523 = vld [vmem:[#allocation3 + $0x18] sm:$0xff]
        %v2524 = vld [vmem:[#allocation3 + $0x20] sm:$0xff]
        %v2525 = vld [vmem:[#allocation3 + $0x28] sm:$0xff]
        %v2526 = vld [vmem:[#allocation3 + $0x30] sm:$0xff]
        %v2527 = vld [vmem:[#allocation3 + $0x38] sm:$0xff]
        %v2528 = vld [vmem:[#allocation3 + $0x40] sm:$0xff]
        %v2529 = vld [vmem:[#allocation3 + $0x48] sm:$0xff]
        %s2530 = scalar_lea.vmem [#allocation4], 512
        %v2531 = vld [vmem:[%s2530] sm:$0xf]
        %v2532 = vld [vmem:[%s2530 + $0x4] sm:$0xf]
        %v2533 = vld [vmem:[%s2530 + $0x8] sm:$0xf]
        %v2534 = vld [vmem:[%s2530 + $0xc] sm:$0xf]
        %v2535 = vld [vmem:[%s2530 + $0x10] sm:$0xf]
        %v2536 = vld [vmem:[%s2530 + $0x14] sm:$0xf]
        %v2537 = vld [vmem:[%s2530 + $0x18] sm:$0xf]
        %v2538 = vld [vmem:[%s2530 + $0x1c] sm:$0xf]
        %v2539 = vld [vmem:[%s2530 + $0x20] sm:$0xf]
        %v2540 = vld [vmem:[%s2530 + $0x24] sm:$0xf]
        %v2541 = vld [vmem:[%s2530 + $0x28] sm:$0xf]
        %v2542 = vld [vmem:[%s2530 + $0x2c] sm:$0xf]
        %v2543 = vld [vmem:[%s2530 + $0x30] sm:$0xf]
        %v2544 = vld [vmem:[%s2530 + $0x34] sm:$0xf]
        %v2545 = vld [vmem:[%s2530 + $0x38] sm:$0xf]
        %v2546 = vld [vmem:[%s2530 + $0x3c] sm:$0xf]
        %v2558 = vunpack.c.l.b16 %v2509
        %v2559 = vunpack.c.l.b16 %v2510
        %v2560 = vunpack.c.l.b16 %v2511
        %v2561 = vunpack.c.l.b16 %v2512
        %v2562 = vunpack.c.l.b16 %v2513
        %v2563 = vunpack.c.l.b16 %v2514
        %v2564 = vunpack.c.l.b16 %v2515
        %v2565 = vunpack.c.l.b16 %v2516
        %v2566 = vunpack.c.l.b16 %v2517
        %v2567 = vunpack.c.l.b16 %v2518
        %v2568 = vunpack.c.l.b16 %v2519
        %v2569 = vpack.c.b16 %v2559, %v2558
        %v2570 = vpack.c.b16 %v2561, %v2560
        %v2571 = vpack.c.b16 %v2563, %v2562
        %v2572 = vpack.c.b16 %v2565, %v2564
        %v2573 = vpack.c.b16 %v2567, %v2566
        %v2574 = vpack.c.b16 %v2568, %v2568
        %v2575 = vrot.slane %v2569, 1
        %v2576 = vrot.slane %v2570, 1
        %v2577 = vsel %vm2128, %v2575, %v2576
        %v2578 = vrot.slane %v2571, 1
        %v2579 = vsel %vm2128, %v2576, %v2578
        %v2580 = vrot.slane %v2572, 1
        %v2581 = vsel %vm2128, %v2578, %v2580
        %v2582 = vrot.slane %v2573, 1
        %v2583 = vsel %vm2128, %v2580, %v2582
        %v2584 = vrot.slane %v2574, 1
        %v2585 = vsel %vm2128, %v2582, %v2584
        %v2607 = vunpack.c.l.b16 %v2531
        %v2608 = vunpack.c.l.b16 %v2532
        %v2609 = vunpack.c.l.b16 %v2533
        %v2610 = vunpack.c.l.b16 %v2534
        %v2611 = vunpack.c.l.b16 %v2535
        %v2612 = vunpack.c.l.b16 %v2536
        %v2613 = vunpack.c.l.b16 %v2537
        %v2614 = vunpack.c.l.b16 %v2538
        %v2615 = vunpack.c.l.b16 %v2539
        %v2616 = vunpack.c.l.b16 %v2540
        %v2617 = vunpack.c.l.b16 %v2541
        %v2618 = vunpack.c.l.b16 %v2542
        %v2619 = vunpack.c.l.b16 %v2543
        %v2620 = vunpack.c.l.b16 %v2544
        %v2621 = vunpack.c.l.b16 %v2545
        %v2622 = vunpack.c.l.b16 %v2546
        %v2623 = vpack.c.b16 %v2608, %v2607
        %v2624 = vpack.c.b16 %v2610, %v2609
        %v2625 = vpack.c.b16 %v2612, %v2611
        %v2626 = vpack.c.b16 %v2614, %v2613
        %v2627 = vpack.c.b16 %v2616, %v2615
        %v2628 = vpack.c.b16 %v2618, %v2617
        %v2629 = vpack.c.b16 %v2620, %v2619
        %v2630 = vpack.c.b16 %v2622, %v2621
        %2639 = vmatprep.subr.bf16.mxu0 0
        %2640 = vmatpush1.bf16.msra.mxu0 %v2623
        %2641 = vmatprep.subr.bf16.mxu0 0
        %2642 = vmatpush1.bf16.msra.mxu0 %v2624
        %2643 = vmatprep.subr.bf16.mxu0 0
        %2644 = vmatpush1.bf16.msra.mxu0 %v2625
        %2645 = vmatprep.subr.bf16.mxu0 0
        %2646 = vmatpush1.bf16.msra.mxu0 %v2626
        %2647 = vmatprep.subr.bf16.mxu0 0
        %2648 = vmatpush1.bf16.msra.mxu0 %v2627
        %2649 = vmatprep.subr.bf16.mxu0 0
        %2650 = vmatpush1.bf16.msra.mxu0 %v2628
        %2651 = vmatprep.subr.bf16.mxu0 0
        %2652 = vmatpush1.bf16.msra.mxu0 %v2629
        %2653 = vmatprep.subr.bf16.mxu0 0
        %2654 = vmatpush1.bf16.msra.mxu0 %v2630
        %2655 = vmatprep.subr.bf16.mxu0 0
        %2656 = vmatpush1.bf16.msra.mxu0 0
        %2657 = vmatprep.subr.bf16.mxu0 0
        %2658 = vmatpush1.bf16.msra.mxu0 0
        %2659 = vmatprep.subr.bf16.mxu0 0
        %2660 = vmatpush1.bf16.msra.mxu0 0
        %2661 = vmatprep.subr.bf16.mxu0 0
        %2662 = vmatpush1.bf16.msra.mxu0 0
        %2663 = vmatprep.subr.bf16.mxu0 0
        %2664 = vmatpush1.bf16.msra.mxu0 0
        %2665 = vmatprep.subr.bf16.mxu0 0
        %2666 = vmatpush1.bf16.msra.mxu0 0
        %2667 = vmatprep.subr.bf16.mxu0 0
        %2668 = vmatpush1.bf16.msra.mxu0 0
        %2669 = vmatprep.subr.bf16.mxu0 0
        %2670 = vmatpush1.bf16.msra.mxu0 0
        %2671 = vmatprep.mubr.bf16.mxu0 0
        %2672 = vmatmul.mubr.bf16.gmra.mrb[0].mxu0 %v2577
        %v2673 = vpop.f32.mrb[0].mxu0
        %v2674 = vadd.f32 0.0, %v2673
        %v2675 = vpop.f32.mrb[0].mxu0
        %v2676 = vpop.f32.mrb[0].mxu0
        %v2677 = vadd.f32 0.0, %v2676
        %v2678 = vpop.f32.mrb[0].mxu0
        %2679 = vmatprep.mubr.bf16.mxu0 0
        %2680 = vmatmul.mubr.bf16.gmra.mrb[0].mxu0 %v2579
        %v2681 = vpop.f32.mrb[0].mxu0
        %v2682 = vadd.f32 0.0, %v2681
        %v2683 = vpop.f32.mrb[0].mxu0
        %v2684 = vpop.f32.mrb[0].mxu0
        %v2685 = vadd.f32 0.0, %v2684
        %v2686 = vpop.f32.mrb[0].mxu0
        %2687 = vmatprep.mubr.bf16.mxu0 0
        %2688 = vmatmul.mubr.bf16.gmra.mrb[0].mxu0 %v2581
        %v2689 = vpop.f32.mrb[0].mxu0
        %v2690 = vadd.f32 0.0, %v2689
        %v2691 = vpop.f32.mrb[0].mxu0
        %v2692 = vpop.f32.mrb[0].mxu0
        %v2693 = vadd.f32 0.0, %v2692
        %v2694 = vpop.f32.mrb[0].mxu0
        %2695 = vmatprep.mubr.bf16.mxu0 0
        %2696 = vmatmul.mubr.bf16.gmra.mrb[0].mxu0 %v2583
        %v2697 = vpop.f32.mrb[0].mxu0
        %v2698 = vadd.f32 0.0, %v2697
        %v2699 = vpop.f32.mrb[0].mxu0
        %v2700 = vpop.f32.mrb[0].mxu0
        %v2701 = vadd.f32 0.0, %v2700
        %v2702 = vpop.f32.mrb[0].mxu0
        %2703 = vmatprep.mubr.bf16.mxu0 0
        %2704 = vmatmul.mubr.bf16.gmra.mrb[0].mxu0 %v2585
        %v2705 = vpop.f32.mrb[0].mxu0
        %v2706 = vadd.f32 0.0, %v2705
        %v2707 = vpop.f32.mrb[0].mxu0
        %v2708 = vpop.f32.mrb[0].mxu0
        %v2709 = vadd.f32 0.0, %v2708
        %v2710 = vpop.f32.mrb[0].mxu0
        %2711 = vdwg.mxu0
        %v2712 = vadd.f32 %v2520, %v2674
        %v2713 = vadd.f32 %v2521, %v2677
        %v2714 = vadd.f32 %v2522, %v2682
        %v2715 = vadd.f32 %v2523, %v2685
        %v2716 = vadd.f32 %v2524, %v2690
        %v2717 = vadd.f32 %v2525, %v2693
        %v2718 = vadd.f32 %v2526, %v2698
        %v2719 = vadd.f32 %v2527, %v2701
        %v2720 = vadd.f32 %v2528, %v2706
        %v2721 = vadd.f32 %v2529, %v2709
        %2722 = vst [vmem:[#allocation3] sm:$0xff] %v2712
        %2723 = vst [vmem:[#allocation3 + $0x8] sm:$0xff] %v2713
        %2724 = vst [vmem:[#allocation3 + $0x10] sm:$0xff] %v2714
        %2725 = vst [vmem:[#allocation3 + $0x18] sm:$0xff] %v2715
        %2726 = vst [vmem:[#allocation3 + $0x20] sm:$0xff] %v2716
        %2727 = vst [vmem:[#allocation3 + $0x28] sm:$0xff] %v2717
        %2728 = vst [vmem:[#allocation3 + $0x30] sm:$0xff] %v2718
        %2729 = vst [vmem:[#allocation3 + $0x38] sm:$0xff] %v2719
        %2730 = vst [vmem:[#allocation3 + $0x40] sm:$0xff] %v2720
        %2731 = vst [vmem:[#allocation3 + $0x48] sm:$0xff] %v2721
        %v2732 = vld [vmem:[%s6] sm:$0x1]
        %v2734 = vlaneseq
        %v2735 = vshrl.u32 %v2734, 7
        %v2736 = vsub.s32 0, %v2735
        %v2737 = vrot.slane %v2732, %v2736
        %2739 = vst [vmem:[%s352] sm:$0xff] %v2737
        loop: start=0, step=1, limit=5
        $region61: #{tpu_custom_call.1} parent=51 // loop_pre_header
          _
        $region62: #{tpu_custom_call.1} parent=51 // loop_header
          %s2741 = sphi 0, %s2745
          %p2742 = scmp.ge.s32.totalorder %s2741, 5
        $region63: #{tpu_custom_call.1} parent=51 // loop_header_branch
          %2744 = sbr.rel (%p2742) target = $region67
        $region64: #{tpu_custom_call.1} parent=51 // loop_body
          %s2746 = smul.u32 %s2741, 16
          %s2747 = scalar_lea.vmem [#allocation3], %s2746
          %v2748 = vld [vmem:[%s2747] sm:$0xff]
          %v2749 = vmax.f32 %v2748, 0.0
          %v2750 = vpack.c.bf16 %v2749, %v2749
          %v2751 = vld [vmem:[%s352] sm:$0xff]
          %s2752 = smul.addr %s2746, 4
          %s2753 = scalar_lea.vmem [#allocation7], %s2752
          %v2754 = vld [vmem:[%s2753] sm:$0xf]
          %v2755 = vld [vmem:[%s2753 + $0x4] sm:$0xf]
          %v2756 = vld [vmem:[%s2753 + $0x8] sm:$0xf]
          %v2757 = vld [vmem:[%s2753 + $0xc] sm:$0xf]
          %v2758 = vld [vmem:[%s2753 + $0x10] sm:$0xf]
          %v2759 = vld [vmem:[%s2753 + $0x14] sm:$0xf]
          %v2760 = vld [vmem:[%s2753 + $0x18] sm:$0xf]
          %v2761 = vld [vmem:[%s2753 + $0x1c] sm:$0xf]
          %v2762 = vld [vmem:[%s2753 + $0x20] sm:$0xf]
          %v2763 = vld [vmem:[%s2753 + $0x24] sm:$0xf]
          %v2764 = vld [vmem:[%s2753 + $0x28] sm:$0xf]
          %v2765 = vld [vmem:[%s2753 + $0x2c] sm:$0xf]
          %v2766 = vld [vmem:[%s2753 + $0x30] sm:$0xf]
          %v2767 = vld [vmem:[%s2753 + $0x34] sm:$0xf]
          %v2768 = vld [vmem:[%s2753 + $0x38] sm:$0xf]
          %v2769 = vld [vmem:[%s2753 + $0x3c] sm:$0xf]
          %v2786 = vunpack.c.l.b16 %v2754
          %v2787 = vunpack.c.l.b16 %v2755
          %v2788 = vunpack.c.l.b16 %v2756
          %v2789 = vunpack.c.l.b16 %v2757
          %v2790 = vunpack.c.l.b16 %v2758
          %v2791 = vunpack.c.l.b16 %v2759
          %v2792 = vunpack.c.l.b16 %v2760
          %v2793 = vunpack.c.l.b16 %v2761
          %v2794 = vunpack.c.l.b16 %v2762
          %v2795 = vunpack.c.l.b16 %v2763
          %v2796 = vunpack.c.l.b16 %v2764
          %v2797 = vunpack.c.l.b16 %v2765
          %v2798 = vunpack.c.l.b16 %v2766
          %v2799 = vunpack.c.l.b16 %v2767
          %v2800 = vunpack.c.l.b16 %v2768
          %v2801 = vunpack.c.l.b16 %v2769
          %v2802 = vpack.c.b16 %v2787, %v2786
          %v2803 = vpack.c.b16 %v2789, %v2788
          %v2804 = vpack.c.b16 %v2791, %v2790
          %v2805 = vpack.c.b16 %v2793, %v2792
          %v2806 = vpack.c.b16 %v2795, %v2794
          %v2807 = vpack.c.b16 %v2797, %v2796
          %v2808 = vpack.c.b16 %v2799, %v2798
          %v2809 = vpack.c.b16 %v2801, %v2800
          %2818 = vmatprep.subr.bf16.mxu0 0
          %2819 = vmatpush1.bf16.msra.mxu0 %v2802
          %2820 = vmatprep.subr.bf16.mxu0 0
          %2821 = vmatpush1.bf16.msra.mxu0 %v2803
          %2822 = vmatprep.subr.bf16.mxu0 0
          %2823 = vmatpush1.bf16.msra.mxu0 %v2804
          %2824 = vmatprep.subr.bf16.mxu0 0
          %2825 = vmatpush1.bf16.msra.mxu0 %v2805
          %2826 = vmatprep.subr.bf16.mxu0 0
          %2827 = vmatpush1.bf16.msra.mxu0 %v2806
          %2828 = vmatprep.subr.bf16.mxu0 0
          %2829 = vmatpush1.bf16.msra.mxu0 %v2807
          %2830 = vmatprep.subr.bf16.mxu0 0
          %2831 = vmatpush1.bf16.msra.mxu0 %v2808
          %2832 = vmatprep.subr.bf16.mxu0 0
          %2833 = vmatpush1.bf16.msra.mxu0 %v2809
          %2834 = vmatprep.subr.bf16.mxu0 0
          %2835 = vmatpush1.bf16.msra.mxu0 0
          %2836 = vmatprep.subr.bf16.mxu0 0
          %2837 = vmatpush1.bf16.msra.mxu0 0
          %2838 = vmatprep.subr.bf16.mxu0 0
          %2839 = vmatpush1.bf16.msra.mxu0 0
          %2840 = vmatprep.subr.bf16.mxu0 0
          %2841 = vmatpush1.bf16.msra.mxu0 0
          %2842 = vmatprep.subr.bf16.mxu0 0
          %2843 = vmatpush1.bf16.msra.mxu0 0
          %2844 = vmatprep.subr.bf16.mxu0 0
          %2845 = vmatpush1.bf16.msra.mxu0 0
          %2846 = vmatprep.subr.bf16.mxu0 0
          %2847 = vmatpush1.bf16.msra.mxu0 0
          %2848 = vmatprep.subr.bf16.mxu0 0
          %2849 = vmatpush1.bf16.msra.mxu0 0
          %2850 = vmatprep.mubr.bf16.mxu0 0
          %2851 = vmatmul.mubr.bf16.gmra.mrb[0].mxu0 %v2750
          %v2852 = vpop.f32.mrb[0].mxu0
          %v2853 = vadd.f32 0.0, %v2852
          %v2854 = vpop.f32.mrb[0].mxu0
          %v2855 = vpop.f32.mrb[0].mxu0
          %v2856 = vpop.f32.mrb[0].mxu0
          %2857 = vdwg.mxu0
          %v2858 = vadd.f32 %v2751, %v2853
          %2859 = vst [vmem:[%s352] sm:$0xff] %v2858
        $region65: #{tpu_custom_call.1} parent=51 // loop_footer
          %s2745 = sadd.s32 1, %s2741
        $region66: #{tpu_custom_call.1} parent=51 // loop_footer_branch
          %2740 = sbr.rel target = $region62
        $region67: #{tpu_custom_call.1} parent=51 // loop_exit
          _
        %s2860 = smul.u32 %s29, 8
        %v2861 = vld [vmem:[%s352] sm:$0xff]
        %v2862 = vmul.f32 %v2861, 5.656854
        %s2863 = scalar_lea.vmem %s7, %s2860
        %v2864 = vld [vmem:[%s2863] sm:$0xff]
        %v2865 = vadd.f32 %v2862, %v2864
        %2866 = vst [vmem:[%s352] sm:$0xff] %v2865
        %s2867 = sand.u32 %s221, 1
        %s2868 = scalar_lea.sflag [#allocation6], %s2867
        %s2869 = sand.u32 %s221, 1
        %s2870 = smul.addr %s2869, 8
        %s2871 = scalar_lea.vmem [#allocation9], %s2870
        // Predicated region
        $region68: #{tpu_custom_call.1} parent=51 // pred_check
          %p2872 = pneg %p231
        $region69: #{tpu_custom_call.1} parent=51 // pred_check_branch
          %2874 = sbr.rel (%p2872) target = $region71
        $region70: #{tpu_custom_call.1} parent=51 // pred_region
          %s2876 = ssub.s32 128, 128
          %2877 = vsyncadd %s2868, %s2876
          %s2878 = sadd.s32 %s29, %s28
          %s2879 = smul.addr %s2878, 128
          %s2880 = scalar_lea.hbm %s8, %s2879
          %s2882 = sshll.u32 %s2871, 4
          %s2883 = int_to_ptr.vmem [resolvable:$true] %s2882
          %2885 = dma.vmem_to_hbm [thread:$0]  %s2883, 128, %s2880, %s2868
        $region71: #{tpu_custom_call.1} parent=51 // pred_fallthru
          _
      $region52: #{tpu_custom_call.1} parent=5 // pred_fallthru
        _
      %p2886 = scmp.le.s32.totalorder 2, %s19
      // Predicated region
      $region72: #{tpu_custom_call.1} parent=5 // pred_check
        %p2887 = pneg %p2886
      $region73: #{tpu_custom_call.1} parent=5 // pred_check_branch
        %2889 = sbr.rel (%p2887) target = $region75
      $region74: #{tpu_custom_call.1} parent=5 // pred_region
        %s2890 = ssub.s32 %s19, 2
        // Predicated region
        $region76: #{tpu_custom_call.1} parent=74 // pred_check
          %p2891 = pneg %p237
        $region77: #{tpu_custom_call.1} parent=74 // pred_check_branch
          %2893 = sbr.rel (%p2891) target = $region79
        $region78: #{tpu_custom_call.1} parent=74 // pred_region
          %s2894 = sand.u32 %s222, 1
          %s2895 = scalar_lea.sflag [#allocation6], %s2894
          %s2896 = sand.u32 %s222, 1
          %s2897 = smul.addr %s2896, 8
          %s2898 = scalar_lea.vmem [#allocation9], %s2897
          %2899 = dma.done %s2895, 128
        $region79: #{tpu_custom_call.1} parent=74 // pred_fallthru
          _
      $region75: #{tpu_custom_call.1} parent=5 // pred_fallthru
        _
    $region6: #{tpu_custom_call.1} parent=1 // loop_footer
      %s23 = sadd.s32 1, %s19
    $region7: #{tpu_custom_call.1} parent=1 // loop_footer_branch
      %18 = sbr.rel target = $region3
    $region8: #{tpu_custom_call.1} parent=1 // loop_exit
      _
    %2900 = vsyncpa [#allocation5], 1
    %s2901 = scalar_lea.sflag [#allocation5], 1
    %2902 = vsyncpa %s2901, 1
    %2903 = vsyncpa [#allocation8], 1
    %2904 = vsyncpa [#allocation6], 1
    %s2905 = scalar_lea.sflag [#allocation6], 1
    %2906 = vsyncpa %s2905, 1

// kernel: tpu_custom_call.1
$region0: #{tpu_custom_call.1}
  #allocation0 [shape = 'u32[]', space=smem, size = 0x4, offset = 0x4, fixed_abs, tag = 'smem constant byte address 0x4 - core index']
  #allocation1 [shape = 'u32[144,128]{1,0:T(1,128)}', space=vmem, size = 0x12000, scoped, tag = 'internal scratch']
  #allocation2 [shape = 'bf16[120,128]{1,0:T(8,128)(2,1)}', space=vmem, size = 0x7800, scoped, tag = 'scratch operand']
  #allocation3 [shape = 'f32[80,128]{1,0:T(8,128)}', space=vmem, size = 0xa000, scoped, tag = 'scratch operand']
  %s0 = inlined_call_operand.vmem [shape: f32[2,1,112,9], index: 0, kind: input, shape index: {}]
  %s1 = inlined_call_operand.vmem [shape: f32[9,128], index: 1, kind: input, shape index: {}]
  %s2 = inlined_call_operand.vmem [shape: f32[1,128], index: 2, kind: input, shape index: {}]
  %s3 = inlined_call_operand.hbm [shape: bf16[9,128,128], index: 3, kind: input, shape index: {}]
  %s4 = inlined_call_operand.vmem [shape: f32[1,128], index: 4, kind: input, shape index: {}]
  %s5 = inlined_call_operand.hbm [shape: bf16[5,128,128], index: 5, kind: input, shape index: {}]
  %s6 = inlined_call_operand.vmem [shape: f32[1,128], index: 6, kind: input, shape index: {}]
  %s7 = inlined_call_operand.vmem [shape: f32[8,128], index: 7, kind: input, shape index: {}]
  %s8 = inlined_call_operand.hbm [shape: f32[2,8,128], index: 8, kind: output, shape index: {}]
  %s9 = sld [smem:[#allocation0]]
  $region80: #{tpu_custom_call.1} parent=0
    _
  %s11 = ssub.s32 1, %s9
  %s12 = scalar_select 0, %s11, %s9
  $region1: #{tpu_custom_call.1} parent=0
    #allocation4 [shape = 'u8[294912]{0}', space=vmem, size = 0x48000, scoped, tag = 'input window, operand 3, single buffered']
    #allocation5 [shape = 's32[2]{0}', space=sflag, size = 0x8, scoped, tag = 'scoped memory for tpu_custom_call.1']
    #allocation6 [shape = 's32[2]{0}', space=sflag, size = 0x8, scoped, tag = 'scoped memory for tpu_custom_call.1']
    #allocation7 [shape = 'u8[163840]{0}', space=vmem, size = 0x28000, scoped, tag = 'input window, operand 5, single buffered']
    #allocation8 [shape = 's32[1]{0}', space=sflag, size = 0x4, scoped, tag = 'scoped memory for tpu_custom_call.1']
    #allocation9 [shape = 'u8[8192]{0}', space=vmem, size = 0x2000, scoped, tag = 'output window, operand 0']
    %13 = vsyncpa [#allocation5], 0
    %14 = vsyncpa [#allocation8], 0
    %15 = vsyncpa [#allocation6], 0
    %s16 = scalar_lea.sflag [#allocation6], 1
    %17 = vsyncpa %s16, 0
    loop: start=0, step=1, limit=4
    $region2: #{tpu_custom_call.1} parent=1 // loop_pre_header
      _
    $region3: #{tpu_custom_call.1} parent=1 // loop_header
      %s19 = sphi 0, %s23
      %p20 = scmp.ge.s32.totalorder %s19, 4
      %s26 = sphi 0, %s38
      %s27 = sphi 0, %s34
      %s28 = sphi 0, %s26
      %s29 = sphi 0, %s27
      %s30 = sphi 0, %s28
      %s31 = sphi 0, %s29
      %s43 = sphi 0, %s45
      %s46 = sphi 0, %s43
      %s47 = sphi 0, %s46
      %s63 = sphi 0, %s47
      %s67 = sphi 0, %s67
      %s69 = sphi 0, %s67
      %s70 = sphi 0, %s69
      %s84 = sphi 0, %s70
      %s88 = sphi 0, %s88
      %s90 = sphi 0, %s88
      %s91 = sphi 0, %s90
      %s105 = sphi 0, %s91
      %s109 = sphi 0, %s109
      %s111 = sphi 0, %s109
      %s112 = sphi 0, %s111
      %s126 = sphi 0, %s112
      %s130 = sphi 0, %s130
      %s132 = sphi 0, %s130
      %s133 = sphi 0, %s132
      %s147 = sphi 0, %s133
      %s151 = sphi 0, %s151
      %s153 = sphi 0, %s151
      %s154 = sphi 0, %s153
      %s168 = sphi 0, %s154
      %s172 = sphi 0, %s172
      %s174 = sphi 0, %s172
      %s175 = sphi 0, %s174
      %s189 = sphi 0, %s175
      %s193 = sphi 0, %s193
      %s195 = sphi 0, %s193
      %s196 = sphi 0, %s195
      %s210 = sphi 0, %s196
      %s218 = sphi 0, %s220
      %s221 = sphi 0, %s218
      %s222 = sphi 0, %s221
      %s238 = sphi 0, %s222
    $region4: #{tpu_custom_call.1} parent=1 // loop_header_branch
      %22 = sbr.rel (%p20) target = $region8
    $region5: #{tpu_custom_call.1} parent=1 // loop_body
      %s24 = ssub.s32 %s19, 1
      %s25 = ssub.s32 %s19, 2
      %s32 = sadd.s32 1, %s27
      %p33 = scmp.ge.s32.totalorder %s32, 1
      %s34 = scalar_select %p33, 0, %s32
      %s35 = sadd.s32 1, %s26
      %s36 = scalar_select %p33, %s35, %s26
      %p37 = scmp.ge.s32.totalorder %s36, 2
      %s38 = scalar_select %p37, 0, %s36
      %s39 = ssub.s32 %s26, %s38
      %s40 = ssub.s32 %s27, %s34
      %s41 = sor.u32 %s39, %s40
      %p42 = scmp.eq.s32.totalorder %s41, 0
      %s44 = sadd.s32 %s43, 1
      %s45 = scalar_select %p42, %s43, %s44
      %p48 = pneg %p42
      %p49 = scmp.eq.s32.totalorder %s19, 1
      %p50 = por %p48, %p49
      %p51 = scmp.ne.s32.totalorder %s43, %s46
      %p52 = scmp.eq.s32.totalorder %s19, 0
      %p53 = por %p51, %p52
      %p54 = scmp.ne.s32.totalorder %s43, %s46
      %p55 = scmp.eq.s32.totalorder %s24, 1
      %p56 = por %p54, %p55
      %p57 = scmp.ne.s32.totalorder %s46, %s47
      %p58 = scmp.eq.s32.totalorder %s24, 0
      %p59 = por %p57, %p58
      %p60 = scmp.ne.s32.totalorder %s46, %s47
      %p61 = scmp.eq.s32.totalorder %s25, 1
      %p62 = por %p60, %p61
      %p64 = scmp.ne.s32.totalorder %s47, %s63
      %p65 = scmp.eq.s32.totalorder %s25, 0
      %p66 = por %p64, %p65
      %s68 = sadd.s32 %s67, 1
      %p71 = scmp.eq.s32.totalorder %s19, 1
      %p72 = scmp.ne.s32.totalorder %s67, %s69
      %p73 = scmp.eq.s32.totalorder %s19, 0
      %p74 = por %p72, %p73
      %p75 = scmp.ne.s32.totalorder %s67, %s69
      %p76 = scmp.eq.s32.totalorder %s24, 1
      %p77 = por %p75, %p76
      %p78 = scmp.ne.s32.totalorder %s69, %s70
      %p79 = scmp.eq.s32.totalorder %s24, 0
      %p80 = por %p78, %p79
      %p81 = scmp.ne.s32.totalorder %s69, %s70
      %p82 = scmp.eq.s32.totalorder %s25, 1
      %p83 = por %p81, %p82
      %p85 = scmp.ne.s32.totalorder %s70, %s84
      %p86 = scmp.eq.s32.totalorder %s25, 0
      %p87 = por %p85, %p86
      %s89 = sadd.s32 %s88, 1
      %p92 = scmp.eq.s32.totalorder %s19, 1
      %p93 = scmp.ne.s32.totalorder %s88, %s90
      %p94 = scmp.eq.s32.totalorder %s19, 0
      %p95 = por %p93, %p94
      %p96 = scmp.ne.s32.totalorder %s88, %s90
      %p97 = scmp.eq.s32.totalorder %s24, 1
      %p98 = por %p96, %p97
      %p99 = scmp.ne.s32.totalorder %s90, %s91
      %p100 = scmp.eq.s32.totalorder %s24, 0
      %p101 = por %p99, %p100
      %p102 = scmp.ne.s32.totalorder %s90, %s91
      %p103 = scmp.eq.s32.totalorder %s25, 1
      %p104 = por %p102, %p103
      %p106 = scmp.ne.s32.totalorder %s91, %s105
      %p107 = scmp.eq.s32.totalorder %s25, 0
      %p108 = por %p106, %p107
      %s110 = sadd.s32 %s109, 1
      %p113 = scmp.eq.s32.totalorder %s19, 1
      %p114 = scmp.ne.s32.totalorder %s109, %s111
      %p115 = scmp.eq.s32.totalorder %s19, 0
      %p116 = por %p114, %p115
      %p117 = scmp.ne.s32.totalorder %s109, %s111
      %p118 = scmp.eq.s32.totalorder %s24, 1
      %p119 = por %p117, %p118
      %p120 = scmp.ne.s32.totalorder %s111, %s112
      %p121 = scmp.eq.s32.totalorder %s24, 0
      %p122 = por %p120, %p121
      %p123 = scmp.ne.s32.totalorder %s111, %s112
      %p124 = scmp.eq.s32.totalorder %s25, 1
      %p125 = por %p123, %p124
      %p127 = scmp.ne.s32.totalorder %s112, %s126
      %p128 = scmp.eq.s32.totalorder %s25, 0
      %p129 = por %p127, %p128
      %s131 = sadd.s32 %s130, 1
      %p134 = scmp.eq.s32.totalorder %s19, 1
      %p135 = scmp.ne.s32.totalorder %s130, %s132
      %p136 = scmp.eq.s32.totalorder %s19, 0
      %p137 = por %p135, %p136
      %p138 = scmp.ne.s32.totalorder %s130, %s132
      %p139 = scmp.eq.s32.totalorder %s24, 1
      %p140 = por %p138, %p139
      %p141 = scmp.ne.s32.totalorder %s132, %s133
      %p142 = scmp.eq.s32.totalorder %s24, 0
      %p143 = por %p141, %p142
      %p144 = scmp.ne.s32.totalorder %s132, %s133
      %p145 = scmp.eq.s32.totalorder %s25, 1
      %p146 = por %p144, %p145
      %p148 = scmp.ne.s32.totalorder %s133, %s147
      %p149 = scmp.eq.s32.totalorder %s25, 0
      %p150 = por %p148, %p149
      %s152 = sadd.s32 %s151, 1
      %p155 = scmp.eq.s32.totalorder %s19, 1
      %p156 = scmp.ne.s32.totalorder %s151, %s153
      %p157 = scmp.eq.s32.totalorder %s19, 0
      %p158 = por %p156, %p157
      %p159 = scmp.ne.s32.totalorder %s151, %s153
      %p160 = scmp.eq.s32.totalorder %s24, 1
      %p161 = por %p159, %p160
      %p162 = scmp.ne.s32.totalorder %s153, %s154
      %p163 = scmp.eq.s32.totalorder %s24, 0
      %p164 = por %p162, %p163
      %p165 = scmp.ne.s32.totalorder %s153, %s154
      %p166 = scmp.eq.s32.totalorder %s25, 1
      %p167 = por %p165, %p166
      %p169 = scmp.ne.s32.totalorder %s154, %s168
      %p170 = scmp.eq.s32.totalorder %s25, 0
      %p171 = por %p169, %p170
      %s173 = sadd.s32 %s172, 1
      %p176 = scmp.eq.s32.totalorder %s19, 1
      %p177 = scmp.ne.s32.totalorder %s172, %s174
      %p178 = scmp.eq.s32.totalorder %s19, 0
      %p179 = por %p177, %p178
      %p180 = scmp.ne.s32.totalorder %s172, %s174
      %p181 = scmp.eq.s32.totalorder %s24, 1
      %p182 = por %p180, %p181
      %p183 = scmp.ne.s32.totalorder %s174, %s175
      %p184 = scmp.eq.s32.totalorder %s24, 0
      %p185 = por %p183, %p184
      %p186 = scmp.ne.s32.totalorder %s174, %s175
      %p187 = scmp.eq.s32.totalorder %s25, 1
      %p188 = por %p186, %p187
      %p190 = scmp.ne.s32.totalorder %s175, %s189
      %p191 = scmp.eq.s32.totalorder %s25, 0
      %p192 = por %p190, %p191
      %s194 = sadd.s32 %s193, 1
      %p197 = scmp.eq.s32.totalorder %s19, 1
      %p198 = scmp.ne.s32.totalorder %s193, %s195
      %p199 = scmp.eq.s32.totalorder %s19, 0
      %p200 = por %p198, %p199
      %p201 = scmp.ne.s32.totalorder %s193, %s195
      %p202 = scmp.eq.s32.totalorder %s24, 1
      %p203 = por %p201, %p202
      %p204 = scmp.ne.s32.totalorder %s195, %s196
      %p205 = scmp.eq.s32.totalorder %s24, 0
      %p206 = por %p204, %p205
      %p207 = scmp.ne.s32.totalorder %s195, %s196
      %p208 = scmp.eq.s32.totalorder %s25, 1
      %p209 = por %p207, %p208
      %p211 = scmp.ne.s32.totalorder %s196, %s210
      %p212 = scmp.eq.s32.totalorder %s25, 0
      %p213 = por %p211, %p212
      %s214 = ssub.s32 %s26, %s38
      %s215 = ssub.s32 %s27, %s34
      %s216 = sor.u32 %s214, %s215
      %p217 = scmp.eq.s32.totalorder %s216, 0
      %s219 = sadd.s32 %s218, 1
      %s220 = scalar_select %p217, %s218, %s219
      %p223 = pneg %p217
      %p224 = scmp.eq.s32.totalorder %s19, 1
      %p225 = por %p223, %p224
      %p226 = scmp.ne.s32.totalorder %s218, %s221
      %p227 = scmp.eq.s32.totalorder %s19, 0
      %p228 = por %p226, %p227
      %p229 = scmp.ne.s32.totalorder %s218, %s221
      %p230 = scmp.eq.s32.totalorder %s24, 1
      %p231 = por %p229, %p230
      %p232 = scmp.ne.s32.totalorder %s221, %s222
      %p233 = scmp.eq.s32.totalorder %s24, 0
      %p234 = por %p232, %p233
      %p235 = scmp.ne.s32.totalorder %s221, %s222
      %p236 = scmp.eq.s32.totalorder %s25, 1
      %p237 = por %p235, %p236
      %p239 = scmp.ne.s32.totalorder %s222, %s238
      %p240 = scmp.eq.s32.totalorder %s25, 0
      %p241 = por %p239, %p240
      %p242 = scmp.le.s32.totalorder 1, %s19
      %p243 = scmp.lt.s32.totalorder %s19, 3
      %p244 = pnand %p242, %p243
      %p245 = pneg %p244
      // Predicated region
      $region9: #{tpu_custom_call.1} parent=5 // pred_check
        _
      $region10: #{tpu_custom_call.1} parent=5 // pred_check_branch
        %247 = sbr.rel (%p244) target = $region12
      $region11: #{tpu_custom_call.1} parent=5 // pred_region
        %s248 = ssub.s32 %s19, 1
        // Predicated region
        $region13: #{tpu_custom_call.1} parent=11 // pred_check
          %p249 = pneg %p80
        $region14: #{tpu_custom_call.1} parent=11 // pred_check_branch
          %251 = sbr.rel (%p249) target = $region16
        $region15: #{tpu_custom_call.1} parent=11 // pred_region
          _
        $region16: #{tpu_custom_call.1} parent=11 // pred_fallthru
          _
        // Predicated region
        $region17: #{tpu_custom_call.1} parent=11 // pred_check
          %p252 = pneg %p101
        $region18: #{tpu_custom_call.1} parent=11 // pred_check_branch
          %254 = sbr.rel (%p252) target = $region20
        $region19: #{tpu_custom_call.1} parent=11 // pred_region
          _
        $region20: #{tpu_custom_call.1} parent=11 // pred_fallthru
          _
        // Predicated region
        $region21: #{tpu_custom_call.1} parent=11 // pred_check
          %p255 = pneg %p122
        $region22: #{tpu_custom_call.1} parent=11 // pred_check_branch
          %257 = sbr.rel (%p255) target = $region24
        $region23: #{tpu_custom_call.1} parent=11 // pred_region
          %s259 = ssub.s32 9216, 9216
          %260 = vsyncadd [#allocation5], %s259
          %s261 = sshll.u32 [#allocation4], 4
          %s262 = int_to_ptr.vmem [resolvable:$true] %s261
          %267 = dma.hbm_to_vmem [thread:$0]  %s3, 9216, %s262, [#allocation5], 64, 64, 4
        $region24: #{tpu_custom_call.1} parent=11 // pred_fallthru
          _
        // Predicated region
        $region25: #{tpu_custom_call.1} parent=11 // pred_check
          %p268 = pneg %p143
        $region26: #{tpu_custom_call.1} parent=11 // pred_check_branch
          %270 = sbr.rel (%p268) target = $region28
        $region27: #{tpu_custom_call.1} parent=11 // pred_region
          _
        $region28: #{tpu_custom_call.1} parent=11 // pred_fallthru
          _
        // Predicated region
        $region29: #{tpu_custom_call.1} parent=11 // pred_check
          %p271 = pneg %p164
        $region30: #{tpu_custom_call.1} parent=11 // pred_check_branch
          %273 = sbr.rel (%p271) target = $region32
        $region31: #{tpu_custom_call.1} parent=11 // pred_region
          %s275 = ssub.s32 5120, 5120
          %276 = vsyncadd [#allocation8], %s275
          %s277 = sshll.u32 [#allocation7], 4
          %s278 = int_to_ptr.vmem [resolvable:$true] %s277
          %283 = dma.hbm_to_vmem [thread:$0]  %s5, 5120, %s278, [#allocation8], 64, 64, 4
        $region32: #{tpu_custom_call.1} parent=11 // pred_fallthru
          _
        // Predicated region
        $region33: #{tpu_custom_call.1} parent=11 // pred_check
          %p284 = pneg %p185
        $region34: #{tpu_custom_call.1} parent=11 // pred_check_branch
          %286 = sbr.rel (%p284) target = $region36
        $region35: #{tpu_custom_call.1} parent=11 // pred_region
          _
        $region36: #{tpu_custom_call.1} parent=11 // pred_fallthru
          _
        // Predicated region
        $region37: #{tpu_custom_call.1} parent=11 // pred_check
          %p287 = pneg %p206
        $region38: #{tpu_custom_call.1} parent=11 // pred_check_branch
          %289 = sbr.rel (%p287) target = $region40
        $region39: #{tpu_custom_call.1} parent=11 // pred_region
          _
        $region40: #{tpu_custom_call.1} parent=11 // pred_fallthru
          _
      $region12: #{tpu_custom_call.1} parent=5 // pred_fallthru
        _
      %p290 = scmp.lt.s32.totalorder %s19, 2
      // Predicated region
      $region41: #{tpu_custom_call.1} parent=5 // pred_check
        %p291 = pneg %p290
      $region42: #{tpu_custom_call.1} parent=5 // pred_check_branch
        %293 = sbr.rel (%p291) target = $region44
      $region43: #{tpu_custom_call.1} parent=5 // pred_region
        // Predicated region
        $region45: #{tpu_custom_call.1} parent=43 // pred_check
          %p294 = pneg %p53
        $region46: #{tpu_custom_call.1} parent=43 // pred_check_branch
          %296 = sbr.rel (%p294) target = $region48
        $region47: #{tpu_custom_call.1} parent=43 // pred_region
          %p297 = scmp.lt.s32.totalorder %s26, 1
          %s298 = scalar_select %p297, %s26, 1
          %p299 = scmp.lt.s32.totalorder %s27, 0
          %s300 = scalar_select %p299, %s27, 0
          %s301 = smul.addr %s300, 14
          %s302 = smul.addr %s298, 14
          %s303 = sadd.s32 %s301, %s302
          %s304 = smul.addr %s303, 8
          %s305 = scalar_lea.vmem %s0, %s304
        $region48: #{tpu_custom_call.1} parent=43 // pred_fallthru
          _
      $region44: #{tpu_custom_call.1} parent=5 // pred_fallthru
        _
      %p306 = scmp.le.s32.totalorder 1, %s19
      %p307 = scmp.lt.s32.totalorder %s19, 3
      %p308 = pnand %p306, %p307
      %p309 = pneg %p308
      // Predicated region
      $region49: #{tpu_custom_call.1} parent=5 // pred_check
        _
      $region50: #{tpu_custom_call.1} parent=5 // pred_check_branch
        %311 = sbr.rel (%p308) target = $region52
      $region51: #{tpu_custom_call.1} parent=5 // pred_region
        %s312 = ssub.s32 %s19, 1
        // Predicated region
        $region53: #{tpu_custom_call.1} parent=51 // pred_check
          %p313 = pneg %p122
        $region54: #{tpu_custom_call.1} parent=51 // pred_check_branch
          %315 = sbr.rel (%p313) target = $region56
        $region55: #{tpu_custom_call.1} parent=51 // pred_region
          %316 = dma.done [#allocation5], 9216
        $region56: #{tpu_custom_call.1} parent=51 // pred_fallthru
          _
        // Predicated region
        $region57: #{tpu_custom_call.1} parent=51 // pred_check
          %p317 = pneg %p164
        $region58: #{tpu_custom_call.1} parent=51 // pred_check_branch
          %319 = sbr.rel (%p317) target = $region60
        $region59: #{tpu_custom_call.1} parent=51 // pred_region
          %320 = dma.done [#allocation8], 5120
        $region60: #{tpu_custom_call.1} parent=51 // pred_fallthru
          _
        %p321 = scmp.lt.s32.totalorder %s28, 1
        %s322 = scalar_select %p321, %s28, 1
        %p323 = scmp.lt.s32.totalorder %s29, 0
        %s324 = scalar_select %p323, %s29, 0
        %s325 = smul.addr %s324, 14
        %s326 = smul.addr %s322, 14
        %s327 = sadd.s32 %s325, %s326
        %s328 = smul.addr %s327, 8
        %s329 = scalar_lea.vmem %s0, %s328
        %p330 = pneg %p59
        %p331 = pneg %p56
        %p332 = pneg %p80
        %p333 = pneg %p77
        %p334 = pneg %p101
        %p335 = pneg %p98
        %p336 = pneg %p122
        %p337 = pneg %p119
        %p338 = pneg %p143
        %p339 = pneg %p140
        %p340 = pneg %p164
        %p341 = pneg %p161
        %p342 = pneg %p185
        %p343 = pneg %p182
        %p344 = pneg %p206
        %p345 = pneg %p203
        %p346 = pneg %p234
        %p347 = pneg %p231
        %s348 = sand.u32 %s221, 1
        %s349 = scalar_lea.sflag [#allocation6], %s348
        %s350 = sand.u32 %s221, 1
        %s351 = smul.addr %s350, 8
        %s352 = scalar_lea.vmem [#allocation9], %s351
        %p353 = scmp.lt.s32.totalorder %s28, 1
        %s354 = scalar_select %p353, %s28, 1
        %p355 = scmp.lt.s32.totalorder %s29, 0
        %s356 = scalar_select %p355, %s29, 0
        %s357 = smul.addr %s356, 14
        %s358 = smul.addr %s354, 14
        %s359 = sadd.s32 %s357, %s358
        %s360 = smul.addr %s359, 8
        %s361 = scalar_lea.vmem %s0, %s360
        %v363 = vld [vmem:[%s361] sm:$0xff]
        %v364 = vld [vmem:[%s361 + $0x8] sm:$0xff]
        %v365 = vld [vmem:[%s361 + $0x10] sm:$0xff]
        %v366 = vld [vmem:[%s361 + $0x18] sm:$0xff]
        %v367 = vld [vmem:[%s361 + $0x20] sm:$0xff]
        %v368 = vld [vmem:[%s361 + $0x28] sm:$0xff]
        %v369 = vld [vmem:[%s361 + $0x30] sm:$0xff]
        %v370 = vld [vmem:[%s361 + $0x38] sm:$0xff]
        %v371 = vld [vmem:[%s361 + $0x40] sm:$0xff]
        %v372 = vld [vmem:[%s361 + $0x48] sm:$0xff]
        %v373 = vld [vmem:[%s361 + $0x50] sm:$0xff]
        %v374 = vld [vmem:[%s361 + $0x58] sm:$0xff]
        %v375 = vld [vmem:[%s361 + $0x60] sm:$0xff]
        %v376 = vld [vmem:[%s361 + $0x68] sm:$0xff]
        %v377 = vld [vmem:[%s1] sm:$0xff]
        %v378 = vld [vmem:[%s1 + $0x8] sm:$0x1]
        %v379 = vld [vmem:[%s2] sm:$0x1]
        %v381 = vlaneseq
        %v382 = vshrl.u32 %v381, 7
        %v383 = vsub.s32 0, %v382
        %v384 = vrot.slane %v379, %v383
        %vm386 = vcmask 72704
        %v388 = vsel %vm386, %v363, 0
        %v391 = vsel %vm386, %v364, 0
        %v394 = vsel %vm386, %v365, 0
        %v397 = vsel %vm386, %v366, 0
        %v400 = vsel %vm386, %v367, 0
        %v403 = vsel %vm386, %v368, 0
        %v406 = vsel %vm386, %v369, 0
        %v409 = vsel %vm386, %v370, 0
        %v412 = vsel %vm386, %v371, 0
        %v415 = vsel %vm386, %v372, 0
        %v418 = vsel %vm386, %v373, 0
        %v421 = vsel %vm386, %v374, 0
        %v424 = vsel %vm386, %v375, 0
        %v427 = vsel %vm386, %v376, 0
        %vm429 = vcmask 1040384
        %v431 = vsel %vm429, %v378, 0
        %433 = vmatprep.subr.mxu0 0.0
        %434 = vmatpush1.msra.mxu0 %v377
        %435 = vmatprep.subr.mxu0 0.0
        %436 = vmatpush1.msra.mxu0 %v431
        %437 = vmatprep.subr.mxu0 0.0
        %438 = vmatpush1.msra.mxu0 0.0
        %439 = vmatprep.subr.mxu0 0.0
        %440 = vmatpush1.msra.mxu0 0.0
        %441 = vmatprep.subr.mxu0 0.0
        %442 = vmatpush1.msra.mxu0 0.0
        %443 = vmatprep.subr.mxu0 0.0
        %444 = vmatpush1.msra.mxu0 0.0
        %445 = vmatprep.subr.mxu0 0.0
        %446 = vmatpush1.msra.mxu0 0.0
        %447 = vmatprep.subr.mxu0 0.0
        %448 = vmatpush1.msra.mxu0 0.0
        %449 = vmatprep.subr.mxu0 0.0
        %450 = vmatpush1.msra.mxu0 0.0
        %451 = vmatprep.subr.mxu0 0.0
        %452 = vmatpush1.msra.mxu0 0.0
        %453 = vmatprep.subr.mxu0 0.0
        %454 = vmatpush1.msra.mxu0 0.0
        %455 = vmatprep.subr.mxu0 0.0
        %456 = vmatpush1.msra.mxu0 0.0
        %457 = vmatprep.subr.mxu0 0.0
        %458 = vmatpush1.msra.mxu0 0.0
        %459 = vmatprep.subr.mxu0 0.0
        %460 = vmatpush1.msra.mxu0 0.0
        %461 = vmatprep.subr.mxu0 0.0
        %462 = vmatpush1.msra.mxu0 0.0
        %463 = vmatprep.subr.mxu0 0.0
        %464 = vmatpush1.msra.mxu0 0.0
        %465 = vmatprep.subr.mxu0 0.0
        %466 = vmatpush1.msra.mxu0 0.0
        %467 = vmatprep.subr.mxu0 0.0
        %468 = vmatpush1.msra.mxu0 0.0
        %469 = vmatprep.subr.mxu0 0.0
        %470 = vmatpush1.msra.mxu0 0.0
        %471 = vmatprep.subr.mxu0 0.0
        %472 = vmatpush1.msra.mxu0 0.0
        %473 = vmatprep.subr.mxu0 0.0
        %474 = vmatpush1.msra.mxu0 0.0
        %475 = vmatprep.subr.mxu0 0.0
        %476 = vmatpush1.msra.mxu0 0.0
        %477 = vmatprep.subr.mxu0 0.0
        %478 = vmatpush1.msra.mxu0 0.0
        %479 = vmatprep.subr.mxu0 0.0
        %480 = vmatpush1.msra.mxu0 0.0
        %481 = vmatprep.subr.mxu0 0.0
        %482 = vmatpush1.msra.mxu0 0.0
        %483 = vmatprep.subr.mxu0 0.0
        %484 = vmatpush1.msra.mxu0 0.0
        %485 = vmatprep.subr.mxu0 0.0
        %486 = vmatpush1.msra.mxu0 0.0
        %487 = vmatprep.subr.mxu0 0.0
        %488 = vmatpush1.msra.mxu0 0.0
        %489 = vmatprep.subr.mxu0 0.0
        %490 = vmatpush1.msra.mxu0 0.0
        %491 = vmatprep.subr.mxu0 0.0
        %492 = vmatpush1.msra.mxu0 0.0
        %493 = vmatprep.subr.mxu0 0.0
        %494 = vmatpush1.msra.mxu0 0.0
        %495 = vmatprep.subr.mxu0 0.0
        %496 = vmatpush1.msra.mxu0 0.0
        %497 = vmatprep.mubr.f32.mxu0 0.0
        %498 = vmatmul.mubr.f32.gmra.mrb[0].mxu0 %v388
        %v499 = vpop.f32.mrb[0].mxu0
        %v500 = vadd.f32 %v384, %v499
        %v501 = vpop.f32.mrb[0].mxu0
        %502 = vmatprep.mubr.f32.mxu0 0.0
        %503 = vmatmul.mubr.f32.gmra.mrb[0].mxu0 %v391
        %v504 = vpop.f32.mrb[0].mxu0
        %v505 = vadd.f32 %v384, %v504
        %v506 = vpop.f32.mrb[0].mxu0
        %507 = vmatprep.mubr.f32.mxu0 0.0
        %508 = vmatmul.mubr.f32.gmra.mrb[0].mxu0 %v394
        %v509 = vpop.f32.mrb[0].mxu0
        %v510 = vadd.f32 %v384, %v509
        %v511 = vpop.f32.mrb[0].mxu0
        %512 = vmatprep.mubr.f32.mxu0 0.0
        %513 = vmatmul.mubr.f32.gmra.mrb[0].mxu0 %v397
        %v514 = vpop.f32.mrb[0].mxu0
        %v515 = vadd.f32 %v384, %v514
        %v516 = vpop.f32.mrb[0].mxu0
        %517 = vmatprep.mubr.f32.mxu0 0.0
        %518 = vmatmul.mubr.f32.gmra.mrb[0].mxu0 %v400
        %v519 = vpop.f32.mrb[0].mxu0
        %v520 = vadd.f32 %v384, %v519
        %v521 = vpop.f32.mrb[0].mxu0
        %522 = vmatprep.mubr.f32.mxu0 0.0
        %523 = vmatmul.mubr.f32.gmra.mrb[0].mxu0 %v403
        %v524 = vpop.f32.mrb[0].mxu0
        %v525 = vadd.f32 %v384, %v524
        %v526 = vpop.f32.mrb[0].mxu0
        %527 = vmatprep.mubr.f32.mxu0 0.0
        %528 = vmatmul.mubr.f32.gmra.mrb[0].mxu0 %v406
        %v529 = vpop.f32.mrb[0].mxu0
        %v530 = vadd.f32 %v384, %v529
        %v531 = vpop.f32.mrb[0].mxu0
        %532 = vmatprep.mubr.f32.mxu0 0.0
        %533 = vmatmul.mubr.f32.gmra.mrb[0].mxu0 %v409
        %v534 = vpop.f32.mrb[0].mxu0
        %v535 = vadd.f32 %v384, %v534
        %v536 = vpop.f32.mrb[0].mxu0
        %537 = vmatprep.mubr.f32.mxu0 0.0
        %538 = vmatmul.mubr.f32.gmra.mrb[0].mxu0 %v412
        %v539 = vpop.f32.mrb[0].mxu0
        %v540 = vadd.f32 %v384, %v539
        %v541 = vpop.f32.mrb[0].mxu0
        %542 = vmatprep.mubr.f32.mxu0 0.0
        %543 = vmatmul.mubr.f32.gmra.mrb[0].mxu0 %v415
        %v544 = vpop.f32.mrb[0].mxu0
        %v545 = vadd.f32 %v384, %v544
        %v546 = vpop.f32.mrb[0].mxu0
        %547 = vmatprep.mubr.f32.mxu0 0.0
        %548 = vmatmul.mubr.f32.gmra.mrb[0].mxu0 %v418
        %v549 = vpop.f32.mrb[0].mxu0
        %v550 = vadd.f32 %v384, %v549
        %v551 = vpop.f32.mrb[0].mxu0
        %552 = vmatprep.mubr.f32.mxu0 0.0
        %553 = vmatmul.mubr.f32.gmra.mrb[0].mxu0 %v421
        %v554 = vpop.f32.mrb[0].mxu0
        %v555 = vadd.f32 %v384, %v554
        %v556 = vpop.f32.mrb[0].mxu0
        %557 = vmatprep.mubr.f32.mxu0 0.0
        %558 = vmatmul.mubr.f32.gmra.mrb[0].mxu0 %v424
        %v559 = vpop.f32.mrb[0].mxu0
        %v560 = vadd.f32 %v384, %v559
        %v561 = vpop.f32.mrb[0].mxu0
        %562 = vmatprep.mubr.f32.mxu0 0.0
        %563 = vmatmul.mubr.f32.gmra.mrb[0].mxu0 %v427
        %v564 = vpop.f32.mrb[0].mxu0
        %v565 = vadd.f32 %v384, %v564
        %v566 = vpop.f32.mrb[0].mxu0
        %567 = vdwg.mxu0
        %v568 = vmax.f32 %v500, 0.0
        %v569 = vmax.f32 %v505, 0.0
        %v570 = vmax.f32 %v510, 0.0
        %v571 = vmax.f32 %v515, 0.0
        %v572 = vmax.f32 %v520, 0.0
        %v573 = vmax.f32 %v525, 0.0
        %v574 = vmax.f32 %v530, 0.0
        %v575 = vmax.f32 %v535, 0.0
        %v576 = vmax.f32 %v540, 0.0
        %v577 = vmax.f32 %v545, 0.0
        %v578 = vmax.f32 %v550, 0.0
        %v579 = vmax.f32 %v555, 0.0
        %v580 = vmax.f32 %v560, 0.0
        %v581 = vmax.f32 %v565, 0.0
        %v582 = vpack.c.bf16 %v569, %v568
        %v583 = vpack.c.bf16 %v571, %v570
        %v584 = vpack.c.bf16 %v573, %v572
        %v585 = vpack.c.bf16 %v575, %v574
        %v586 = vpack.c.bf16 %v577, %v576
        %v587 = vpack.c.bf16 %v579, %v578
        %v588 = vpack.c.bf16 %v581, %v580
        %v596 = vunpack.c.l.b16 %v582
        %v597 = vunpack.c.h.b16 %v582
        %v598 = vunpack.c.l.b16 %v583
        %v599 = vunpack.c.h.b16 %v583
        %v600 = vunpack.c.l.b16 %v584
        %v601 = vunpack.c.h.b16 %v584
        %v602 = vunpack.c.l.b16 %v585
        %v603 = vunpack.c.h.b16 %v585
        %v604 = vunpack.c.l.b16 %v586
        %v605 = vunpack.c.h.b16 %v586
        %v606 = vunpack.c.l.b16 %v587
        %v607 = vunpack.c.h.b16 %v587
        %v608 = vunpack.c.l.b16 %v588
        %v609 = vunpack.c.h.b16 %v588
        %v610 = vpack.c.b16 %v596, %v596
        %v611 = vpack.c.b16 %v597, %v597
        %v612 = vpack.c.b16 %v598, %v598
        %v613 = vpack.c.b16 %v599, %v599
        %v614 = vpack.c.b16 %v600, %v600
        %v615 = vpack.c.b16 %v601, %v601
        %v616 = vpack.c.b16 %v602, %v602
        %v617 = vpack.c.b16 %v603, %v603
        %v618 = vpack.c.b16 %v604, %v604
        %v619 = vpack.c.b16 %v605, %v605
        %v620 = vpack.c.b16 %v606, %v606
        %v621 = vpack.c.b16 %v607, %v607
        %v622 = vpack.c.b16 %v608, %v608
        %v623 = vpack.c.b16 %v609, %v609
        %638 = vst [vmem:[#allocation2] sm:$0xf] %v610
        %639 = vst [vmem:[#allocation2 + $0x4] sm:$0xf] %v611
        %640 = vst [vmem:[#allocation2 + $0x8] sm:$0xf] %v612
        %641 = vst [vmem:[#allocation2 + $0xc] sm:$0xf] %v613
        %642 = vst [vmem:[#allocation2 + $0x10] sm:$0xf] %v614
        %643 = vst [vmem:[#allocation2 + $0x14] sm:$0xf] %v615
        %644 = vst [vmem:[#allocation2 + $0x18] sm:$0xf] %v616
        %645 = vst [vmem:[#allocation2 + $0x1c] sm:$0xf] %v617
        %646 = vst [vmem:[#allocation2 + $0x20] sm:$0xf] %v618
        %647 = vst [vmem:[#allocation2 + $0x24] sm:$0xf] %v619
        %648 = vst [vmem:[#allocation2 + $0x28] sm:$0xf] %v620
        %649 = vst [vmem:[#allocation2 + $0x2c] sm:$0xf] %v621
        %650 = vst [vmem:[#allocation2 + $0x30] sm:$0xf] %v622
        %651 = vst [vmem:[#allocation2 + $0x34] sm:$0xf] %v623
        %652 = vst [vmem:[#allocation2 + $0x38] sm:$0xf] 0
        %v653 = vld [vmem:[%s4] sm:$0x1]
        %v655 = vlaneseq
        %v656 = vshrl.u32 %v655, 7
        %v657 = vsub.s32 0, %v656
        %v658 = vrot.slane %v653, %v657
        %660 = vst [vmem:[#allocation3] sm:$0xff] %v658
        %661 = vst [vmem:[#allocation3 + $0x8] sm:$0xff] %v658
        %662 = vst [vmem:[#allocation3 + $0x10] sm:$0xff] %v658
        %663 = vst [vmem:[#allocation3 + $0x18] sm:$0xff] %v658
        %664 = vst [vmem:[#allocation3 + $0x20] sm:$0xff] %v658
        %665 = vst [vmem:[#allocation3 + $0x28] sm:$0xff] %v658
        %666 = vst [vmem:[#allocation3 + $0x30] sm:$0xff] %v658
        %667 = vst [vmem:[#allocation3 + $0x38] sm:$0xff] %v658
        %668 = vst [vmem:[#allocation3 + $0x40] sm:$0xff] %v658
        %669 = vst [vmem:[#allocation3 + $0x48] sm:$0xff] %v658
        %v670 = vld [vmem:[#allocation2] sm:$0xf]
        %v671 = vld [vmem:[#allocation2 + $0x4] sm:$0xf]
        %v672 = vld [vmem:[#allocation2 + $0x8] sm:$0xf]
        %v673 = vld [vmem:[#allocation2 + $0xc] sm:$0xf]
        %v674 = vld [vmem:[#allocation2 + $0x10] sm:$0xf]
        %v675 = vld [vmem:[#allocation2 + $0x14] sm:$0xf]
        %v676 = vld [vmem:[#allocation2 + $0x18] sm:$0xf]
        %v677 = vld [vmem:[#allocation2 + $0x1c] sm:$0xf]
        %v678 = vld [vmem:[#allocation2 + $0x20] sm:$0xf]
        %v679 = vld [vmem:[#allocation2 + $0x24] sm:$0xf]
        %v680 = vld [vmem:[#allocation3] sm:$0xff]
        %v681 = vld [vmem:[#allocation3 + $0x8] sm:$0xff]
        %v682 = vld [vmem:[#allocation3 + $0x10] sm:$0xff]
        %v683 = vld [vmem:[#allocation3 + $0x18] sm:$0xff]
        %v684 = vld [vmem:[#allocation3 + $0x20] sm:$0xff]
        %v685 = vld [vmem:[#allocation3 + $0x28] sm:$0xff]
        %v686 = vld [vmem:[#allocation3 + $0x30] sm:$0xff]
        %v687 = vld [vmem:[#allocation3 + $0x38] sm:$0xff]
        %v688 = vld [vmem:[#allocation3 + $0x40] sm:$0xff]
        %v689 = vld [vmem:[#allocation3 + $0x48] sm:$0xff]
        %v690 = vld [vmem:[#allocation4] sm:$0xf]
        %v691 = vld [vmem:[#allocation4 + $0x4] sm:$0xf]
        %v692 = vld [vmem:[#allocation4 + $0x8] sm:$0xf]
        %v693 = vld [vmem:[#allocation4 + $0xc] sm:$0xf]
        %v694 = vld [vmem:[#allocation4 + $0x10] sm:$0xf]
        %v695 = vld [vmem:[#allocation4 + $0x14] sm:$0xf]
        %v696 = vld [vmem:[#allocation4 + $0x18] sm:$0xf]
        %v697 = vld [vmem:[#allocation4 + $0x1c] sm:$0xf]
        %v698 = vld [vmem:[#allocation4 + $0x20] sm:$0xf]
        %v699 = vld [vmem:[#allocation4 + $0x24] sm:$0xf]
        %v700 = vld [vmem:[#allocation4 + $0x28] sm:$0xf]
        %v701 = vld [vmem:[#allocation4 + $0x2c] sm:$0xf]
        %v702 = vld [vmem:[#allocation4 + $0x30] sm:$0xf]
        %v703 = vld [vmem:[#allocation4 + $0x34] sm:$0xf]
        %v704 = vld [vmem:[#allocation4 + $0x38] sm:$0xf]
        %v705 = vld [vmem:[#allocation4 + $0x3c] sm:$0xf]
        %v716 = vunpack.c.l.b16 %v670
        %v717 = vunpack.c.l.b16 %v671
        %v718 = vunpack.c.l.b16 %v672
        %v719 = vunpack.c.l.b16 %v673
        %v720 = vunpack.c.l.b16 %v674
        %v721 = vunpack.c.l.b16 %v675
        %v722 = vunpack.c.l.b16 %v676
        %v723 = vunpack.c.l.b16 %v677
        %v724 = vunpack.c.l.b16 %v678
        %v725 = vunpack.c.l.b16 %v679
        %v726 = vpack.c.b16 %v717, %v716
        %v727 = vpack.c.b16 %v719, %v718
        %v728 = vpack.c.b16 %v721, %v720
        %v729 = vpack.c.b16 %v723, %v722
        %v730 = vpack.c.b16 %v725, %v724
        %v752 = vunpack.c.l.b16 %v690
        %v753 = vunpack.c.l.b16 %v691
        %v754 = vunpack.c.l.b16 %v692
        %v755 = vunpack.c.l.b16 %v693
        %v756 = vunpack.c.l.b16 %v694
        %v757 = vunpack.c.l.b16 %v695
        %v758 = vunpack.c.l.b16 %v696
        %v759 = vunpack.c.l.b16 %v697
        %v760 = vunpack.c.l.b16 %v698
        %v761 = vunpack.c.l.b16 %v699
        %v762 = vunpack.c.l.b16 %v700
        %v763 = vunpack.c.l.b16 %v701
        %v764 = vunpack.c.l.b16 %v702
        %v765 = vunpack.c.l.b16 %v703
        %v766 = vunpack.c.l.b16 %v704
        %v767 = vunpack.c.l.b16 %v705
        %v768 = vpack.c.b16 %v753, %v752
        %v769 = vpack.c.b16 %v755, %v754
        %v770 = vpack.c.b16 %v757, %v756
        %v771 = vpack.c.b16 %v759, %v758
        %v772 = vpack.c.b16 %v761, %v760
        %v773 = vpack.c.b16 %v763, %v762
        %v774 = vpack.c.b16 %v765, %v764
        %v775 = vpack.c.b16 %v767, %v766
        %784 = vmatprep.subr.bf16.mxu0 0
        %785 = vmatpush1.bf16.msra.mxu0 %v768
        %786 = vmatprep.subr.bf16.mxu0 0
        %787 = vmatpush1.bf16.msra.mxu0 %v769
        %788 = vmatprep.subr.bf16.mxu0 0
        %789 = vmatpush1.bf16.msra.mxu0 %v770
        %790 = vmatprep.subr.bf16.mxu0 0
        %791 = vmatpush1.bf16.msra.mxu0 %v771
        %792 = vmatprep.subr.bf16.mxu0 0
        %793 = vmatpush1.bf16.msra.mxu0 %v772
        %794 = vmatprep.subr.bf16.mxu0 0
        %795 = vmatpush1.bf16.msra.mxu0 %v773
        %796 = vmatprep.subr.bf16.mxu0 0
        %797 = vmatpush1.bf16.msra.mxu0 %v774
        %798 = vmatprep.subr.bf16.mxu0 0
        %799 = vmatpush1.bf16.msra.mxu0 %v775
        %800 = vmatprep.subr.bf16.mxu0 0
        %801 = vmatpush1.bf16.msra.mxu0 0
        %802 = vmatprep.subr.bf16.mxu0 0
        %803 = vmatpush1.bf16.msra.mxu0 0
        %804 = vmatprep.subr.bf16.mxu0 0
        %805 = vmatpush1.bf16.msra.mxu0 0
        %806 = vmatprep.subr.bf16.mxu0 0
        %807 = vmatpush1.bf16.msra.mxu0 0
        %808 = vmatprep.subr.bf16.mxu0 0
        %809 = vmatpush1.bf16.msra.mxu0 0
        %810 = vmatprep.subr.bf16.mxu0 0
        %811 = vmatpush1.bf16.msra.mxu0 0
        %812 = vmatprep.subr.bf16.mxu0 0
        %813 = vmatpush1.bf16.msra.mxu0 0
        %814 = vmatprep.subr.bf16.mxu0 0
        %815 = vmatpush1.bf16.msra.mxu0 0
        %816 = vmatprep.mubr.bf16.mxu0 0
        %817 = vmatmul.mubr.bf16.gmra.mrb[0].mxu0 %v726
        %v818 = vpop.f32.mrb[0].mxu0
        %v819 = vadd.f32 0.0, %v818
        %v820 = vpop.f32.mrb[0].mxu0
        %v821 = vpop.f32.mrb[0].mxu0
        %v822 = vadd.f32 0.0, %v821
        %v823 = vpop.f32.mrb[0].mxu0
        %824 = vmatprep.mubr.bf16.mxu0 0
        %825 = vmatmul.mubr.bf16.gmra.mrb[0].mxu0 %v727
        %v826 = vpop.f32.mrb[0].mxu0
        %v827 = vadd.f32 0.0, %v826
        %v828 = vpop.f32.mrb[0].mxu0
        %v829 = vpop.f32.mrb[0].mxu0
        %v830 = vadd.f32 0.0, %v829
        %v831 = vpop.f32.mrb[0].mxu0
        %832 = vmatprep.mubr.bf16.mxu0 0
        %833 = vmatmul.mubr.bf16.gmra.mrb[0].mxu0 %v728
        %v834 = vpop.f32.mrb[0].mxu0
        %v835 = vadd.f32 0.0, %v834
        %v836 = vpop.f32.mrb[0].mxu0
        %v837 = vpop.f32.mrb[0].mxu0
        %v838 = vadd.f32 0.0, %v837
        %v839 = vpop.f32.mrb[0].mxu0
        %840 = vmatprep.mubr.bf16.mxu0 0
        %841 = vmatmul.mubr.bf16.gmra.mrb[0].mxu0 %v729
        %v842 = vpop.f32.mrb[0].mxu0
        %v843 = vadd.f32 0.0, %v842
        %v844 = vpop.f32.mrb[0].mxu0
        %v845 = vpop.f32.mrb[0].mxu0
        %v846 = vadd.f32 0.0, %v845
        %v847 = vpop.f32.mrb[0].mxu0
        %848 = vmatprep.mubr.bf16.mxu0 0
        %849 = vmatmul.mubr.bf16.gmra.mrb[0].mxu0 %v730
        %v850 = vpop.f32.mrb[0].mxu0
        %v851 = vadd.f32 0.0, %v850
        %v852 = vpop.f32.mrb[0].mxu0
        %v853 = vpop.f32.mrb[0].mxu0
        %v854 = vadd.f32 0.0, %v853
        %v855 = vpop.f32.mrb[0].mxu0
        %856 = vdwg.mxu0
        %v857 = vadd.f32 %v680, %v819
        %v858 = vadd.f32 %v681, %v822
        %v859 = vadd.f32 %v682, %v827
        %v860 = vadd.f32 %v683, %v830
        %v861 = vadd.f32 %v684, %v835
        %v862 = vadd.f32 %v685, %v838
        %v863 = vadd.f32 %v686, %v843
        %v864 = vadd.f32 %v687, %v846
        %v865 = vadd.f32 %v688, %v851
        %v866 = vadd.f32 %v689, %v854
        %867 = vst [vmem:[#allocation3] sm:$0xff] %v857
        %868 = vst [vmem:[#allocation3 + $0x8] sm:$0xff] %v858
        %869 = vst [vmem:[#allocation3 + $0x10] sm:$0xff] %v859
        %870 = vst [vmem:[#allocation3 + $0x18] sm:$0xff] %v860
        %871 = vst [vmem:[#allocation3 + $0x20] sm:$0xff] %v861
        %872 = vst [vmem:[#allocation3 + $0x28] sm:$0xff] %v862
        %873 = vst [vmem:[#allocation3 + $0x30] sm:$0xff] %v863
        %874 = vst [vmem:[#allocation3 + $0x38] sm:$0xff] %v864
        %875 = vst [vmem:[#allocation3 + $0x40] sm:$0xff] %v865
        %876 = vst [vmem:[#allocation3 + $0x48] sm:$0xff] %v866
        %v877 = vld [vmem:[#allocation2 + $0x8] sm:$0xf]
        %v878 = vld [vmem:[#allocation2 + $0xc] sm:$0xf]
        %v879 = vld [vmem:[#allocation2 + $0x10] sm:$0xf]
        %v880 = vld [vmem:[#allocation2 + $0x14] sm:$0xf]
        %v881 = vld [vmem:[#allocation2 + $0x18] sm:$0xf]
        %v882 = vld [vmem:[#allocation2 + $0x1c] sm:$0xf]
        %v883 = vld [vmem:[#allocation2 + $0x20] sm:$0xf]
        %v884 = vld [vmem:[#allocation2 + $0x24] sm:$0xf]
        %v885 = vld [vmem:[#allocation2 + $0x28] sm:$0xf]
        %v886 = vld [vmem:[#allocation2 + $0x2c] sm:$0xf]
        %v887 = vld [vmem:[#allocation3] sm:$0xff]
        %v888 = vld [vmem:[#allocation3 + $0x8] sm:$0xff]
        %v889 = vld [vmem:[#allocation3 + $0x10] sm:$0xff]
        %v890 = vld [vmem:[#allocation3 + $0x18] sm:$0xff]
        %v891 = vld [vmem:[#allocation3 + $0x20] sm:$0xff]
        %v892 = vld [vmem:[#allocation3 + $0x28] sm:$0xff]
        %v893 = vld [vmem:[#allocation3 + $0x30] sm:$0xff]
        %v894 = vld [vmem:[#allocation3 + $0x38] sm:$0xff]
        %v895 = vld [vmem:[#allocation3 + $0x40] sm:$0xff]
        %v896 = vld [vmem:[#allocation3 + $0x48] sm:$0xff]
        %s897 = scalar_lea.vmem [#allocation4], 64
        %v898 = vld [vmem:[%s897] sm:$0xf]
        %v899 = vld [vmem:[%s897 + $0x4] sm:$0xf]
        %v900 = vld [vmem:[%s897 + $0x8] sm:$0xf]
        %v901 = vld [vmem:[%s897 + $0xc] sm:$0xf]
        %v902 = vld [vmem:[%s897 + $0x10] sm:$0xf]
        %v903 = vld [vmem:[%s897 + $0x14] sm:$0xf]
        %v904 = vld [vmem:[%s897 + $0x18] sm:$0xf]
        %v905 = vld [vmem:[%s897 + $0x1c] sm:$0xf]
        %v906 = vld [vmem:[%s897 + $0x20] sm:$0xf]
        %v907 = vld [vmem:[%s897 + $0x24] sm:$0xf]
        %v908 = vld [vmem:[%s897 + $0x28] sm:$0xf]
        %v909 = vld [vmem:[%s897 + $0x2c] sm:$0xf]
        %v910 = vld [vmem:[%s897 + $0x30] sm:$0xf]
        %v911 = vld [vmem:[%s897 + $0x34] sm:$0xf]
        %v912 = vld [vmem:[%s897 + $0x38] sm:$0xf]
        %v913 = vld [vmem:[%s897 + $0x3c] sm:$0xf]
        %v924 = vunpack.c.l.b16 %v877
        %v925 = vunpack.c.l.b16 %v878
        %v926 = vunpack.c.l.b16 %v879
        %v927 = vunpack.c.l.b16 %v880
        %v928 = vunpack.c.l.b16 %v881
        %v929 = vunpack.c.l.b16 %v882
        %v930 = vunpack.c.l.b16 %v883
        %v931 = vunpack.c.l.b16 %v884
        %v932 = vunpack.c.l.b16 %v885
        %v933 = vunpack.c.l.b16 %v886
        %v934 = vpack.c.b16 %v925, %v924
        %v935 = vpack.c.b16 %v927, %v926
        %v936 = vpack.c.b16 %v929, %v928
        %v937 = vpack.c.b16 %v931, %v930
        %v938 = vpack.c.b16 %v933, %v932
        %v960 = vunpack.c.l.b16 %v898
        %v961 = vunpack.c.l.b16 %v899
        %v962 = vunpack.c.l.b16 %v900
        %v963 = vunpack.c.l.b16 %v901
        %v964 = vunpack.c.l.b16 %v902
        %v965 = vunpack.c.l.b16 %v903
        %v966 = vunpack.c.l.b16 %v904
        %v967 = vunpack.c.l.b16 %v905
        %v968 = vunpack.c.l.b16 %v906
        %v969 = vunpack.c.l.b16 %v907
        %v970 = vunpack.c.l.b16 %v908
        %v971 = vunpack.c.l.b16 %v909
        %v972 = vunpack.c.l.b16 %v910
        %v973 = vunpack.c.l.b16 %v911
        %v974 = vunpack.c.l.b16 %v912
        %v975 = vunpack.c.l.b16 %v913
        %v976 = vpack.c.b16 %v961, %v960
        %v977 = vpack.c.b16 %v963, %v962
        %v978 = vpack.c.b16 %v965, %v964
        %v979 = vpack.c.b16 %v967, %v966
        %v980 = vpack.c.b16 %v969, %v968
        %v981 = vpack.c.b16 %v971, %v970
        %v982 = vpack.c.b16 %v973, %v972
        %v983 = vpack.c.b16 %v975, %v974
        %992 = vmatprep.subr.bf16.mxu0 0
        %993 = vmatpush1.bf16.msra.mxu0 %v976
        %994 = vmatprep.subr.bf16.mxu0 0
        %995 = vmatpush1.bf16.msra.mxu0 %v977
        %996 = vmatprep.subr.bf16.mxu0 0
        %997 = vmatpush1.bf16.msra.mxu0 %v978
        %998 = vmatprep.subr.bf16.mxu0 0
        %999 = vmatpush1.bf16.msra.mxu0 %v979
        %1000 = vmatprep.subr.bf16.mxu0 0
        %1001 = vmatpush1.bf16.msra.mxu0 %v980
        %1002 = vmatprep.subr.bf16.mxu0 0
        %1003 = vmatpush1.bf16.msra.mxu0 %v981
        %1004 = vmatprep.subr.bf16.mxu0 0
        %1005 = vmatpush1.bf16.msra.mxu0 %v982
        %1006 = vmatprep.subr.bf16.mxu0 0
        %1007 = vmatpush1.bf16.msra.mxu0 %v983
        %1008 = vmatprep.subr.bf16.mxu0 0
        %1009 = vmatpush1.bf16.msra.mxu0 0
        %1010 = vmatprep.subr.bf16.mxu0 0
        %1011 = vmatpush1.bf16.msra.mxu0 0
        %1012 = vmatprep.subr.bf16.mxu0 0
        %1013 = vmatpush1.bf16.msra.mxu0 0
        %1014 = vmatprep.subr.bf16.mxu0 0
        %1015 = vmatpush1.bf16.msra.mxu0 0
        %1016 = vmatprep.subr.bf16.mxu0 0
        %1017 = vmatpush1.bf16.msra.mxu0 0
        %1018 = vmatprep.subr.bf16.mxu0 0
        %1019 = vmatpush1.bf16.msra.mxu0 0
        %1020 = vmatprep.subr.bf16.mxu0 0
        %1021 = vmatpush1.bf16.msra.mxu0 0
        %1022 = vmatprep.subr.bf16.mxu0 0
        %1023 = vmatpush1.bf16.msra.mxu0 0
        %1024 = vmatprep.mubr.bf16.mxu0 0
        %1025 = vmatmul.mubr.bf16.gmra.mrb[0].mxu0 %v934
        %v1026 = vpop.f32.mrb[0].mxu0
        %v1027 = vadd.f32 0.0, %v1026
        %v1028 = vpop.f32.mrb[0].mxu0
        %v1029 = vpop.f32.mrb[0].mxu0
        %v1030 = vadd.f32 0.0, %v1029
        %v1031 = vpop.f32.mrb[0].mxu0
        %1032 = vmatprep.mubr.bf16.mxu0 0
        %1033 = vmatmul.mubr.bf16.gmra.mrb[0].mxu0 %v935
        %v1034 = vpop.f32.mrb[0].mxu0
        %v1035 = vadd.f32 0.0, %v1034
        %v1036 = vpop.f32.mrb[0].mxu0
        %v1037 = vpop.f32.mrb[0].mxu0
        %v1038 = vadd.f32 0.0, %v1037
        %v1039 = vpop.f32.mrb[0].mxu0
        %1040 = vmatprep.mubr.bf16.mxu0 0
        %1041 = vmatmul.mubr.bf16.gmra.mrb[0].mxu0 %v936
        %v1042 = vpop.f32.mrb[0].mxu0
        %v1043 = vadd.f32 0.0, %v1042
        %v1044 = vpop.f32.mrb[0].mxu0
        %v1045 = vpop.f32.mrb[0].mxu0
        %v1046 = vadd.f32 0.0, %v1045
        %v1047 = vpop.f32.mrb[0].mxu0
        %1048 = vmatprep.mubr.bf16.mxu0 0
        %1049 = vmatmul.mubr.bf16.gmra.mrb[0].mxu0 %v937
        %v1050 = vpop.f32.mrb[0].mxu0
        %v1051 = vadd.f32 0.0, %v1050
        %v1052 = vpop.f32.mrb[0].mxu0
        %v1053 = vpop.f32.mrb[0].mxu0
        %v1054 = vadd.f32 0.0, %v1053
        %v1055 = vpop.f32.mrb[0].mxu0
        %1056 = vmatprep.mubr.bf16.mxu0 0
        %1057 = vmatmul.mubr.bf16.gmra.mrb[0].mxu0 %v938
        %v1058 = vpop.f32.mrb[0].mxu0
        %v1059 = vadd.f32 0.0, %v1058
        %v1060 = vpop.f32.mrb[0].mxu0
        %v1061 = vpop.f32.mrb[0].mxu0
        %v1062 = vadd.f32 0.0, %v1061
        %v1063 = vpop.f32.mrb[0].mxu0
        %1064 = vdwg.mxu0
        %v1065 = vadd.f32 %v887, %v1027
        %v1066 = vadd.f32 %v888, %v1030
        %v1067 = vadd.f32 %v889, %v1035
        %v1068 = vadd.f32 %v890, %v1038
        %v1069 = vadd.f32 %v891, %v1043
        %v1070 = vadd.f32 %v892, %v1046
        %v1071 = vadd.f32 %v893, %v1051
        %v1072 = vadd.f32 %v894, %v1054
        %v1073 = vadd.f32 %v895, %v1059
        %v1074 = vadd.f32 %v896, %v1062
        %1075 = vst [vmem:[#allocation3] sm:$0xff] %v1065
        %1076 = vst [vmem:[#allocation3 + $0x8] sm:$0xff] %v1066
        %1077 = vst [vmem:[#allocation3 + $0x10] sm:$0xff] %v1067
        %1078 = vst [vmem:[#allocation3 + $0x18] sm:$0xff] %v1068
        %1079 = vst [vmem:[#allocation3 + $0x20] sm:$0xff] %v1069
        %1080 = vst [vmem:[#allocation3 + $0x28] sm:$0xff] %v1070
        %1081 = vst [vmem:[#allocation3 + $0x30] sm:$0xff] %v1071
        %1082 = vst [vmem:[#allocation3 + $0x38] sm:$0xff] %v1072
        %1083 = vst [vmem:[#allocation3 + $0x40] sm:$0xff] %v1073
        %1084 = vst [vmem:[#allocation3 + $0x48] sm:$0xff] %v1074
        %v1085 = vld [vmem:[#allocation2 + $0x10] sm:$0xf]
        %v1086 = vld [vmem:[#allocation2 + $0x14] sm:$0xf]
        %v1087 = vld [vmem:[#allocation2 + $0x18] sm:$0xf]
        %v1088 = vld [vmem:[#allocation2 + $0x1c] sm:$0xf]
        %v1089 = vld [vmem:[#allocation2 + $0x20] sm:$0xf]
        %v1090 = vld [vmem:[#allocation2 + $0x24] sm:$0xf]
        %v1091 = vld [vmem:[#allocation2 + $0x28] sm:$0xf]
        %v1092 = vld [vmem:[#allocation2 + $0x2c] sm:$0xf]
        %v1093 = vld [vmem:[#allocation2 + $0x30] sm:$0xf]
        %v1094 = vld [vmem:[#allocation2 + $0x34] sm:$0xf]
        %v1095 = vld [vmem:[#allocation3] sm:$0xff]
        %v1096 = vld [vmem:[#allocation3 + $0x8] sm:$0xff]
        %v1097 = vld [vmem:[#allocation3 + $0x10] sm:$0xff]
        %v1098 = vld [vmem:[#allocation3 + $0x18] sm:$0xff]
        %v1099 = vld [vmem:[#allocation3 + $0x20] sm:$0xff]
        %v1100 = vld [vmem:[#allocation3 + $0x28] sm:$0xff]
        %v1101 = vld [vmem:[#allocation3 + $0x30] sm:$0xff]
        %v1102 = vld [vmem:[#allocation3 + $0x38] sm:$0xff]
        %v1103 = vld [vmem:[#allocation3 + $0x40] sm:$0xff]
        %v1104 = vld [vmem:[#allocation3 + $0x48] sm:$0xff]
        %s1105 = scalar_lea.vmem [#allocation4], 128
        %v1106 = vld [vmem:[%s1105] sm:$0xf]
        %v1107 = vld [vmem:[%s1105 + $0x4] sm:$0xf]
        %v1108 = vld [vmem:[%s1105 + $0x8] sm:$0xf]
        %v1109 = vld [vmem:[%s1105 + $0xc] sm:$0xf]
        %v1110 = vld [vmem:[%s1105 + $0x10] sm:$0xf]
        %v1111 = vld [vmem:[%s1105 + $0x14] sm:$0xf]
        %v1112 = vld [vmem:[%s1105 + $0x18] sm:$0xf]
        %v1113 = vld [vmem:[%s1105 + $0x1c] sm:$0xf]
        %v1114 = vld [vmem:[%s1105 + $0x20] sm:$0xf]
        %v1115 = vld [vmem:[%s1105 + $0x24] sm:$0xf]
        %v1116 = vld [vmem:[%s1105 + $0x28] sm:$0xf]
        %v1117 = vld [vmem:[%s1105 + $0x2c] sm:$0xf]
        %v1118 = vld [vmem:[%s1105 + $0x30] sm:$0xf]
        %v1119 = vld [vmem:[%s1105 + $0x34] sm:$0xf]
        %v1120 = vld [vmem:[%s1105 + $0x38] sm:$0xf]
        %v1121 = vld [vmem:[%s1105 + $0x3c] sm:$0xf]
        %v1132 = vunpack.c.l.b16 %v1085
        %v1133 = vunpack.c.l.b16 %v1086
        %v1134 = vunpack.c.l.b16 %v1087
        %v1135 = vunpack.c.l.b16 %v1088
        %v1136 = vunpack.c.l.b16 %v1089
        %v1137 = vunpack.c.l.b16 %v1090
        %v1138 = vunpack.c.l.b16 %v1091
        %v1139 = vunpack.c.l.b16 %v1092
        %v1140 = vunpack.c.l.b16 %v1093
        %v1141 = vunpack.c.l.b16 %v1094
        %v1142 = vpack.c.b16 %v1133, %v1132
        %v1143 = vpack.c.b16 %v1135, %v1134
        %v1144 = vpack.c.b16 %v1137, %v1136
        %v1145 = vpack.c.b16 %v1139, %v1138
        %v1146 = vpack.c.b16 %v1141, %v1140
        %v1168 = vunpack.c.l.b16 %v1106
        %v1169 = vunpack.c.l.b16 %v1107
        %v1170 = vunpack.c.l.b16 %v1108
        %v1171 = vunpack.c.l.b16 %v1109
        %v1172 = vunpack.c.l.b16 %v1110
        %v1173 = vunpack.c.l.b16 %v1111
        %v1174 = vunpack.c.l.b16 %v1112
        %v1175 = vunpack.c.l.b16 %v1113
        %v1176 = vunpack.c.l.b16 %v1114
        %v1177 = vunpack.c.l.b16 %v1115
        %v1178 = vunpack.c.l.b16 %v1116
        %v1179 = vunpack.c.l.b16 %v1117
        %v1180 = vunpack.c.l.b16 %v1118
        %v1181 = vunpack.c.l.b16 %v1119
        %v1182 = vunpack.c.l.b16 %v1120
        %v1183 = vunpack.c.l.b16 %v1121
        %v1184 = vpack.c.b16 %v1169, %v1168
        %v1185 = vpack.c.b16 %v1171, %v1170
        %v1186 = vpack.c.b16 %v1173, %v1172
        %v1187 = vpack.c.b16 %v1175, %v1174
        %v1188 = vpack.c.b16 %v1177, %v1176
        %v1189 = vpack.c.b16 %v1179, %v1178
        %v1190 = vpack.c.b16 %v1181, %v1180
        %v1191 = vpack.c.b16 %v1183, %v1182
        %1200 = vmatprep.subr.bf16.mxu0 0
        %1201 = vmatpush1.bf16.msra.mxu0 %v1184
        %1202 = vmatprep.subr.bf16.mxu0 0
        %1203 = vmatpush1.bf16.msra.mxu0 %v1185
        %1204 = vmatprep.subr.bf16.mxu0 0
        %1205 = vmatpush1.bf16.msra.mxu0 %v1186
        %1206 = vmatprep.subr.bf16.mxu0 0
        %1207 = vmatpush1.bf16.msra.mxu0 %v1187
        %1208 = vmatprep.subr.bf16.mxu0 0
        %1209 = vmatpush1.bf16.msra.mxu0 %v1188
        %1210 = vmatprep.subr.bf16.mxu0 0
        %1211 = vmatpush1.bf16.msra.mxu0 %v1189
        %1212 = vmatprep.subr.bf16.mxu0 0
        %1213 = vmatpush1.bf16.msra.mxu0 %v1190
        %1214 = vmatprep.subr.bf16.mxu0 0
        %1215 = vmatpush1.bf16.msra.mxu0 %v1191
        %1216 = vmatprep.subr.bf16.mxu0 0
        %1217 = vmatpush1.bf16.msra.mxu0 0
        %1218 = vmatprep.subr.bf16.mxu0 0
        %1219 = vmatpush1.bf16.msra.mxu0 0
        %1220 = vmatprep.subr.bf16.mxu0 0
        %1221 = vmatpush1.bf16.msra.mxu0 0
        %1222 = vmatprep.subr.bf16.mxu0 0
        %1223 = vmatpush1.bf16.msra.mxu0 0
        %1224 = vmatprep.subr.bf16.mxu0 0
        %1225 = vmatpush1.bf16.msra.mxu0 0
        %1226 = vmatprep.subr.bf16.mxu0 0
        %1227 = vmatpush1.bf16.msra.mxu0 0
        %1228 = vmatprep.subr.bf16.mxu0 0
        %1229 = vmatpush1.bf16.msra.mxu0 0
        %1230 = vmatprep.subr.bf16.mxu0 0
        %1231 = vmatpush1.bf16.msra.mxu0 0
        %1232 = vmatprep.mubr.bf16.mxu0 0
        %1233 = vmatmul.mubr.bf16.gmra.mrb[0].mxu0 %v1142
        %v1234 = vpop.f32.mrb[0].mxu0
        %v1235 = vadd.f32 0.0, %v1234
        %v1236 = vpop.f32.mrb[0].mxu0
        %v1237 = vpop.f32.mrb[0].mxu0
        %v1238 = vadd.f32 0.0, %v1237
        %v1239 = vpop.f32.mrb[0].mxu0
        %1240 = vmatprep.mubr.bf16.mxu0 0
        %1241 = vmatmul.mubr.bf16.gmra.mrb[0].mxu0 %v1143
        %v1242 = vpop.f32.mrb[0].mxu0
        %v1243 = vadd.f32 0.0, %v1242
        %v1244 = vpop.f32.mrb[0].mxu0
        %v1245 = vpop.f32.mrb[0].mxu0
        %v1246 = vadd.f32 0.0, %v1245
        %v1247 = vpop.f32.mrb[0].mxu0
        %1248 = vmatprep.mubr.bf16.mxu0 0
        %1249 = vmatmul.mubr.bf16.gmra.mrb[0].mxu0 %v1144
        %v1250 = vpop.f32.mrb[0].mxu0
        %v1251 = vadd.f32 0.0, %v1250
        %v1252 = vpop.f32.mrb[0].mxu0
        %v1253 = vpop.f32.mrb[0].mxu0
        %v1254 = vadd.f32 0.0, %v1253
        %v1255 = vpop.f32.mrb[0].mxu0
        %1256 = vmatprep.mubr.bf16.mxu0 0
        %1257 = vmatmul.mubr.bf16.gmra.mrb[0].mxu0 %v1145
        %v1258 = vpop.f32.mrb[0].mxu0
        %v1259 = vadd.f32 0.0, %v1258
        %v1260 = vpop.f32.mrb[0].mxu0
        %v1261 = vpop.f32.mrb[0].mxu0
        %v1262 = vadd.f32 0.0, %v1261
        %v1263 = vpop.f32.mrb[0].mxu0
        %1264 = vmatprep.mubr.bf16.mxu0 0
        %1265 = vmatmul.mubr.bf16.gmra.mrb[0].mxu0 %v1146
        %v1266 = vpop.f32.mrb[0].mxu0
        %v1267 = vadd.f32 0.0, %v1266
        %v1268 = vpop.f32.mrb[0].mxu0
        %v1269 = vpop.f32.mrb[0].mxu0
        %v1270 = vadd.f32 0.0, %v1269
        %v1271 = vpop.f32.mrb[0].mxu0
        %1272 = vdwg.mxu0
        %v1273 = vadd.f32 %v1095, %v1235
        %v1274 = vadd.f32 %v1096, %v1238
        %v1275 = vadd.f32 %v1097, %v1243
        %v1276 = vadd.f32 %v1098, %v1246
        %v1277 = vadd.f32 %v1099, %v1251
        %v1278 = vadd.f32 %v1100, %v1254
        %v1279 = vadd.f32 %v1101, %v1259
        %v1280 = vadd.f32 %v1102, %v1262
        %v1281 = vadd.f32 %v1103, %v1267
        %v1282 = vadd.f32 %v1104, %v1270
        %1283 = vst [vmem:[#allocation3] sm:$0xff] %v1273
        %1284 = vst [vmem:[#allocation3 + $0x8] sm:$0xff] %v1274
        %1285 = vst [vmem:[#allocation3 + $0x10] sm:$0xff] %v1275
        %1286 = vst [vmem:[#allocation3 + $0x18] sm:$0xff] %v1276
        %1287 = vst [vmem:[#allocation3 + $0x20] sm:$0xff] %v1277
        %1288 = vst [vmem:[#allocation3 + $0x28] sm:$0xff] %v1278
        %1289 = vst [vmem:[#allocation3 + $0x30] sm:$0xff] %v1279
        %1290 = vst [vmem:[#allocation3 + $0x38] sm:$0xff] %v1280
        %1291 = vst [vmem:[#allocation3 + $0x40] sm:$0xff] %v1281
        %1292 = vst [vmem:[#allocation3 + $0x48] sm:$0xff] %v1282
        %v1293 = vld [vmem:[#allocation2] sm:$0xf]
        %v1294 = vld [vmem:[#allocation2 + $0x4] sm:$0xf]
        %v1295 = vld [vmem:[#allocation2 + $0x8] sm:$0xf]
        %v1296 = vld [vmem:[#allocation2 + $0xc] sm:$0xf]
        %v1297 = vld [vmem:[#allocation2 + $0x10] sm:$0xf]
        %v1298 = vld [vmem:[#allocation2 + $0x14] sm:$0xf]
        %v1299 = vld [vmem:[#allocation2 + $0x18] sm:$0xf]
        %v1300 = vld [vmem:[#allocation2 + $0x1c] sm:$0xf]
        %v1301 = vld [vmem:[#allocation2 + $0x20] sm:$0xf]
        %v1302 = vld [vmem:[#allocation2 + $0x24] sm:$0xf]
        %v1303 = vld [vmem:[#allocation2 + $0x28] sm:$0x1]
        %v1304 = vld [vmem:[#allocation3] sm:$0xff]
        %v1305 = vld [vmem:[#allocation3 + $0x8] sm:$0xff]
        %v1306 = vld [vmem:[#allocation3 + $0x10] sm:$0xff]
        %v1307 = vld [vmem:[#allocation3 + $0x18] sm:$0xff]
        %v1308 = vld [vmem:[#allocation3 + $0x20] sm:$0xff]
        %v1309 = vld [vmem:[#allocation3 + $0x28] sm:$0xff]
        %v1310 = vld [vmem:[#allocation3 + $0x30] sm:$0xff]
        %v1311 = vld [vmem:[#allocation3 + $0x38] sm:$0xff]
        %v1312 = vld [vmem:[#allocation3 + $0x40] sm:$0xff]
        %v1313 = vld [vmem:[#allocation3 + $0x48] sm:$0xff]
        %s1314 = scalar_lea.vmem [#allocation4], 192
        %v1315 = vld [vmem:[%s1314] sm:$0xf]
        %v1316 = vld [vmem:[%s1314 + $0x4] sm:$0xf]
        %v1317 = vld [vmem:[%s1314 + $0x8] sm:$0xf]
        %v1318 = vld [vmem:[%s1314 + $0xc] sm:$0xf]
        %v1319 = vld [vmem:[%s1314 + $0x10] sm:$0xf]
        %v1320 = vld [vmem:[%s1314 + $0x14] sm:$0xf]
        %v1321 = vld [vmem:[%s1314 + $0x18] sm:$0xf]
        %v1322 = vld [vmem:[%s1314 + $0x1c] sm:$0xf]
        %v1323 = vld [vmem:[%s1314 + $0x20] sm:$0xf]
        %v1324 = vld [vmem:[%s1314 + $0x24] sm:$0xf]
        %v1325 = vld [vmem:[%s1314 + $0x28] sm:$0xf]
        %v1326 = vld [vmem:[%s1314 + $0x2c] sm:$0xf]
        %v1327 = vld [vmem:[%s1314 + $0x30] sm:$0xf]
        %v1328 = vld [vmem:[%s1314 + $0x34] sm:$0xf]
        %v1329 = vld [vmem:[%s1314 + $0x38] sm:$0xf]
        %v1330 = vld [vmem:[%s1314 + $0x3c] sm:$0xf]
        %v1342 = vunpack.c.l.b16 %v1293
        %v1343 = vunpack.c.l.b16 %v1294
        %v1344 = vunpack.c.l.b16 %v1295
        %v1345 = vunpack.c.l.b16 %v1296
        %v1346 = vunpack.c.l.b16 %v1297
        %v1347 = vunpack.c.l.b16 %v1298
        %v1348 = vunpack.c.l.b16 %v1299
        %v1349 = vunpack.c.l.b16 %v1300
        %v1350 = vunpack.c.l.b16 %v1301
        %v1351 = vunpack.c.l.b16 %v1302
        %v1352 = vunpack.c.l.b16 %v1303
        %v1353 = vpack.c.b16 %v1343, %v1342
        %v1354 = vpack.c.b16 %v1345, %v1344
        %v1355 = vpack.c.b16 %v1347, %v1346
        %v1356 = vpack.c.b16 %v1349, %v1348
        %v1357 = vpack.c.b16 %v1351, %v1350
        %v1358 = vpack.c.b16 %v1352, %v1352
        %vm1359 = vsmask.f32 7424
        %v1361 = vshrl.u32 %v1353, 16
        %v1363 = vshll.u32 %v1353, 16
        %v1365 = vrot.slane %v1363, 1
        %v1366 = vor.u32 %v1361, %v1365
        %v1368 = vshll.u32 %v1354, 16
        %v1370 = vrot.slane %v1368, 1
        %v1371 = vsel %vm1359, %v1366, %v1370
        %v1372 = vshrl.u32 %v1354, 16
        %v1374 = vor.u32 %v1372, %v1370
        %v1376 = vshll.u32 %v1355, 16
        %v1378 = vrot.slane %v1376, 1
        %v1379 = vsel %vm1359, %v1374, %v1378
        %v1380 = vshrl.u32 %v1355, 16
        %v1382 = vor.u32 %v1380, %v1378
        %v1384 = vshll.u32 %v1356, 16
        %v1386 = vrot.slane %v1384, 1
        %v1387 = vsel %vm1359, %v1382, %v1386
        %v1388 = vshrl.u32 %v1356, 16
        %v1390 = vor.u32 %v1388, %v1386
        %v1392 = vshll.u32 %v1357, 16
        %v1394 = vrot.slane %v1392, 1
        %v1395 = vsel %vm1359, %v1390, %v1394
        %v1396 = vshrl.u32 %v1357, 16
        %v1398 = vor.u32 %v1396, %v1394
        %v1400 = vshll.u32 %v1358, 16
        %v1402 = vrot.slane %v1400, 1
        %v1403 = vsel %vm1359, %v1398, %v1402
        %v1425 = vunpack.c.l.b16 %v1315
        %v1426 = vunpack.c.l.b16 %v1316
        %v1427 = vunpack.c.l.b16 %v1317
        %v1428 = vunpack.c.l.b16 %v1318
        %v1429 = vunpack.c.l.b16 %v1319
        %v1430 = vunpack.c.l.b16 %v1320
        %v1431 = vunpack.c.l.b16 %v1321
        %v1432 = vunpack.c.l.b16 %v1322
        %v1433 = vunpack.c.l.b16 %v1323
        %v1434 = vunpack.c.l.b16 %v1324
        %v1435 = vunpack.c.l.b16 %v1325
        %v1436 = vunpack.c.l.b16 %v1326
        %v1437 = vunpack.c.l.b16 %v1327
        %v1438 = vunpack.c.l.b16 %v1328
        %v1439 = vunpack.c.l.b16 %v1329
        %v1440 = vunpack.c.l.b16 %v1330
        %v1441 = vpack.c.b16 %v1426, %v1425
        %v1442 = vpack.c.b16 %v1428, %v1427
        %v1443 = vpack.c.b16 %v1430, %v1429
        %v1444 = vpack.c.b16 %v1432, %v1431
        %v1445 = vpack.c.b16 %v1434, %v1433
        %v1446 = vpack.c.b16 %v1436, %v1435
        %v1447 = vpack.c.b16 %v1438, %v1437
        %v1448 = vpack.c.b16 %v1440, %v1439
        %1457 = vmatprep.subr.bf16.mxu0 0
        %1458 = vmatpush1.bf16.msra.mxu0 %v1441
        %1459 = vmatprep.subr.bf16.mxu0 0
        %1460 = vmatpush1.bf16.msra.mxu0 %v1442
        %1461 = vmatprep.subr.bf16.mxu0 0
        %1462 = vmatpush1.bf16.msra.mxu0 %v1443
        %1463 = vmatprep.subr.bf16.mxu0 0
        %1464 = vmatpush1.bf16.msra.mxu0 %v1444
        %1465 = vmatprep.subr.bf16.mxu0 0
        %1466 = vmatpush1.bf16.msra.mxu0 %v1445
        %1467 = vmatprep.subr.bf16.mxu0 0
        %1468 = vmatpush1.bf16.msra.mxu0 %v1446
        %1469 = vmatprep.subr.bf16.mxu0 0
        %1470 = vmatpush1.bf16.msra.mxu0 %v1447
        %1471 = vmatprep.subr.bf16.mxu0 0
        %1472 = vmatpush1.bf16.msra.mxu0 %v1448
        %1473 = vmatprep.subr.bf16.mxu0 0
        %1474 = vmatpush1.bf16.msra.mxu0 0
        %1475 = vmatprep.subr.bf16.mxu0 0
        %1476 = vmatpush1.bf16.msra.mxu0 0
        %1477 = vmatprep.subr.bf16.mxu0 0
        %1478 = vmatpush1.bf16.msra.mxu0 0
        %1479 = vmatprep.subr.bf16.mxu0 0
        %1480 = vmatpush1.bf16.msra.mxu0 0
        %1481 = vmatprep.subr.bf16.mxu0 0
        %1482 = vmatpush1.bf16.msra.mxu0 0
        %1483 = vmatprep.subr.bf16.mxu0 0
        %1484 = vmatpush1.bf16.msra.mxu0 0
        %1485 = vmatprep.subr.bf16.mxu0 0
        %1486 = vmatpush1.bf16.msra.mxu0 0
        %1487 = vmatprep.subr.bf16.mxu0 0
        %1488 = vmatpush1.bf16.msra.mxu0 0
        %1489 = vmatprep.mubr.bf16.mxu0 0
        %1490 = vmatmul.mubr.bf16.gmra.mrb[0].mxu0 %v1371
        %v1491 = vpop.f32.mrb[0].mxu0
        %v1492 = vadd.f32 0.0, %v1491
        %v1493 = vpop.f32.mrb[0].mxu0
        %v1494 = vpop.f32.mrb[0].mxu0
        %v1495 = vadd.f32 0.0, %v1494
        %v1496 = vpop.f32.mrb[0].mxu0
        %1497 = vmatprep.mubr.bf16.mxu0 0
        %1498 = vmatmul.mubr.bf16.gmra.mrb[0].mxu0 %v1379
        %v1499 = vpop.f32.mrb[0].mxu0
        %v1500 = vadd.f32 0.0, %v1499
        %v1501 = vpop.f32.mrb[0].mxu0
        %v1502 = vpop.f32.mrb[0].mxu0
        %v1503 = vadd.f32 0.0, %v1502
        %v1504 = vpop.f32.mrb[0].mxu0
        %1505 = vmatprep.mubr.bf16.mxu0 0
        %1506 = vmatmul.mubr.bf16.gmra.mrb[0].mxu0 %v1387
        %v1507 = vpop.f32.mrb[0].mxu0
        %v1508 = vadd.f32 0.0, %v1507
        %v1509 = vpop.f32.mrb[0].mxu0
        %v1510 = vpop.f32.mrb[0].mxu0
        %v1511 = vadd.f32 0.0, %v1510
        %v1512 = vpop.f32.mrb[0].mxu0
        %1513 = vmatprep.mubr.bf16.mxu0 0
        %1514 = vmatmul.mubr.bf16.gmra.mrb[0].mxu0 %v1395
        %v1515 = vpop.f32.mrb[0].mxu0
        %v1516 = vadd.f32 0.0, %v1515
        %v1517 = vpop.f32.mrb[0].mxu0
        %v1518 = vpop.f32.mrb[0].mxu0
        %v1519 = vadd.f32 0.0, %v1518
        %v1520 = vpop.f32.mrb[0].mxu0
        %1521 = vmatprep.mubr.bf16.mxu0 0
        %1522 = vmatmul.mubr.bf16.gmra.mrb[0].mxu0 %v1403
        %v1523 = vpop.f32.mrb[0].mxu0
        %v1524 = vadd.f32 0.0, %v1523
        %v1525 = vpop.f32.mrb[0].mxu0
        %v1526 = vpop.f32.mrb[0].mxu0
        %v1527 = vadd.f32 0.0, %v1526
        %v1528 = vpop.f32.mrb[0].mxu0
        %1529 = vdwg.mxu0
        %v1530 = vadd.f32 %v1304, %v1492
        %v1531 = vadd.f32 %v1305, %v1495
        %v1532 = vadd.f32 %v1306, %v1500
        %v1533 = vadd.f32 %v1307, %v1503
        %v1534 = vadd.f32 %v1308, %v1508
        %v1535 = vadd.f32 %v1309, %v1511
        %v1536 = vadd.f32 %v1310, %v1516
        %v1537 = vadd.f32 %v1311, %v1519
        %v1538 = vadd.f32 %v1312, %v1524
        %v1539 = vadd.f32 %v1313, %v1527
        %1540 = vst [vmem:[#allocation3] sm:$0xff] %v1530
        %1541 = vst [vmem:[#allocation3 + $0x8] sm:$0xff] %v1531
        %1542 = vst [vmem:[#allocation3 + $0x10] sm:$0xff] %v1532
        %1543 = vst [vmem:[#allocation3 + $0x18] sm:$0xff] %v1533
        %1544 = vst [vmem:[#allocation3 + $0x20] sm:$0xff] %v1534
        %1545 = vst [vmem:[#allocation3 + $0x28] sm:$0xff] %v1535
        %1546 = vst [vmem:[#allocation3 + $0x30] sm:$0xff] %v1536
        %1547 = vst [vmem:[#allocation3 + $0x38] sm:$0xff] %v1537
        %1548 = vst [vmem:[#allocation3 + $0x40] sm:$0xff] %v1538
        %1549 = vst [vmem:[#allocation3 + $0x48] sm:$0xff] %v1539
        %v1550 = vld [vmem:[#allocation2 + $0x8] sm:$0xf]
        %v1551 = vld [vmem:[#allocation2 + $0xc] sm:$0xf]
        %v1552 = vld [vmem:[#allocation2 + $0x10] sm:$0xf]
        %v1553 = vld [vmem:[#allocation2 + $0x14] sm:$0xf]
        %v1554 = vld [vmem:[#allocation2 + $0x18] sm:$0xf]
        %v1555 = vld [vmem:[#allocation2 + $0x1c] sm:$0xf]
        %v1556 = vld [vmem:[#allocation2 + $0x20] sm:$0xf]
        %v1557 = vld [vmem:[#allocation2 + $0x24] sm:$0xf]
        %v1558 = vld [vmem:[#allocation2 + $0x28] sm:$0xf]
        %v1559 = vld [vmem:[#allocation2 + $0x2c] sm:$0xf]
        %v1560 = vld [vmem:[#allocation2 + $0x30] sm:$0x1]
        %v1561 = vld [vmem:[#allocation3] sm:$0xff]
        %v1562 = vld [vmem:[#allocation3 + $0x8] sm:$0xff]
        %v1563 = vld [vmem:[#allocation3 + $0x10] sm:$0xff]
        %v1564 = vld [vmem:[#allocation3 + $0x18] sm:$0xff]
        %v1565 = vld [vmem:[#allocation3 + $0x20] sm:$0xff]
        %v1566 = vld [vmem:[#allocation3 + $0x28] sm:$0xff]
        %v1567 = vld [vmem:[#allocation3 + $0x30] sm:$0xff]
        %v1568 = vld [vmem:[#allocation3 + $0x38] sm:$0xff]
        %v1569 = vld [vmem:[#allocation3 + $0x40] sm:$0xff]
        %v1570 = vld [vmem:[#allocation3 + $0x48] sm:$0xff]
        %s1571 = scalar_lea.vmem [#allocation4], 256
        %v1572 = vld [vmem:[%s1571] sm:$0xf]
        %v1573 = vld [vmem:[%s1571 + $0x4] sm:$0xf]
        %v1574 = vld [vmem:[%s1571 + $0x8] sm:$0xf]
        %v1575 = vld [vmem:[%s1571 + $0xc] sm:$0xf]
        %v1576 = vld [vmem:[%s1571 + $0x10] sm:$0xf]
        %v1577 = vld [vmem:[%s1571 + $0x14] sm:$0xf]
        %v1578 = vld [vmem:[%s1571 + $0x18] sm:$0xf]
        %v1579 = vld [vmem:[%s1571 + $0x1c] sm:$0xf]
        %v1580 = vld [vmem:[%s1571 + $0x20] sm:$0xf]
        %v1581 = vld [vmem:[%s1571 + $0x24] sm:$0xf]
        %v1582 = vld [vmem:[%s1571 + $0x28] sm:$0xf]
        %v1583 = vld [vmem:[%s1571 + $0x2c] sm:$0xf]
        %v1584 = vld [vmem:[%s1571 + $0x30] sm:$0xf]
        %v1585 = vld [vmem:[%s1571 + $0x34] sm:$0xf]
        %v1586 = vld [vmem:[%s1571 + $0x38] sm:$0xf]
        %v1587 = vld [vmem:[%s1571 + $0x3c] sm:$0xf]
        %v1599 = vunpack.c.l.b16 %v1550
        %v1600 = vunpack.c.l.b16 %v1551
        %v1601 = vunpack.c.l.b16 %v1552
        %v1602 = vunpack.c.l.b16 %v1553
        %v1603 = vunpack.c.l.b16 %v1554
        %v1604 = vunpack.c.l.b16 %v1555
        %v1605 = vunpack.c.l.b16 %v1556
        %v1606 = vunpack.c.l.b16 %v1557
        %v1607 = vunpack.c.l.b16 %v1558
        %v1608 = vunpack.c.l.b16 %v1559
        %v1609 = vunpack.c.l.b16 %v1560
        %v1610 = vpack.c.b16 %v1600, %v1599
        %v1611 = vpack.c.b16 %v1602, %v1601
        %v1612 = vpack.c.b16 %v1604, %v1603
        %v1613 = vpack.c.b16 %v1606, %v1605
        %v1614 = vpack.c.b16 %v1608, %v1607
        %v1615 = vpack.c.b16 %v1609, %v1609
        %v1617 = vshrl.u32 %v1610, 16
        %v1619 = vshll.u32 %v1610, 16
        %v1621 = vrot.slane %v1619, 1
        %v1622 = vor.u32 %v1617, %v1621
        %v1624 = vshll.u32 %v1611, 16
        %v1626 = vrot.slane %v1624, 1
        %v1627 = vsel %vm1359, %v1622, %v1626
        %v1628 = vshrl.u32 %v1611, 16
        %v1630 = vor.u32 %v1628, %v1626
        %v1632 = vshll.u32 %v1612, 16
        %v1634 = vrot.slane %v1632, 1
        %v1635 = vsel %vm1359, %v1630, %v1634
        %v1636 = vshrl.u32 %v1612, 16
        %v1638 = vor.u32 %v1636, %v1634
        %v1640 = vshll.u32 %v1613, 16
        %v1642 = vrot.slane %v1640, 1
        %v1643 = vsel %vm1359, %v1638, %v1642
        %v1644 = vshrl.u32 %v1613, 16
        %v1646 = vor.u32 %v1644, %v1642
        %v1648 = vshll.u32 %v1614, 16
        %v1650 = vrot.slane %v1648, 1
        %v1651 = vsel %vm1359, %v1646, %v1650
        %v1652 = vshrl.u32 %v1614, 16
        %v1654 = vor.u32 %v1652, %v1650
        %v1656 = vshll.u32 %v1615, 16
        %v1658 = vrot.slane %v1656, 1
        %v1659 = vsel %vm1359, %v1654, %v1658
        %v1681 = vunpack.c.l.b16 %v1572
        %v1682 = vunpack.c.l.b16 %v1573
        %v1683 = vunpack.c.l.b16 %v1574
        %v1684 = vunpack.c.l.b16 %v1575
        %v1685 = vunpack.c.l.b16 %v1576
        %v1686 = vunpack.c.l.b16 %v1577
        %v1687 = vunpack.c.l.b16 %v1578
        %v1688 = vunpack.c.l.b16 %v1579
        %v1689 = vunpack.c.l.b16 %v1580
        %v1690 = vunpack.c.l.b16 %v1581
        %v1691 = vunpack.c.l.b16 %v1582
        %v1692 = vunpack.c.l.b16 %v1583
        %v1693 = vunpack.c.l.b16 %v1584
        %v1694 = vunpack.c.l.b16 %v1585
        %v1695 = vunpack.c.l.b16 %v1586
        %v1696 = vunpack.c.l.b16 %v1587
        %v1697 = vpack.c.b16 %v1682, %v1681
        %v1698 = vpack.c.b16 %v1684, %v1683
        %v1699 = vpack.c.b16 %v1686, %v1685
        %v1700 = vpack.c.b16 %v1688, %v1687
        %v1701 = vpack.c.b16 %v1690, %v1689
        %v1702 = vpack.c.b16 %v1692, %v1691
        %v1703 = vpack.c.b16 %v1694, %v1693
        %v1704 = vpack.c.b16 %v1696, %v1695
        %1713 = vmatprep.subr.bf16.mxu0 0
        %1714 = vmatpush1.bf16.msra.mxu0 %v1697
        %1715 = vmatprep.subr.bf16.mxu0 0
        %1716 = vmatpush1.bf16.msra.mxu0 %v1698
        %1717 = vmatprep.subr.bf16.mxu0 0
        %1718 = vmatpush1.bf16.msra.mxu0 %v1699
        %1719 = vmatprep.subr.bf16.mxu0 0
        %1720 = vmatpush1.bf16.msra.mxu0 %v1700
        %1721 = vmatprep.subr.bf16.mxu0 0
        %1722 = vmatpush1.bf16.msra.mxu0 %v1701
        %1723 = vmatprep.subr.bf16.mxu0 0
        %1724 = vmatpush1.bf16.msra.mxu0 %v1702
        %1725 = vmatprep.subr.bf16.mxu0 0
        %1726 = vmatpush1.bf16.msra.mxu0 %v1703
        %1727 = vmatprep.subr.bf16.mxu0 0
        %1728 = vmatpush1.bf16.msra.mxu0 %v1704
        %1729 = vmatprep.subr.bf16.mxu0 0
        %1730 = vmatpush1.bf16.msra.mxu0 0
        %1731 = vmatprep.subr.bf16.mxu0 0
        %1732 = vmatpush1.bf16.msra.mxu0 0
        %1733 = vmatprep.subr.bf16.mxu0 0
        %1734 = vmatpush1.bf16.msra.mxu0 0
        %1735 = vmatprep.subr.bf16.mxu0 0
        %1736 = vmatpush1.bf16.msra.mxu0 0
        %1737 = vmatprep.subr.bf16.mxu0 0
        %1738 = vmatpush1.bf16.msra.mxu0 0
        %1739 = vmatprep.subr.bf16.mxu0 0
        %1740 = vmatpush1.bf16.msra.mxu0 0
        %1741 = vmatprep.subr.bf16.mxu0 0
        %1742 = vmatpush1.bf16.msra.mxu0 0
        %1743 = vmatprep.subr.bf16.mxu0 0
        %1744 = vmatpush1.bf16.msra.mxu0 0
        %1745 = vmatprep.mubr.bf16.mxu0 0
        %1746 = vmatmul.mubr.bf16.gmra.mrb[0].mxu0 %v1627
        %v1747 = vpop.f32.mrb[0].mxu0
        %v1748 = vadd.f32 0.0, %v1747
        %v1749 = vpop.f32.mrb[0].mxu0
        %v1750 = vpop.f32.mrb[0].mxu0
        %v1751 = vadd.f32 0.0, %v1750
        %v1752 = vpop.f32.mrb[0].mxu0
        %1753 = vmatprep.mubr.bf16.mxu0 0
        %1754 = vmatmul.mubr.bf16.gmra.mrb[0].mxu0 %v1635
        %v1755 = vpop.f32.mrb[0].mxu0
        %v1756 = vadd.f32 0.0, %v1755
        %v1757 = vpop.f32.mrb[0].mxu0
        %v1758 = vpop.f32.mrb[0].mxu0
        %v1759 = vadd.f32 0.0, %v1758
        %v1760 = vpop.f32.mrb[0].mxu0
        %1761 = vmatprep.mubr.bf16.mxu0 0
        %1762 = vmatmul.mubr.bf16.gmra.mrb[0].mxu0 %v1643
        %v1763 = vpop.f32.mrb[0].mxu0
        %v1764 = vadd.f32 0.0, %v1763
        %v1765 = vpop.f32.mrb[0].mxu0
        %v1766 = vpop.f32.mrb[0].mxu0
        %v1767 = vadd.f32 0.0, %v1766
        %v1768 = vpop.f32.mrb[0].mxu0
        %1769 = vmatprep.mubr.bf16.mxu0 0
        %1770 = vmatmul.mubr.bf16.gmra.mrb[0].mxu0 %v1651
        %v1771 = vpop.f32.mrb[0].mxu0
        %v1772 = vadd.f32 0.0, %v1771
        %v1773 = vpop.f32.mrb[0].mxu0
        %v1774 = vpop.f32.mrb[0].mxu0
        %v1775 = vadd.f32 0.0, %v1774
        %v1776 = vpop.f32.mrb[0].mxu0
        %1777 = vmatprep.mubr.bf16.mxu0 0
        %1778 = vmatmul.mubr.bf16.gmra.mrb[0].mxu0 %v1659
        %v1779 = vpop.f32.mrb[0].mxu0
        %v1780 = vadd.f32 0.0, %v1779
        %v1781 = vpop.f32.mrb[0].mxu0
        %v1782 = vpop.f32.mrb[0].mxu0
        %v1783 = vadd.f32 0.0, %v1782
        %v1784 = vpop.f32.mrb[0].mxu0
        %1785 = vdwg.mxu0
        %v1786 = vadd.f32 %v1561, %v1748
        %v1787 = vadd.f32 %v1562, %v1751
        %v1788 = vadd.f32 %v1563, %v1756
        %v1789 = vadd.f32 %v1564, %v1759
        %v1790 = vadd.f32 %v1565, %v1764
        %v1791 = vadd.f32 %v1566, %v1767
        %v1792 = vadd.f32 %v1567, %v1772
        %v1793 = vadd.f32 %v1568, %v1775
        %v1794 = vadd.f32 %v1569, %v1780
        %v1795 = vadd.f32 %v1570, %v1783
        %1796 = vst [vmem:[#allocation3] sm:$0xff] %v1786
        %1797 = vst [vmem:[#allocation3 + $0x8] sm:$0xff] %v1787
        %1798 = vst [vmem:[#allocation3 + $0x10] sm:$0xff] %v1788
        %1799 = vst [vmem:[#allocation3 + $0x18] sm:$0xff] %v1789
        %1800 = vst [vmem:[#allocation3 + $0x20] sm:$0xff] %v1790
        %1801 = vst [vmem:[#allocation3 + $0x28] sm:$0xff] %v1791
        %1802 = vst [vmem:[#allocation3 + $0x30] sm:$0xff] %v1792
        %1803 = vst [vmem:[#allocation3 + $0x38] sm:$0xff] %v1793
        %1804 = vst [vmem:[#allocation3 + $0x40] sm:$0xff] %v1794
        %1805 = vst [vmem:[#allocation3 + $0x48] sm:$0xff] %v1795
        %v1806 = vld [vmem:[#allocation2 + $0x10] sm:$0xf]
        %v1807 = vld [vmem:[#allocation2 + $0x14] sm:$0xf]
        %v1808 = vld [vmem:[#allocation2 + $0x18] sm:$0xf]
        %v1809 = vld [vmem:[#allocation2 + $0x1c] sm:$0xf]
        %v1810 = vld [vmem:[#allocation2 + $0x20] sm:$0xf]
        %v1811 = vld [vmem:[#allocation2 + $0x24] sm:$0xf]
        %v1812 = vld [vmem:[#allocation2 + $0x28] sm:$0xf]
        %v1813 = vld [vmem:[#allocation2 + $0x2c] sm:$0xf]
        %v1814 = vld [vmem:[#allocation2 + $0x30] sm:$0xf]
        %v1815 = vld [vmem:[#allocation2 + $0x34] sm:$0xf]
        %v1816 = vld [vmem:[#allocation2 + $0x38] sm:$0x1]
        %v1817 = vld [vmem:[#allocation3] sm:$0xff]
        %v1818 = vld [vmem:[#allocation3 + $0x8] sm:$0xff]
        %v1819 = vld [vmem:[#allocation3 + $0x10] sm:$0xff]
        %v1820 = vld [vmem:[#allocation3 + $0x18] sm:$0xff]
        %v1821 = vld [vmem:[#allocation3 + $0x20] sm:$0xff]
        %v1822 = vld [vmem:[#allocation3 + $0x28] sm:$0xff]
        %v1823 = vld [vmem:[#allocation3 + $0x30] sm:$0xff]
        %v1824 = vld [vmem:[#allocation3 + $0x38] sm:$0xff]
        %v1825 = vld [vmem:[#allocation3 + $0x40] sm:$0xff]
        %v1826 = vld [vmem:[#allocation3 + $0x48] sm:$0xff]
        %s1827 = scalar_lea.vmem [#allocation4], 320
        %v1828 = vld [vmem:[%s1827] sm:$0xf]
        %v1829 = vld [vmem:[%s1827 + $0x4] sm:$0xf]
        %v1830 = vld [vmem:[%s1827 + $0x8] sm:$0xf]
        %v1831 = vld [vmem:[%s1827 + $0xc] sm:$0xf]
        %v1832 = vld [vmem:[%s1827 + $0x10] sm:$0xf]
        %v1833 = vld [vmem:[%s1827 + $0x14] sm:$0xf]
        %v1834 = vld [vmem:[%s1827 + $0x18] sm:$0xf]
        %v1835 = vld [vmem:[%s1827 + $0x1c] sm:$0xf]
        %v1836 = vld [vmem:[%s1827 + $0x20] sm:$0xf]
        %v1837 = vld [vmem:[%s1827 + $0x24] sm:$0xf]
        %v1838 = vld [vmem:[%s1827 + $0x28] sm:$0xf]
        %v1839 = vld [vmem:[%s1827 + $0x2c] sm:$0xf]
        %v1840 = vld [vmem:[%s1827 + $0x30] sm:$0xf]
        %v1841 = vld [vmem:[%s1827 + $0x34] sm:$0xf]
        %v1842 = vld [vmem:[%s1827 + $0x38] sm:$0xf]
        %v1843 = vld [vmem:[%s1827 + $0x3c] sm:$0xf]
        %v1855 = vunpack.c.l.b16 %v1806
        %v1856 = vunpack.c.l.b16 %v1807
        %v1857 = vunpack.c.l.b16 %v1808
        %v1858 = vunpack.c.l.b16 %v1809
        %v1859 = vunpack.c.l.b16 %v1810
        %v1860 = vunpack.c.l.b16 %v1811
        %v1861 = vunpack.c.l.b16 %v1812
        %v1862 = vunpack.c.l.b16 %v1813
        %v1863 = vunpack.c.l.b16 %v1814
        %v1864 = vunpack.c.l.b16 %v1815
        %v1865 = vunpack.c.l.b16 %v1816
        %v1866 = vpack.c.b16 %v1856, %v1855
        %v1867 = vpack.c.b16 %v1858, %v1857
        %v1868 = vpack.c.b16 %v1860, %v1859
        %v1869 = vpack.c.b16 %v1862, %v1861
        %v1870 = vpack.c.b16 %v1864, %v1863
        %v1871 = vpack.c.b16 %v1865, %v1865
        %v1873 = vshrl.u32 %v1866, 16
        %v1875 = vshll.u32 %v1866, 16
        %v1877 = vrot.slane %v1875, 1
        %v1878 = vor.u32 %v1873, %v1877
        %v1880 = vshll.u32 %v1867, 16
        %v1882 = vrot.slane %v1880, 1
        %v1883 = vsel %vm1359, %v1878, %v1882
        %v1884 = vshrl.u32 %v1867, 16
        %v1886 = vor.u32 %v1884, %v1882
        %v1888 = vshll.u32 %v1868, 16
        %v1890 = vrot.slane %v1888, 1
        %v1891 = vsel %vm1359, %v1886, %v1890
        %v1892 = vshrl.u32 %v1868, 16
        %v1894 = vor.u32 %v1892, %v1890
        %v1896 = vshll.u32 %v1869, 16
        %v1898 = vrot.slane %v1896, 1
        %v1899 = vsel %vm1359, %v1894, %v1898
        %v1900 = vshrl.u32 %v1869, 16
        %v1902 = vor.u32 %v1900, %v1898
        %v1904 = vshll.u32 %v1870, 16
        %v1906 = vrot.slane %v1904, 1
        %v1907 = vsel %vm1359, %v1902, %v1906
        %v1908 = vshrl.u32 %v1870, 16
        %v1910 = vor.u32 %v1908, %v1906
        %v1912 = vshll.u32 %v1871, 16
        %v1914 = vrot.slane %v1912, 1
        %v1915 = vsel %vm1359, %v1910, %v1914
        %v1937 = vunpack.c.l.b16 %v1828
        %v1938 = vunpack.c.l.b16 %v1829
        %v1939 = vunpack.c.l.b16 %v1830
        %v1940 = vunpack.c.l.b16 %v1831
        %v1941 = vunpack.c.l.b16 %v1832
        %v1942 = vunpack.c.l.b16 %v1833
        %v1943 = vunpack.c.l.b16 %v1834
        %v1944 = vunpack.c.l.b16 %v1835
        %v1945 = vunpack.c.l.b16 %v1836
        %v1946 = vunpack.c.l.b16 %v1837
        %v1947 = vunpack.c.l.b16 %v1838
        %v1948 = vunpack.c.l.b16 %v1839
        %v1949 = vunpack.c.l.b16 %v1840
        %v1950 = vunpack.c.l.b16 %v1841
        %v1951 = vunpack.c.l.b16 %v1842
        %v1952 = vunpack.c.l.b16 %v1843
        %v1953 = vpack.c.b16 %v1938, %v1937
        %v1954 = vpack.c.b16 %v1940, %v1939
        %v1955 = vpack.c.b16 %v1942, %v1941
        %v1956 = vpack.c.b16 %v1944, %v1943
        %v1957 = vpack.c.b16 %v1946, %v1945
        %v1958 = vpack.c.b16 %v1948, %v1947
        %v1959 = vpack.c.b16 %v1950, %v1949
        %v1960 = vpack.c.b16 %v1952, %v1951
        %1969 = vmatprep.subr.bf16.mxu0 0
        %1970 = vmatpush1.bf16.msra.mxu0 %v1953
        %1971 = vmatprep.subr.bf16.mxu0 0
        %1972 = vmatpush1.bf16.msra.mxu0 %v1954
        %1973 = vmatprep.subr.bf16.mxu0 0
        %1974 = vmatpush1.bf16.msra.mxu0 %v1955
        %1975 = vmatprep.subr.bf16.mxu0 0
        %1976 = vmatpush1.bf16.msra.mxu0 %v1956
        %1977 = vmatprep.subr.bf16.mxu0 0
        %1978 = vmatpush1.bf16.msra.mxu0 %v1957
        %1979 = vmatprep.subr.bf16.mxu0 0
        %1980 = vmatpush1.bf16.msra.mxu0 %v1958
        %1981 = vmatprep.subr.bf16.mxu0 0
        %1982 = vmatpush1.bf16.msra.mxu0 %v1959
        %1983 = vmatprep.subr.bf16.mxu0 0
        %1984 = vmatpush1.bf16.msra.mxu0 %v1960
        %1985 = vmatprep.subr.bf16.mxu0 0
        %1986 = vmatpush1.bf16.msra.mxu0 0
        %1987 = vmatprep.subr.bf16.mxu0 0
        %1988 = vmatpush1.bf16.msra.mxu0 0
        %1989 = vmatprep.subr.bf16.mxu0 0
        %1990 = vmatpush1.bf16.msra.mxu0 0
        %1991 = vmatprep.subr.bf16.mxu0 0
        %1992 = vmatpush1.bf16.msra.mxu0 0
        %1993 = vmatprep.subr.bf16.mxu0 0
        %1994 = vmatpush1.bf16.msra.mxu0 0
        %1995 = vmatprep.subr.bf16.mxu0 0
        %1996 = vmatpush1.bf16.msra.mxu0 0
        %1997 = vmatprep.subr.bf16.mxu0 0
        %1998 = vmatpush1.bf16.msra.mxu0 0
        %1999 = vmatprep.subr.bf16.mxu0 0
        %2000 = vmatpush1.bf16.msra.mxu0 0
        %2001 = vmatprep.mubr.bf16.mxu0 0
        %2002 = vmatmul.mubr.bf16.gmra.mrb[0].mxu0 %v1883
        %v2003 = vpop.f32.mrb[0].mxu0
        %v2004 = vadd.f32 0.0, %v2003
        %v2005 = vpop.f32.mrb[0].mxu0
        %v2006 = vpop.f32.mrb[0].mxu0
        %v2007 = vadd.f32 0.0, %v2006
        %v2008 = vpop.f32.mrb[0].mxu0
        %2009 = vmatprep.mubr.bf16.mxu0 0
        %2010 = vmatmul.mubr.bf16.gmra.mrb[0].mxu0 %v1891
        %v2011 = vpop.f32.mrb[0].mxu0
        %v2012 = vadd.f32 0.0, %v2011
        %v2013 = vpop.f32.mrb[0].mxu0
        %v2014 = vpop.f32.mrb[0].mxu0
        %v2015 = vadd.f32 0.0, %v2014
        %v2016 = vpop.f32.mrb[0].mxu0
        %2017 = vmatprep.mubr.bf16.mxu0 0
        %2018 = vmatmul.mubr.bf16.gmra.mrb[0].mxu0 %v1899
        %v2019 = vpop.f32.mrb[0].mxu0
        %v2020 = vadd.f32 0.0, %v2019
        %v2021 = vpop.f32.mrb[0].mxu0
        %v2022 = vpop.f32.mrb[0].mxu0
        %v2023 = vadd.f32 0.0, %v2022
        %v2024 = vpop.f32.mrb[0].mxu0
        %2025 = vmatprep.mubr.bf16.mxu0 0
        %2026 = vmatmul.mubr.bf16.gmra.mrb[0].mxu0 %v1907
        %v2027 = vpop.f32.mrb[0].mxu0
        %v2028 = vadd.f32 0.0, %v2027
        %v2029 = vpop.f32.mrb[0].mxu0
        %v2030 = vpop.f32.mrb[0].mxu0
        %v2031 = vadd.f32 0.0, %v2030
        %v2032 = vpop.f32.mrb[0].mxu0
        %2033 = vmatprep.mubr.bf16.mxu0 0
        %2034 = vmatmul.mubr.bf16.gmra.mrb[0].mxu0 %v1915
        %v2035 = vpop.f32.mrb[0].mxu0
        %v2036 = vadd.f32 0.0, %v2035
        %v2037 = vpop.f32.mrb[0].mxu0
        %v2038 = vpop.f32.mrb[0].mxu0
        %v2039 = vadd.f32 0.0, %v2038
        %v2040 = vpop.f32.mrb[0].mxu0
        %2041 = vdwg.mxu0
        %v2042 = vadd.f32 %v1817, %v2004
        %v2043 = vadd.f32 %v1818, %v2007
        %v2044 = vadd.f32 %v1819, %v2012
        %v2045 = vadd.f32 %v1820, %v2015
        %v2046 = vadd.f32 %v1821, %v2020
        %v2047 = vadd.f32 %v1822, %v2023
        %v2048 = vadd.f32 %v1823, %v2028
        %v2049 = vadd.f32 %v1824, %v2031
        %v2050 = vadd.f32 %v1825, %v2036
        %v2051 = vadd.f32 %v1826, %v2039
        %2052 = vst [vmem:[#allocation3] sm:$0xff] %v2042
        %2053 = vst [vmem:[#allocation3 + $0x8] sm:$0xff] %v2043
        %2054 = vst [vmem:[#allocation3 + $0x10] sm:$0xff] %v2044
        %2055 = vst [vmem:[#allocation3 + $0x18] sm:$0xff] %v2045
        %2056 = vst [vmem:[#allocation3 + $0x20] sm:$0xff] %v2046
        %2057 = vst [vmem:[#allocation3 + $0x28] sm:$0xff] %v2047
        %2058 = vst [vmem:[#allocation3 + $0x30] sm:$0xff] %v2048
        %2059 = vst [vmem:[#allocation3 + $0x38] sm:$0xff] %v2049
        %2060 = vst [vmem:[#allocation3 + $0x40] sm:$0xff] %v2050
        %2061 = vst [vmem:[#allocation3 + $0x48] sm:$0xff] %v2051
        %v2062 = vld [vmem:[#allocation2] sm:$0xe]
        %v2063 = vld [vmem:[#allocation2 + $0x4] sm:$0xf]
        %v2064 = vld [vmem:[#allocation2 + $0x8] sm:$0xf]
        %v2065 = vld [vmem:[#allocation2 + $0xc] sm:$0xf]
        %v2066 = vld [vmem:[#allocation2 + $0x10] sm:$0xf]
        %v2067 = vld [vmem:[#allocation2 + $0x14] sm:$0xf]
        %v2068 = vld [vmem:[#allocation2 + $0x18] sm:$0xf]
        %v2069 = vld [vmem:[#allocation2 + $0x1c] sm:$0xf]
        %v2070 = vld [vmem:[#allocation2 + $0x20] sm:$0xf]
        %v2071 = vld [vmem:[#allocation2 + $0x24] sm:$0xf]
        %v2072 = vld [vmem:[#allocation2 + $0x28] sm:$0x1]
        %v2073 = vld [vmem:[#allocation3] sm:$0xff]
        %v2074 = vld [vmem:[#allocation3 + $0x8] sm:$0xff]
        %v2075 = vld [vmem:[#allocation3 + $0x10] sm:$0xff]
        %v2076 = vld [vmem:[#allocation3 + $0x18] sm:$0xff]
        %v2077 = vld [vmem:[#allocation3 + $0x20] sm:$0xff]
        %v2078 = vld [vmem:[#allocation3 + $0x28] sm:$0xff]
        %v2079 = vld [vmem:[#allocation3 + $0x30] sm:$0xff]
        %v2080 = vld [vmem:[#allocation3 + $0x38] sm:$0xff]
        %v2081 = vld [vmem:[#allocation3 + $0x40] sm:$0xff]
        %v2082 = vld [vmem:[#allocation3 + $0x48] sm:$0xff]
        %s2083 = scalar_lea.vmem [#allocation4], 384
        %v2084 = vld [vmem:[%s2083] sm:$0xf]
        %v2085 = vld [vmem:[%s2083 + $0x4] sm:$0xf]
        %v2086 = vld [vmem:[%s2083 + $0x8] sm:$0xf]
        %v2087 = vld [vmem:[%s2083 + $0xc] sm:$0xf]
        %v2088 = vld [vmem:[%s2083 + $0x10] sm:$0xf]
        %v2089 = vld [vmem:[%s2083 + $0x14] sm:$0xf]
        %v2090 = vld [vmem:[%s2083 + $0x18] sm:$0xf]
        %v2091 = vld [vmem:[%s2083 + $0x1c] sm:$0xf]
        %v2092 = vld [vmem:[%s2083 + $0x20] sm:$0xf]
        %v2093 = vld [vmem:[%s2083 + $0x24] sm:$0xf]
        %v2094 = vld [vmem:[%s2083 + $0x28] sm:$0xf]
        %v2095 = vld [vmem:[%s2083 + $0x2c] sm:$0xf]
        %v2096 = vld [vmem:[%s2083 + $0x30] sm:$0xf]
        %v2097 = vld [vmem:[%s2083 + $0x34] sm:$0xf]
        %v2098 = vld [vmem:[%s2083 + $0x38] sm:$0xf]
        %v2099 = vld [vmem:[%s2083 + $0x3c] sm:$0xf]
        %v2111 = vunpack.c.l.b16 %v2062
        %v2112 = vunpack.c.l.b16 %v2063
        %v2113 = vunpack.c.l.b16 %v2064
        %v2114 = vunpack.c.l.b16 %v2065
        %v2115 = vunpack.c.l.b16 %v2066
        %v2116 = vunpack.c.l.b16 %v2067
        %v2117 = vunpack.c.l.b16 %v2068
        %v2118 = vunpack.c.l.b16 %v2069
        %v2119 = vunpack.c.l.b16 %v2070
        %v2120 = vunpack.c.l.b16 %v2071
        %v2121 = vunpack.c.l.b16 %v2072
        %v2122 = vpack.c.b16 %v2112, %v2111
        %v2123 = vpack.c.b16 %v2114, %v2113
        %v2124 = vpack.c.b16 %v2116, %v2115
        %v2125 = vpack.c.b16 %v2118, %v2117
        %v2126 = vpack.c.b16 %v2120, %v2119
        %v2127 = vpack.c.b16 %v2121, %v2121
        %vm2128 = vcmask 1046528
        %v2129 = vrot.slane %v2122, 1
        %v2130 = vrot.slane %v2123, 1
        %v2131 = vsel %vm2128, %v2129, %v2130
        %v2132 = vrot.slane %v2124, 1
        %v2133 = vsel %vm2128, %v2130, %v2132
        %v2134 = vrot.slane %v2125, 1
        %v2135 = vsel %vm2128, %v2132, %v2134
        %v2136 = vrot.slane %v2126, 1
        %v2137 = vsel %vm2128, %v2134, %v2136
        %v2138 = vrot.slane %v2127, 1
        %v2139 = vsel %vm2128, %v2136, %v2138
        %v2161 = vunpack.c.l.b16 %v2084
        %v2162 = vunpack.c.l.b16 %v2085
        %v2163 = vunpack.c.l.b16 %v2086
        %v2164 = vunpack.c.l.b16 %v2087
        %v2165 = vunpack.c.l.b16 %v2088
        %v2166 = vunpack.c.l.b16 %v2089
        %v2167 = vunpack.c.l.b16 %v2090
        %v2168 = vunpack.c.l.b16 %v2091
        %v2169 = vunpack.c.l.b16 %v2092
        %v2170 = vunpack.c.l.b16 %v2093
        %v2171 = vunpack.c.l.b16 %v2094
        %v2172 = vunpack.c.l.b16 %v2095
        %v2173 = vunpack.c.l.b16 %v2096
        %v2174 = vunpack.c.l.b16 %v2097
        %v2175 = vunpack.c.l.b16 %v2098
        %v2176 = vunpack.c.l.b16 %v2099
        %v2177 = vpack.c.b16 %v2162, %v2161
        %v2178 = vpack.c.b16 %v2164, %v2163
        %v2179 = vpack.c.b16 %v2166, %v2165
        %v2180 = vpack.c.b16 %v2168, %v2167
        %v2181 = vpack.c.b16 %v2170, %v2169
        %v2182 = vpack.c.b16 %v2172, %v2171
        %v2183 = vpack.c.b16 %v2174, %v2173
        %v2184 = vpack.c.b16 %v2176, %v2175
        %2193 = vmatprep.subr.bf16.mxu0 0
        %2194 = vmatpush1.bf16.msra.mxu0 %v2177
        %2195 = vmatprep.subr.bf16.mxu0 0
        %2196 = vmatpush1.bf16.msra.mxu0 %v2178
        %2197 = vmatprep.subr.bf16.mxu0 0
        %2198 = vmatpush1.bf16.msra.mxu0 %v2179
        %2199 = vmatprep.subr.bf16.mxu0 0
        %2200 = vmatpush1.bf16.msra.mxu0 %v2180
        %2201 = vmatprep.subr.bf16.mxu0 0
        %2202 = vmatpush1.bf16.msra.mxu0 %v2181
        %2203 = vmatprep.subr.bf16.mxu0 0
        %2204 = vmatpush1.bf16.msra.mxu0 %v2182
        %2205 = vmatprep.subr.bf16.mxu0 0
        %2206 = vmatpush1.bf16.msra.mxu0 %v2183
        %2207 = vmatprep.subr.bf16.mxu0 0
        %2208 = vmatpush1.bf16.msra.mxu0 %v2184
        %2209 = vmatprep.subr.bf16.mxu0 0
        %2210 = vmatpush1.bf16.msra.mxu0 0
        %2211 = vmatprep.subr.bf16.mxu0 0
        %2212 = vmatpush1.bf16.msra.mxu0 0
        %2213 = vmatprep.subr.bf16.mxu0 0
        %2214 = vmatpush1.bf16.msra.mxu0 0
        %2215 = vmatprep.subr.bf16.mxu0 0
        %2216 = vmatpush1.bf16.msra.mxu0 0
        %2217 = vmatprep.subr.bf16.mxu0 0
        %2218 = vmatpush1.bf16.msra.mxu0 0
        %2219 = vmatprep.subr.bf16.mxu0 0
        %2220 = vmatpush1.bf16.msra.mxu0 0
        %2221 = vmatprep.subr.bf16.mxu0 0
        %2222 = vmatpush1.bf16.msra.mxu0 0
        %2223 = vmatprep.subr.bf16.mxu0 0
        %2224 = vmatpush1.bf16.msra.mxu0 0
        %2225 = vmatprep.mubr.bf16.mxu0 0
        %2226 = vmatmul.mubr.bf16.gmra.mrb[0].mxu0 %v2131
        %v2227 = vpop.f32.mrb[0].mxu0
        %v2228 = vadd.f32 0.0, %v2227
        %v2229 = vpop.f32.mrb[0].mxu0
        %v2230 = vpop.f32.mrb[0].mxu0
        %v2231 = vadd.f32 0.0, %v2230
        %v2232 = vpop.f32.mrb[0].mxu0
        %2233 = vmatprep.mubr.bf16.mxu0 0
        %2234 = vmatmul.mubr.bf16.gmra.mrb[0].mxu0 %v2133
        %v2235 = vpop.f32.mrb[0].mxu0
        %v2236 = vadd.f32 0.0, %v2235
        %v2237 = vpop.f32.mrb[0].mxu0
        %v2238 = vpop.f32.mrb[0].mxu0
        %v2239 = vadd.f32 0.0, %v2238
        %v2240 = vpop.f32.mrb[0].mxu0
        %2241 = vmatprep.mubr.bf16.mxu0 0
        %2242 = vmatmul.mubr.bf16.gmra.mrb[0].mxu0 %v2135
        %v2243 = vpop.f32.mrb[0].mxu0
        %v2244 = vadd.f32 0.0, %v2243
        %v2245 = vpop.f32.mrb[0].mxu0
        %v2246 = vpop.f32.mrb[0].mxu0
        %v2247 = vadd.f32 0.0, %v2246
        %v2248 = vpop.f32.mrb[0].mxu0
        %2249 = vmatprep.mubr.bf16.mxu0 0
        %2250 = vmatmul.mubr.bf16.gmra.mrb[0].mxu0 %v2137
        %v2251 = vpop.f32.mrb[0].mxu0
        %v2252 = vadd.f32 0.0, %v2251
        %v2253 = vpop.f32.mrb[0].mxu0
        %v2254 = vpop.f32.mrb[0].mxu0
        %v2255 = vadd.f32 0.0, %v2254
        %v2256 = vpop.f32.mrb[0].mxu0
        %2257 = vmatprep.mubr.bf16.mxu0 0
        %2258 = vmatmul.mubr.bf16.gmra.mrb[0].mxu0 %v2139
        %v2259 = vpop.f32.mrb[0].mxu0
        %v2260 = vadd.f32 0.0, %v2259
        %v2261 = vpop.f32.mrb[0].mxu0
        %v2262 = vpop.f32.mrb[0].mxu0
        %v2263 = vadd.f32 0.0, %v2262
        %v2264 = vpop.f32.mrb[0].mxu0
        %2265 = vdwg.mxu0
        %v2266 = vadd.f32 %v2073, %v2228
        %v2267 = vadd.f32 %v2074, %v2231
        %v2268 = vadd.f32 %v2075, %v2236
        %v2269 = vadd.f32 %v2076, %v2239
        %v2270 = vadd.f32 %v2077, %v2244
        %v2271 = vadd.f32 %v2078, %v2247
        %v2272 = vadd.f32 %v2079, %v2252
        %v2273 = vadd.f32 %v2080, %v2255
        %v2274 = vadd.f32 %v2081, %v2260
        %v2275 = vadd.f32 %v2082, %v2263
        %2276 = vst [vmem:[#allocation3] sm:$0xff] %v2266
        %2277 = vst [vmem:[#allocation3 + $0x8] sm:$0xff] %v2267
        %2278 = vst [vmem:[#allocation3 + $0x10] sm:$0xff] %v2268
        %2279 = vst [vmem:[#allocation3 + $0x18] sm:$0xff] %v2269
        %2280 = vst [vmem:[#allocation3 + $0x20] sm:$0xff] %v2270
        %2281 = vst [vmem:[#allocation3 + $0x28] sm:$0xff] %v2271
        %2282 = vst [vmem:[#allocation3 + $0x30] sm:$0xff] %v2272
        %2283 = vst [vmem:[#allocation3 + $0x38] sm:$0xff] %v2273
        %2284 = vst [vmem:[#allocation3 + $0x40] sm:$0xff] %v2274
        %2285 = vst [vmem:[#allocation3 + $0x48] sm:$0xff] %v2275
        %v2286 = vld [vmem:[#allocation2 + $0x8] sm:$0xe]
        %v2287 = vld [vmem:[#allocation2 + $0xc] sm:$0xf]
        %v2288 = vld [vmem:[#allocation2 + $0x10] sm:$0xf]
        %v2289 = vld [vmem:[#allocation2 + $0x14] sm:$0xf]
        %v2290 = vld [vmem:[#allocation2 + $0x18] sm:$0xf]
        %v2291 = vld [vmem:[#allocation2 + $0x1c] sm:$0xf]
        %v2292 = vld [vmem:[#allocation2 + $0x20] sm:$0xf]
        %v2293 = vld [vmem:[#allocation2 + $0x24] sm:$0xf]
        %v2294 = vld [vmem:[#allocation2 + $0x28] sm:$0xf]
        %v2295 = vld [vmem:[#allocation2 + $0x2c] sm:$0xf]
        %v2296 = vld [vmem:[#allocation2 + $0x30] sm:$0x1]
        %v2297 = vld [vmem:[#allocation3] sm:$0xff]
        %v2298 = vld [vmem:[#allocation3 + $0x8] sm:$0xff]
        %v2299 = vld [vmem:[#allocation3 + $0x10] sm:$0xff]
        %v2300 = vld [vmem:[#allocation3 + $0x18] sm:$0xff]
        %v2301 = vld [vmem:[#allocation3 + $0x20] sm:$0xff]
        %v2302 = vld [vmem:[#allocation3 + $0x28] sm:$0xff]
        %v2303 = vld [vmem:[#allocation3 + $0x30] sm:$0xff]
        %v2304 = vld [vmem:[#allocation3 + $0x38] sm:$0xff]
        %v2305 = vld [vmem:[#allocation3 + $0x40] sm:$0xff]
        %v2306 = vld [vmem:[#allocation3 + $0x48] sm:$0xff]
        %s2307 = scalar_lea.vmem [#allocation4], 448
        %v2308 = vld [vmem:[%s2307] sm:$0xf]
        %v2309 = vld [vmem:[%s2307 + $0x4] sm:$0xf]
        %v2310 = vld [vmem:[%s2307 + $0x8] sm:$0xf]
        %v2311 = vld [vmem:[%s2307 + $0xc] sm:$0xf]
        %v2312 = vld [vmem:[%s2307 + $0x10] sm:$0xf]
        %v2313 = vld [vmem:[%s2307 + $0x14] sm:$0xf]
        %v2314 = vld [vmem:[%s2307 + $0x18] sm:$0xf]
        %v2315 = vld [vmem:[%s2307 + $0x1c] sm:$0xf]
        %v2316 = vld [vmem:[%s2307 + $0x20] sm:$0xf]
        %v2317 = vld [vmem:[%s2307 + $0x24] sm:$0xf]
        %v2318 = vld [vmem:[%s2307 + $0x28] sm:$0xf]
        %v2319 = vld [vmem:[%s2307 + $0x2c] sm:$0xf]
        %v2320 = vld [vmem:[%s2307 + $0x30] sm:$0xf]
        %v2321 = vld [vmem:[%s2307 + $0x34] sm:$0xf]
        %v2322 = vld [vmem:[%s2307 + $0x38] sm:$0xf]
        %v2323 = vld [vmem:[%s2307 + $0x3c] sm:$0xf]
        %v2335 = vunpack.c.l.b16 %v2286
        %v2336 = vunpack.c.l.b16 %v2287
        %v2337 = vunpack.c.l.b16 %v2288
        %v2338 = vunpack.c.l.b16 %v2289
        %v2339 = vunpack.c.l.b16 %v2290
        %v2340 = vunpack.c.l.b16 %v2291
        %v2341 = vunpack.c.l.b16 %v2292
        %v2342 = vunpack.c.l.b16 %v2293
        %v2343 = vunpack.c.l.b16 %v2294
        %v2344 = vunpack.c.l.b16 %v2295
        %v2345 = vunpack.c.l.b16 %v2296
        %v2346 = vpack.c.b16 %v2336, %v2335
        %v2347 = vpack.c.b16 %v2338, %v2337
        %v2348 = vpack.c.b16 %v2340, %v2339
        %v2349 = vpack.c.b16 %v2342, %v2341
        %v2350 = vpack.c.b16 %v2344, %v2343
        %v2351 = vpack.c.b16 %v2345, %v2345
        %v2352 = vrot.slane %v2346, 1
        %v2353 = vrot.slane %v2347, 1
        %v2354 = vsel %vm2128, %v2352, %v2353
        %v2355 = vrot.slane %v2348, 1
        %v2356 = vsel %vm2128, %v2353, %v2355
        %v2357 = vrot.slane %v2349, 1
        %v2358 = vsel %vm2128, %v2355, %v2357
        %v2359 = vrot.slane %v2350, 1
        %v2360 = vsel %vm2128, %v2357, %v2359
        %v2361 = vrot.slane %v2351, 1
        %v2362 = vsel %vm2128, %v2359, %v2361
        %v2384 = vunpack.c.l.b16 %v2308
        %v2385 = vunpack.c.l.b16 %v2309
        %v2386 = vunpack.c.l.b16 %v2310
        %v2387 = vunpack.c.l.b16 %v2311
        %v2388 = vunpack.c.l.b16 %v2312
        %v2389 = vunpack.c.l.b16 %v2313
        %v2390 = vunpack.c.l.b16 %v2314
        %v2391 = vunpack.c.l.b16 %v2315
        %v2392 = vunpack.c.l.b16 %v2316
        %v2393 = vunpack.c.l.b16 %v2317
        %v2394 = vunpack.c.l.b16 %v2318
        %v2395 = vunpack.c.l.b16 %v2319
        %v2396 = vunpack.c.l.b16 %v2320
        %v2397 = vunpack.c.l.b16 %v2321
        %v2398 = vunpack.c.l.b16 %v2322
        %v2399 = vunpack.c.l.b16 %v2323
        %v2400 = vpack.c.b16 %v2385, %v2384
        %v2401 = vpack.c.b16 %v2387, %v2386
        %v2402 = vpack.c.b16 %v2389, %v2388
        %v2403 = vpack.c.b16 %v2391, %v2390
        %v2404 = vpack.c.b16 %v2393, %v2392
        %v2405 = vpack.c.b16 %v2395, %v2394
        %v2406 = vpack.c.b16 %v2397, %v2396
        %v2407 = vpack.c.b16 %v2399, %v2398
        %2416 = vmatprep.subr.bf16.mxu0 0
        %2417 = vmatpush1.bf16.msra.mxu0 %v2400
        %2418 = vmatprep.subr.bf16.mxu0 0
        %2419 = vmatpush1.bf16.msra.mxu0 %v2401
        %2420 = vmatprep.subr.bf16.mxu0 0
        %2421 = vmatpush1.bf16.msra.mxu0 %v2402
        %2422 = vmatprep.subr.bf16.mxu0 0
        %2423 = vmatpush1.bf16.msra.mxu0 %v2403
        %2424 = vmatprep.subr.bf16.mxu0 0
        %2425 = vmatpush1.bf16.msra.mxu0 %v2404
        %2426 = vmatprep.subr.bf16.mxu0 0
        %2427 = vmatpush1.bf16.msra.mxu0 %v2405
        %2428 = vmatprep.subr.bf16.mxu0 0
        %2429 = vmatpush1.bf16.msra.mxu0 %v2406
        %2430 = vmatprep.subr.bf16.mxu0 0
        %2431 = vmatpush1.bf16.msra.mxu0 %v2407
        %2432 = vmatprep.subr.bf16.mxu0 0
        %2433 = vmatpush1.bf16.msra.mxu0 0
        %2434 = vmatprep.subr.bf16.mxu0 0
        %2435 = vmatpush1.bf16.msra.mxu0 0
        %2436 = vmatprep.subr.bf16.mxu0 0
        %2437 = vmatpush1.bf16.msra.mxu0 0
        %2438 = vmatprep.subr.bf16.mxu0 0
        %2439 = vmatpush1.bf16.msra.mxu0 0
        %2440 = vmatprep.subr.bf16.mxu0 0
        %2441 = vmatpush1.bf16.msra.mxu0 0
        %2442 = vmatprep.subr.bf16.mxu0 0
        %2443 = vmatpush1.bf16.msra.mxu0 0
        %2444 = vmatprep.subr.bf16.mxu0 0
        %2445 = vmatpush1.bf16.msra.mxu0 0
        %2446 = vmatprep.subr.bf16.mxu0 0
        %2447 = vmatpush1.bf16.msra.mxu0 0
        %2448 = vmatprep.mubr.bf16.mxu0 0
        %2449 = vmatmul.mubr.bf16.gmra.mrb[0].mxu0 %v2354
        %v2450 = vpop.f32.mrb[0].mxu0
        %v2451 = vadd.f32 0.0, %v2450
        %v2452 = vpop.f32.mrb[0].mxu0
        %v2453 = vpop.f32.mrb[0].mxu0
        %v2454 = vadd.f32 0.0, %v2453
        %v2455 = vpop.f32.mrb[0].mxu0
        %2456 = vmatprep.mubr.bf16.mxu0 0
        %2457 = vmatmul.mubr.bf16.gmra.mrb[0].mxu0 %v2356
        %v2458 = vpop.f32.mrb[0].mxu0
        %v2459 = vadd.f32 0.0, %v2458
        %v2460 = vpop.f32.mrb[0].mxu0
        %v2461 = vpop.f32.mrb[0].mxu0
        %v2462 = vadd.f32 0.0, %v2461
        %v2463 = vpop.f32.mrb[0].mxu0
        %2464 = vmatprep.mubr.bf16.mxu0 0
        %2465 = vmatmul.mubr.bf16.gmra.mrb[0].mxu0 %v2358
        %v2466 = vpop.f32.mrb[0].mxu0
        %v2467 = vadd.f32 0.0, %v2466
        %v2468 = vpop.f32.mrb[0].mxu0
        %v2469 = vpop.f32.mrb[0].mxu0
        %v2470 = vadd.f32 0.0, %v2469
        %v2471 = vpop.f32.mrb[0].mxu0
        %2472 = vmatprep.mubr.bf16.mxu0 0
        %2473 = vmatmul.mubr.bf16.gmra.mrb[0].mxu0 %v2360
        %v2474 = vpop.f32.mrb[0].mxu0
        %v2475 = vadd.f32 0.0, %v2474
        %v2476 = vpop.f32.mrb[0].mxu0
        %v2477 = vpop.f32.mrb[0].mxu0
        %v2478 = vadd.f32 0.0, %v2477
        %v2479 = vpop.f32.mrb[0].mxu0
        %2480 = vmatprep.mubr.bf16.mxu0 0
        %2481 = vmatmul.mubr.bf16.gmra.mrb[0].mxu0 %v2362
        %v2482 = vpop.f32.mrb[0].mxu0
        %v2483 = vadd.f32 0.0, %v2482
        %v2484 = vpop.f32.mrb[0].mxu0
        %v2485 = vpop.f32.mrb[0].mxu0
        %v2486 = vadd.f32 0.0, %v2485
        %v2487 = vpop.f32.mrb[0].mxu0
        %2488 = vdwg.mxu0
        %v2489 = vadd.f32 %v2297, %v2451
        %v2490 = vadd.f32 %v2298, %v2454
        %v2491 = vadd.f32 %v2299, %v2459
        %v2492 = vadd.f32 %v2300, %v2462
        %v2493 = vadd.f32 %v2301, %v2467
        %v2494 = vadd.f32 %v2302, %v2470
        %v2495 = vadd.f32 %v2303, %v2475
        %v2496 = vadd.f32 %v2304, %v2478
        %v2497 = vadd.f32 %v2305, %v2483
        %v2498 = vadd.f32 %v2306, %v2486
        %2499 = vst [vmem:[#allocation3] sm:$0xff] %v2489
        %2500 = vst [vmem:[#allocation3 + $0x8] sm:$0xff] %v2490
        %2501 = vst [vmem:[#allocation3 + $0x10] sm:$0xff] %v2491
        %2502 = vst [vmem:[#allocation3 + $0x18] sm:$0xff] %v2492
        %2503 = vst [vmem:[#allocation3 + $0x20] sm:$0xff] %v2493
        %2504 = vst [vmem:[#allocation3 + $0x28] sm:$0xff] %v2494
        %2505 = vst [vmem:[#allocation3 + $0x30] sm:$0xff] %v2495
        %2506 = vst [vmem:[#allocation3 + $0x38] sm:$0xff] %v2496
        %2507 = vst [vmem:[#allocation3 + $0x40] sm:$0xff] %v2497
        %2508 = vst [vmem:[#allocation3 + $0x48] sm:$0xff] %v2498
        %v2509 = vld [vmem:[#allocation2 + $0x10] sm:$0xe]
        %v2510 = vld [vmem:[#allocation2 + $0x14] sm:$0xf]
        %v2511 = vld [vmem:[#allocation2 + $0x18] sm:$0xf]
        %v2512 = vld [vmem:[#allocation2 + $0x1c] sm:$0xf]
        %v2513 = vld [vmem:[#allocation2 + $0x20] sm:$0xf]
        %v2514 = vld [vmem:[#allocation2 + $0x24] sm:$0xf]
        %v2515 = vld [vmem:[#allocation2 + $0x28] sm:$0xf]
        %v2516 = vld [vmem:[#allocation2 + $0x2c] sm:$0xf]
        %v2517 = vld [vmem:[#allocation2 + $0x30] sm:$0xf]
        %v2518 = vld [vmem:[#allocation2 + $0x34] sm:$0xf]
        %v2519 = vld [vmem:[#allocation2 + $0x38] sm:$0x1]
        %v2520 = vld [vmem:[#allocation3] sm:$0xff]
        %v2521 = vld [vmem:[#allocation3 + $0x8] sm:$0xff]
        %v2522 = vld [vmem:[#allocation3 + $0x10] sm:$0xff]
        %v2523 = vld [vmem:[#allocation3 + $0x18] sm:$0xff]
        %v2524 = vld [vmem:[#allocation3 + $0x20] sm:$0xff]
        %v2525 = vld [vmem:[#allocation3 + $0x28] sm:$0xff]
        %v2526 = vld [vmem:[#allocation3 + $0x30] sm:$0xff]
        %v2527 = vld [vmem:[#allocation3 + $0x38] sm:$0xff]
        %v2528 = vld [vmem:[#allocation3 + $0x40] sm:$0xff]
        %v2529 = vld [vmem:[#allocation3 + $0x48] sm:$0xff]
        %s2530 = scalar_lea.vmem [#allocation4], 512
        %v2531 = vld [vmem:[%s2530] sm:$0xf]
        %v2532 = vld [vmem:[%s2530 + $0x4] sm:$0xf]
        %v2533 = vld [vmem:[%s2530 + $0x8] sm:$0xf]
        %v2534 = vld [vmem:[%s2530 + $0xc] sm:$0xf]
        %v2535 = vld [vmem:[%s2530 + $0x10] sm:$0xf]
        %v2536 = vld [vmem:[%s2530 + $0x14] sm:$0xf]
        %v2537 = vld [vmem:[%s2530 + $0x18] sm:$0xf]
        %v2538 = vld [vmem:[%s2530 + $0x1c] sm:$0xf]
        %v2539 = vld [vmem:[%s2530 + $0x20] sm:$0xf]
        %v2540 = vld [vmem:[%s2530 + $0x24] sm:$0xf]
        %v2541 = vld [vmem:[%s2530 + $0x28] sm:$0xf]
        %v2542 = vld [vmem:[%s2530 + $0x2c] sm:$0xf]
        %v2543 = vld [vmem:[%s2530 + $0x30] sm:$0xf]
        %v2544 = vld [vmem:[%s2530 + $0x34] sm:$0xf]
        %v2545 = vld [vmem:[%s2530 + $0x38] sm:$0xf]
        %v2546 = vld [vmem:[%s2530 + $0x3c] sm:$0xf]
        %v2558 = vunpack.c.l.b16 %v2509
        %v2559 = vunpack.c.l.b16 %v2510
        %v2560 = vunpack.c.l.b16 %v2511
        %v2561 = vunpack.c.l.b16 %v2512
        %v2562 = vunpack.c.l.b16 %v2513
        %v2563 = vunpack.c.l.b16 %v2514
        %v2564 = vunpack.c.l.b16 %v2515
        %v2565 = vunpack.c.l.b16 %v2516
        %v2566 = vunpack.c.l.b16 %v2517
        %v2567 = vunpack.c.l.b16 %v2518
        %v2568 = vunpack.c.l.b16 %v2519
        %v2569 = vpack.c.b16 %v2559, %v2558
        %v2570 = vpack.c.b16 %v2561, %v2560
        %v2571 = vpack.c.b16 %v2563, %v2562
        %v2572 = vpack.c.b16 %v2565, %v2564
        %v2573 = vpack.c.b16 %v2567, %v2566
        %v2574 = vpack.c.b16 %v2568, %v2568
        %v2575 = vrot.slane %v2569, 1
        %v2576 = vrot.slane %v2570, 1
        %v2577 = vsel %vm2128, %v2575, %v2576
        %v2578 = vrot.slane %v2571, 1
        %v2579 = vsel %vm2128, %v2576, %v2578
        %v2580 = vrot.slane %v2572, 1
        %v2581 = vsel %vm2128, %v2578, %v2580
        %v2582 = vrot.slane %v2573, 1
        %v2583 = vsel %vm2128, %v2580, %v2582
        %v2584 = vrot.slane %v2574, 1
        %v2585 = vsel %vm2128, %v2582, %v2584
        %v2607 = vunpack.c.l.b16 %v2531
        %v2608 = vunpack.c.l.b16 %v2532
        %v2609 = vunpack.c.l.b16 %v2533
        %v2610 = vunpack.c.l.b16 %v2534
        %v2611 = vunpack.c.l.b16 %v2535
        %v2612 = vunpack.c.l.b16 %v2536
        %v2613 = vunpack.c.l.b16 %v2537
        %v2614 = vunpack.c.l.b16 %v2538
        %v2615 = vunpack.c.l.b16 %v2539
        %v2616 = vunpack.c.l.b16 %v2540
        %v2617 = vunpack.c.l.b16 %v2541
        %v2618 = vunpack.c.l.b16 %v2542
        %v2619 = vunpack.c.l.b16 %v2543
        %v2620 = vunpack.c.l.b16 %v2544
        %v2621 = vunpack.c.l.b16 %v2545
        %v2622 = vunpack.c.l.b16 %v2546
        %v2623 = vpack.c.b16 %v2608, %v2607
        %v2624 = vpack.c.b16 %v2610, %v2609
        %v2625 = vpack.c.b16 %v2612, %v2611
        %v2626 = vpack.c.b16 %v2614, %v2613
        %v2627 = vpack.c.b16 %v2616, %v2615
        %v2628 = vpack.c.b16 %v2618, %v2617
        %v2629 = vpack.c.b16 %v2620, %v2619
        %v2630 = vpack.c.b16 %v2622, %v2621
        %2639 = vmatprep.subr.bf16.mxu0 0
        %2640 = vmatpush1.bf16.msra.mxu0 %v2623
        %2641 = vmatprep.subr.bf16.mxu0 0
        %2642 = vmatpush1.bf16.msra.mxu0 %v2624
        %2643 = vmatprep.subr.bf16.mxu0 0
        %2644 = vmatpush1.bf16.msra.mxu0 %v2625
        %2645 = vmatprep.subr.bf16.mxu0 0
        %2646 = vmatpush1.bf16.msra.mxu0 %v2626
        %2647 = vmatprep.subr.bf16.mxu0 0
        %2648 = vmatpush1.bf16.msra.mxu0 %v2627
        %2649 = vmatprep.subr.bf16.mxu0 0
        %2650 = vmatpush1.bf16.msra.mxu0 %v2628
        %2651 = vmatprep.subr.bf16.mxu0 0
        %2652 = vmatpush1.bf16.msra.mxu0 %v2629
        %2653 = vmatprep.subr.bf16.mxu0 0
        %2654 = vmatpush1.bf16.msra.mxu0 %v2630
        %2655 = vmatprep.subr.bf16.mxu0 0
        %2656 = vmatpush1.bf16.msra.mxu0 0
        %2657 = vmatprep.subr.bf16.mxu0 0
        %2658 = vmatpush1.bf16.msra.mxu0 0
        %2659 = vmatprep.subr.bf16.mxu0 0
        %2660 = vmatpush1.bf16.msra.mxu0 0
        %2661 = vmatprep.subr.bf16.mxu0 0
        %2662 = vmatpush1.bf16.msra.mxu0 0
        %2663 = vmatprep.subr.bf16.mxu0 0
        %2664 = vmatpush1.bf16.msra.mxu0 0
        %2665 = vmatprep.subr.bf16.mxu0 0
        %2666 = vmatpush1.bf16.msra.mxu0 0
        %2667 = vmatprep.subr.bf16.mxu0 0
        %2668 = vmatpush1.bf16.msra.mxu0 0
        %2669 = vmatprep.subr.bf16.mxu0 0
        %2670 = vmatpush1.bf16.msra.mxu0 0
        %2671 = vmatprep.mubr.bf16.mxu0 0
        %2672 = vmatmul.mubr.bf16.gmra.mrb[0].mxu0 %v2577
        %v2673 = vpop.f32.mrb[0].mxu0
        %v2674 = vadd.f32 0.0, %v2673
        %v2675 = vpop.f32.mrb[0].mxu0
        %v2676 = vpop.f32.mrb[0].mxu0
        %v2677 = vadd.f32 0.0, %v2676
        %v2678 = vpop.f32.mrb[0].mxu0
        %2679 = vmatprep.mubr.bf16.mxu0 0
        %2680 = vmatmul.mubr.bf16.gmra.mrb[0].mxu0 %v2579
        %v2681 = vpop.f32.mrb[0].mxu0
        %v2682 = vadd.f32 0.0, %v2681
        %v2683 = vpop.f32.mrb[0].mxu0
        %v2684 = vpop.f32.mrb[0].mxu0
        %v2685 = vadd.f32 0.0, %v2684
        %v2686 = vpop.f32.mrb[0].mxu0
        %2687 = vmatprep.mubr.bf16.mxu0 0
        %2688 = vmatmul.mubr.bf16.gmra.mrb[0].mxu0 %v2581
        %v2689 = vpop.f32.mrb[0].mxu0
        %v2690 = vadd.f32 0.0, %v2689
        %v2691 = vpop.f32.mrb[0].mxu0
        %v2692 = vpop.f32.mrb[0].mxu0
        %v2693 = vadd.f32 0.0, %v2692
        %v2694 = vpop.f32.mrb[0].mxu0
        %2695 = vmatprep.mubr.bf16.mxu0 0
        %2696 = vmatmul.mubr.bf16.gmra.mrb[0].mxu0 %v2583
        %v2697 = vpop.f32.mrb[0].mxu0
        %v2698 = vadd.f32 0.0, %v2697
        %v2699 = vpop.f32.mrb[0].mxu0
        %v2700 = vpop.f32.mrb[0].mxu0
        %v2701 = vadd.f32 0.0, %v2700
        %v2702 = vpop.f32.mrb[0].mxu0
        %2703 = vmatprep.mubr.bf16.mxu0 0
        %2704 = vmatmul.mubr.bf16.gmra.mrb[0].mxu0 %v2585
        %v2705 = vpop.f32.mrb[0].mxu0
        %v2706 = vadd.f32 0.0, %v2705
        %v2707 = vpop.f32.mrb[0].mxu0
        %v2708 = vpop.f32.mrb[0].mxu0
        %v2709 = vadd.f32 0.0, %v2708
        %v2710 = vpop.f32.mrb[0].mxu0
        %2711 = vdwg.mxu0
        %v2712 = vadd.f32 %v2520, %v2674
        %v2713 = vadd.f32 %v2521, %v2677
        %v2714 = vadd.f32 %v2522, %v2682
        %v2715 = vadd.f32 %v2523, %v2685
        %v2716 = vadd.f32 %v2524, %v2690
        %v2717 = vadd.f32 %v2525, %v2693
        %v2718 = vadd.f32 %v2526, %v2698
        %v2719 = vadd.f32 %v2527, %v2701
        %v2720 = vadd.f32 %v2528, %v2706
        %v2721 = vadd.f32 %v2529, %v2709
        %2722 = vst [vmem:[#allocation3] sm:$0xff] %v2712
        %2723 = vst [vmem:[#allocation3 + $0x8] sm:$0xff] %v2713
        %2724 = vst [vmem:[#allocation3 + $0x10] sm:$0xff] %v2714
        %2725 = vst [vmem:[#allocation3 + $0x18] sm:$0xff] %v2715
        %2726 = vst [vmem:[#allocation3 + $0x20] sm:$0xff] %v2716
        %2727 = vst [vmem:[#allocation3 + $0x28] sm:$0xff] %v2717
        %2728 = vst [vmem:[#allocation3 + $0x30] sm:$0xff] %v2718
        %2729 = vst [vmem:[#allocation3 + $0x38] sm:$0xff] %v2719
        %2730 = vst [vmem:[#allocation3 + $0x40] sm:$0xff] %v2720
        %2731 = vst [vmem:[#allocation3 + $0x48] sm:$0xff] %v2721
        %v2732 = vld [vmem:[%s6] sm:$0x1]
        %v2734 = vlaneseq
        %v2735 = vshrl.u32 %v2734, 7
        %v2736 = vsub.s32 0, %v2735
        %v2737 = vrot.slane %v2732, %v2736
        %2739 = vst [vmem:[%s352] sm:$0xff] %v2737
        loop: start=0, step=1, limit=5
        $region61: #{tpu_custom_call.1} parent=51 // loop_pre_header
          _
        $region62: #{tpu_custom_call.1} parent=51 // loop_header
          %s2741 = sphi 0, %s2745
          %p2742 = scmp.ge.s32.totalorder %s2741, 5
        $region63: #{tpu_custom_call.1} parent=51 // loop_header_branch
          %2744 = sbr.rel (%p2742) target = $region67
        $region64: #{tpu_custom_call.1} parent=51 // loop_body
          %s2746 = smul.u32 %s2741, 16
          %s2747 = scalar_lea.vmem [#allocation3], %s2746
          %v2748 = vld [vmem:[%s2747] sm:$0xff]
          %v2749 = vmax.f32 %v2748, 0.0
          %v2750 = vpack.c.bf16 %v2749, %v2749
          %v2751 = vld [vmem:[%s352] sm:$0xff]
          %s2752 = smul.addr %s2746, 4
          %s2753 = scalar_lea.vmem [#allocation7], %s2752
          %v2754 = vld [vmem:[%s2753] sm:$0xf]
          %v2755 = vld [vmem:[%s2753 + $0x4] sm:$0xf]
          %v2756 = vld [vmem:[%s2753 + $0x8] sm:$0xf]
          %v2757 = vld [vmem:[%s2753 + $0xc] sm:$0xf]
          %v2758 = vld [vmem:[%s2753 + $0x10] sm:$0xf]
          %v2759 = vld [vmem:[%s2753 + $0x14] sm:$0xf]
          %v2760 = vld [vmem:[%s2753 + $0x18] sm:$0xf]
          %v2761 = vld [vmem:[%s2753 + $0x1c] sm:$0xf]
          %v2762 = vld [vmem:[%s2753 + $0x20] sm:$0xf]
          %v2763 = vld [vmem:[%s2753 + $0x24] sm:$0xf]
          %v2764 = vld [vmem:[%s2753 + $0x28] sm:$0xf]
          %v2765 = vld [vmem:[%s2753 + $0x2c] sm:$0xf]
          %v2766 = vld [vmem:[%s2753 + $0x30] sm:$0xf]
          %v2767 = vld [vmem:[%s2753 + $0x34] sm:$0xf]
          %v2768 = vld [vmem:[%s2753 + $0x38] sm:$0xf]
          %v2769 = vld [vmem:[%s2753 + $0x3c] sm:$0xf]
          %v2786 = vunpack.c.l.b16 %v2754
          %v2787 = vunpack.c.l.b16 %v2755
          %v2788 = vunpack.c.l.b16 %v2756
          %v2789 = vunpack.c.l.b16 %v2757
          %v2790 = vunpack.c.l.b16 %v2758
          %v2791 = vunpack.c.l.b16 %v2759
          %v2792 = vunpack.c.l.b16 %v2760
          %v2793 = vunpack.c.l.b16 %v2761
          %v2794 = vunpack.c.l.b16 %v2762
          %v2795 = vunpack.c.l.b16 %v2763
          %v2796 = vunpack.c.l.b16 %v2764
          %v2797 = vunpack.c.l.b16 %v2765
          %v2798 = vunpack.c.l.b16 %v2766
          %v2799 = vunpack.c.l.b16 %v2767
          %v2800 = vunpack.c.l.b16 %v2768
          %v2801 = vunpack.c.l.b16 %v2769
          %v2802 = vpack.c.b16 %v2787, %v2786
          %v2803 = vpack.c.b16 %v2789, %v2788
          %v2804 = vpack.c.b16 %v2791, %v2790
          %v2805 = vpack.c.b16 %v2793, %v2792
          %v2806 = vpack.c.b16 %v2795, %v2794
          %v2807 = vpack.c.b16 %v2797, %v2796
          %v2808 = vpack.c.b16 %v2799, %v2798
          %v2809 = vpack.c.b16 %v2801, %v2800
          %2818 = vmatprep.subr.bf16.mxu0 0
          %2819 = vmatpush1.bf16.msra.mxu0 %v2802
          %2820 = vmatprep.subr.bf16.mxu0 0
          %2821 = vmatpush1.bf16.msra.mxu0 %v2803
          %2822 = vmatprep.subr.bf16.mxu0 0
          %2823 = vmatpush1.bf16.msra.mxu0 %v2804
          %2824 = vmatprep.subr.bf16.mxu0 0
          %2825 = vmatpush1.bf16.msra.mxu0 %v2805
          %2826 = vmatprep.subr.bf16.mxu0 0
          %2827 = vmatpush1.bf16.msra.mxu0 %v2806
          %2828 = vmatprep.subr.bf16.mxu0 0
          %2829 = vmatpush1.bf16.msra.mxu0 %v2807
          %2830 = vmatprep.subr.bf16.mxu0 0
          %2831 = vmatpush1.bf16.msra.mxu0 %v2808
          %2832 = vmatprep.subr.bf16.mxu0 0
          %2833 = vmatpush1.bf16.msra.mxu0 %v2809
          %2834 = vmatprep.subr.bf16.mxu0 0
          %2835 = vmatpush1.bf16.msra.mxu0 0
          %2836 = vmatprep.subr.bf16.mxu0 0
          %2837 = vmatpush1.bf16.msra.mxu0 0
          %2838 = vmatprep.subr.bf16.mxu0 0
          %2839 = vmatpush1.bf16.msra.mxu0 0
          %2840 = vmatprep.subr.bf16.mxu0 0
          %2841 = vmatpush1.bf16.msra.mxu0 0
          %2842 = vmatprep.subr.bf16.mxu0 0
          %2843 = vmatpush1.bf16.msra.mxu0 0
          %2844 = vmatprep.subr.bf16.mxu0 0
          %2845 = vmatpush1.bf16.msra.mxu0 0
          %2846 = vmatprep.subr.bf16.mxu0 0
          %2847 = vmatpush1.bf16.msra.mxu0 0
          %2848 = vmatprep.subr.bf16.mxu0 0
          %2849 = vmatpush1.bf16.msra.mxu0 0
          %2850 = vmatprep.mubr.bf16.mxu0 0
          %2851 = vmatmul.mubr.bf16.gmra.mrb[0].mxu0 %v2750
          %v2852 = vpop.f32.mrb[0].mxu0
          %v2853 = vadd.f32 0.0, %v2852
          %v2854 = vpop.f32.mrb[0].mxu0
          %v2855 = vpop.f32.mrb[0].mxu0
          %v2856 = vpop.f32.mrb[0].mxu0
          %2857 = vdwg.mxu0
          %v2858 = vadd.f32 %v2751, %v2853
          %2859 = vst [vmem:[%s352] sm:$0xff] %v2858
        $region65: #{tpu_custom_call.1} parent=51 // loop_footer
          %s2745 = sadd.s32 1, %s2741
        $region66: #{tpu_custom_call.1} parent=51 // loop_footer_branch
          %2740 = sbr.rel target = $region62
        $region67: #{tpu_custom_call.1} parent=51 // loop_exit
          _
        %s2860 = smul.u32 %s29, 8
        %v2861 = vld [vmem:[%s352] sm:$0xff]
        %v2862 = vmul.f32 %v2861, 5.656854
        %s2863 = scalar_lea.vmem %s7, %s2860
        %v2864 = vld [vmem:[%s2863] sm:$0xff]
        %v2865 = vadd.f32 %v2862, %v2864
        %2866 = vst [vmem:[%s352] sm:$0xff] %v2865
        %s2867 = sand.u32 %s221, 1
        %s2868 = scalar_lea.sflag [#allocation6], %s2867
        %s2869 = sand.u32 %s221, 1
        %s2870 = smul.addr %s2869, 8
        %s2871 = scalar_lea.vmem [#allocation9], %s2870
        // Predicated region
        $region68: #{tpu_custom_call.1} parent=51 // pred_check
          %p2872 = pneg %p231
        $region69: #{tpu_custom_call.1} parent=51 // pred_check_branch
          %2874 = sbr.rel (%p2872) target = $region71
        $region70: #{tpu_custom_call.1} parent=51 // pred_region
          %s2876 = ssub.s32 128, 128
          %2877 = vsyncadd %s2868, %s2876
          %s2878 = sadd.s32 %s29, %s28
          %s2879 = smul.addr %s2878, 128
          %s2880 = scalar_lea.hbm %s8, %s2879
          %s2882 = sshll.u32 %s2871, 4
          %s2883 = int_to_ptr.vmem [resolvable:$true] %s2882
          %2885 = dma.vmem_to_hbm [thread:$0]  %s2883, 128, %s2880, %s2868
        $region71: #{tpu_custom_call.1} parent=51 // pred_fallthru
          _
      $region52: #{tpu_custom_call.1} parent=5 // pred_fallthru
        _
      %p2886 = scmp.le.s32.totalorder 2, %s19
      // Predicated region
      $region72: #{tpu_custom_call.1} parent=5 // pred_check
        %p2887 = pneg %p2886
      $region73: #{tpu_custom_call.1} parent=5 // pred_check_branch
        %2889 = sbr.rel (%p2887) target = $region75
      $region74: #{tpu_custom_call.1} parent=5 // pred_region
        %s2890 = ssub.s32 %s19, 2
        // Predicated region
        $region76: #{tpu_custom_call.1} parent=74 // pred_check
          %p2891 = pneg %p237
        $region77: #{tpu_custom_call.1} parent=74 // pred_check_branch
          %2893 = sbr.rel (%p2891) target = $region79
        $region78: #{tpu_custom_call.1} parent=74 // pred_region
          %s2894 = sand.u32 %s222, 1
          %s2895 = scalar_lea.sflag [#allocation6], %s2894
          %s2896 = sand.u32 %s222, 1
          %s2897 = smul.addr %s2896, 8
          %s2898 = scalar_lea.vmem [#allocation9], %s2897
          %2899 = dma.done %s2895, 128
        $region79: #{tpu_custom_call.1} parent=74 // pred_fallthru
          _
      $region75: #{tpu_custom_call.1} parent=5 // pred_fallthru
        _
    $region6: #{tpu_custom_call.1} parent=1 // loop_footer
      %s23 = sadd.s32 1, %s19
    $region7: #{tpu_custom_call.1} parent=1 // loop_footer_branch
      %18 = sbr.rel target = $region3
    $region8: #{tpu_custom_call.1} parent=1 // loop_exit
      _
    %2900 = vsyncpa [#allocation5], 1
    %s2901 = scalar_lea.sflag [#allocation5], 1
    %2902 = vsyncpa %s2901, 1
    %2903 = vsyncpa [#allocation8], 1
    %2904 = vsyncpa [#allocation6], 1
    %s2905 = scalar_lea.sflag [#allocation6], 1
    %2906 = vsyncpa %s2905, 1

</llo_original>
